<compile_context>
chip_gen: v6e
topology: v6e:2x2x1
jax: 0.10.0
libtpu: 0.0.40
codegen_flags: <defaults>
</compile_context>

<pallas_src>
import jax
import jax.numpy as jnp
from jax import lax
from jax.experimental import pallas as pl
from jax.experimental.pallas import tpu as pltpu

_MiB = 1024 * 1024


def _glumbconv_kernel(x_mid_ref, x_top_ref, x_bot_ref,
                      w_inv_ref, b_inv_ref, w_dep_ref, b_dep_ref,
                      w_pnt_ref, nw_ref, nb_ref, o_ref, hid_ref):
    TH, W, Cin = x_mid_ref.shape       # body rows of this tile
    Cout = o_ref.shape[-1]
    C2 = w_inv_ref.shape[1]            # 2 * hidden_channels
    Chid = C2 // 2
    P = (TH + 2) * W                   # flattened rows of the vertically padded tile

    i = pl.program_id(1)
    n_tiles = pl.num_programs(1)

    # Body rows stay f32 only for the residual; the padded matmul input is
    # assembled directly in bf16 (no extra f32 concat copy).
    x_mid = x_mid_ref[...].reshape(TH * W, Cin)
    x_pad = jnp.concatenate(
        [x_top_ref[...].reshape(W, Cin).astype(jnp.bfloat16),
         x_mid.astype(jnp.bfloat16),
         x_bot_ref[...].reshape(W, Cin).astype(jnp.bfloat16)], axis=0)   # (P, Cin)

    # ---- conv_inverted (fused h+gate 1x1 conv) + SiLU: bf16 MXU, f32 acc ----
    hid = jnp.dot(x_pad, w_inv_ref[...], preferred_element_type=jnp.float32)
    hid = hid + b_inv_ref[...]
    hid = hid * jax.nn.sigmoid(hid)                          # (P, C2) f32

    # bf16 home for the depthwise stage.  Only the halo bands that fall
    # outside the image are zeroed (== the 3x3 conv's zero padding), under
    # pl.when -- no full (P, C2) mask multiply.
    hid_ref[...] = hid.astype(jnp.bfloat16)

    @pl.when(i == 0)
    def _():
        hid_ref[0:W, :] = jnp.zeros((W, C2), jnp.bfloat16)

    @pl.when(i == n_tiles - 1)
    def _():
        hid_ref[(TH + 1) * W:(TH + 2) * W, :] = jnp.zeros((W, C2), jnp.bfloat16)

    # Depthwise arithmetic in f32 (v5e has no bf16 VPU; sublane roll on f32 is
    # the proven path).  bf16 is used purely as the storage format of hid.
    hid_f = hid_ref[...].astype(jnp.float32)                 # (P, C2)

    # ---- conv_depth: 3x3 depthwise, stride 1, pad 1 -------------------------
    # Vertical taps: sublane-aligned static slices of the flattened row axis
    # (offsets are multiples of W).  Horizontal taps: pltpu.roll (XLU) plus an
    # edge-column mask -> no misaligned sublane slices / relayout copies.
    col = lax.broadcasted_iota(jnp.int32, (P, 1), 0) % W
    lmask = (col > 0).astype(jnp.float32)        # kill wrapped column x == 0
    rmask = (col < W - 1).astype(jnp.float32)    # kill wrapped column x == W-1
    w_dep = w_dep_ref[...]                       # (9, C2), row index = 3*ky + kx

    acc = jnp.zeros((TH * W, C2), jnp.float32)
    for kx in range(3):
        if kx == 0:
            hv = pltpu.roll(hid_f, 1, 0) * lmask       # h[y, x-1]
        elif kx == 1:
            hv = hid_f                                 # h[y, x]
        else:
            hv = pltpu.roll(hid_f, P - 1, 0) * rmask   # h[y, x+1]
        for ky in range(3):
            k = 3 * ky + kx
            tap = w_dep[k:k + 1, :]                    # (1, C2)
            acc = acc + hv[ky * W:ky * W + TH * W] * tap
    acc = acc + b_dep_ref[...]

    # ---- GLU gate, conv_point (1x1, no bias), RMSNorm, residual -------------
    h_s = acc[:, :Chid]
    g_s = acc[:, Chid:]
    z = h_s * (g_s * jax.nn.sigmoid(g_s))            # (TH*W, Chid) f32

    y = jnp.dot(z.astype(jnp.bfloat16), w_pnt_ref[...],
                preferred_element_type=jnp.float32)  # (TH*W, Cout) f32

    var = jnp.mean(y * y, axis=-1, keepdims=True)
    y = y * lax.rsqrt(var + 1e-5)
    y = y * nw_ref[...] + nb_ref[...]
    y = y + x_mid                                    # residual (out_ch == in_ch)

    o_ref[...] = y.reshape(TH, W, Cout).astype(o_ref.dtype)


def _vmem_capacity_bytes():
    """Physical VMEM per TensorCore (v5e/v6e: 128 MiB, v7x: 64 MiB)."""
    try:
        cap = int(getattr(pltpu.get_tpu_info(), "vmem_capacity_bytes", 0))
        if cap > 0:
            return cap
    except Exception:
        pass
    return 64 * _MiB   # conservative default == smallest generation (v7x)


def _tile_vmem_bytes(th, W, Cin, C2, Chid, Cout):
    """Approximate per-grid-step VMEM footprint (bytes) for row tile `th`."""
    p = (th + 2) * W
    b = 2 * 4 * p * Cin            # pipelined (x2) input row windows, f32
    b += 2 * p * Cin               # bf16 x_pad concat copy
    b += 4 * p * C2                # f32 hid (matmul + bias + SiLU) / widened copy
    b += 2 * p * C2                # bf16 hid scratch (persistent)
    b += 4 * p * C2                # one rolled/masked f32 copy live at a time
    b += 2 * 4 * th * W * C2       # f32 depthwise accumulator + tap temporary
    b += (4 + 2) * th * W * Chid   # GLU product z (f32) + bf16 copy for the MXU
    b += 4 * th * W * Cout         # conv_point / norm result, f32
    b += 2 * 4 * th * W * Cout     # pipelined (x2) output tile, f32
    return b


def _weight_vmem_bytes(Cin, C2, Chid, Cout):
    return (2 * Cin * C2 + 4 * C2 + 4 * 9 * C2 + 4 * C2
            + 2 * Chid * Cout + 4 * Cout + 4 * Cout)


def _choose_row_tile(H, W, Cin, C2, Chid, Cout, budget_bytes):
    """Largest divisor of H whose estimated VMEM footprint fits the budget.

    Larger tiles keep the duplicated halo-row 1x1 recompute at ~2/TH of the
    expansion FLOPs, amortize the ~0.35 us per-grid-step overhead, and keep
    M = (TH+2)*W large enough to feed the 256-wide MXU on v6e/v7x.
    """
    wbytes = 2 * _weight_vmem_bytes(Cin, C2, Chid, Cout)   # safety: assume x2
    best = 1
    for th in range(1, H + 1):
        if H % th:
            continue
        need = int(1.25 * _tile_vmem_bytes(th, W, Cin, C2, Chid, Cout)) + wbytes
        if need <= budget_bytes:
            best = th
    return best


def glumb_conv_nhwc(x, params, *, row_tile=None):
    """GLUMBConv forward on an NHWC activation.  x: (N, H, W, Cin) float32."""
    w_inv, b_inv, w_dep, b_dep, w_pnt, nw, nb = params
    N, H, W, Cin = x.shape
    C2 = w_inv.shape[0]
    Chid = C2 // 2
    Cout = w_pnt.shape[0]
    assert Cout == Cin, "residual add requires out_channels == in_channels"

    # Generation-aware VMEM budget; the SAME number feeds the compiler limit
    # and (minus headroom) the row-tile chooser.
    cap = _vmem_capacity_bytes()
    vmem_limit = max(min(int(cap * 0.75), cap - 16 * _MiB), 32 * _MiB)

    TH = row_tile if row_tile is not None else _choose_row_tile(
        H, W, Cin, C2, Chid, Cout, vmem_limit - 4 * _MiB)
    if H % TH:
        raise ValueError(f"row_tile={TH} must divide H={H}")
    nH = H // TH
    P = (TH + 2) * W

    # Parameter re-layout (channels-last matmul form); MXU weights in bf16.
    w_inv_all = jnp.transpose(w_inv[:, :, 0, 0]).astype(jnp.bfloat16)          # (Cin, C2)
    b_inv_all = b_inv.reshape(1, C2).astype(jnp.float32)
    w_dep_all = jnp.transpose(w_dep[:, 0].reshape(C2, 9)).astype(jnp.float32)  # (9, C2)
    b_dep_all = b_dep.reshape(1, C2).astype(jnp.float32)
    w_pnt_t = jnp.transpose(w_pnt[:, :, 0, 0]).astype(jnp.bfloat16)            # (Chid, Cout)
    nw2 = nw.reshape(1, Cout).astype(jnp.float32)
    nb2 = nb.reshape(1, Cout).astype(jnp.float32)
    consts = (w_inv_all, b_inv_all, w_dep_all, b_dep_all, w_pnt_t, nw2, nb2)

    # Row-blocked input: TH body rows plus two clamped 1-row halo windows
    # (out-of-image halo rows are zeroed in-kernel).
    x_mid_spec = pl.BlockSpec((None, TH, W, Cin), lambda n, i: (n, i, 0, 0))
    x_top_spec = pl.BlockSpec((None, 1, W, Cin),
                              lambda n, i: (n, jnp.maximum(i * TH - 1, 0), 0, 0))
    x_bot_spec = pl.BlockSpec((None, 1, W, Cin),
                              lambda n, i: (n, jnp.minimum(i * TH + TH, H - 1), 0, 0))
    out_spec = pl.BlockSpec((None, TH, W, Cout), lambda n, i: (n, i, 0, 0))

    def run(single_buffer_weights):
        def const_spec(arr):
            if single_buffer_weights:
                # Block index never changes -> one buffer is enough; reclaims
                # the duplicated weight copies for a larger row tile.
                return pl.BlockSpec(arr.shape, lambda n, i: (0, 0),
                                    pipeline_mode=pl.Buffered(1))
            return pl.BlockSpec(arr.shape, lambda n, i: (0, 0))

        return pl.pallas_call(
            _glumbconv_kernel,
            out_shape=jax.ShapeDtypeStruct((N, H, W, Cout), x.dtype),
            grid=(N, nH),
            in_specs=[x_mid_spec, x_top_spec, x_bot_spec]
                     + [const_spec(c) for c in consts],
            out_specs=out_spec,
            scratch_shapes=[pltpu.VMEM((P, C2), jnp.bfloat16)],
            compiler_params=pltpu.CompilerParams(
                dimension_semantics=("parallel", "parallel"),
                vmem_limit_bytes=int(vmem_limit),
            ),
        )(x, x, x, *consts)

    try:
        return run(single_buffer_weights=True)
    except Exception:
        # pipeline_mode=pl.Buffered(1) unsupported on this jax/backend; fall
        # back to default (double-buffered) constant operands.
        return run(single_buffer_weights=False)


def glumb_conv(x_nchw, params, *, row_tile=None):
    """NCHW adapter matching the PyTorch module's layout.

    TODO(synk): NHWC callers should use glumb_conv_nhwc directly and skip the
    two full-tensor HBM transposes below.
    """
    x = jnp.transpose(x_nchw, (0, 2, 3, 1))
    out = glumb_conv_nhwc(x, params, row_tile=row_tile)
    return jnp.transpose(out, (0, 3, 1, 2))


def reference(x, params):
    """Pure-JAX reference of the PyTorch GLUMBConv forward.

    Uses the same numerics as the kernel (bf16 inputs / f32 accumulation on
    the two 1x1 convs; bf16 storage of the post-SiLU activation before the
    f32 depthwise) so the comparison tolerance can stay tight.
    """
    w_inv, b_inv, w_dep, b_dep, w_pnt, nw, nb = params
    C2 = w_inv.shape[0]
    dn = ("NCHW", "OIHW", "NCHW")
    h = lax.conv_general_dilated(
        x.astype(jnp.bfloat16), w_inv.astype(jnp.bfloat16), (1, 1), "VALID",
        dimension_numbers=dn, preferred_element_type=jnp.float32)
    h = h + b_inv[None, :, None, None]
    h = jax.nn.silu(h)
    h = h.astype(jnp.bfloat16).astype(jnp.float32)   # match kernel bf16 storage
    h = lax.conv_general_dilated(
        h, w_dep, (1, 1), ((1, 1), (1, 1)), dimension_numbers=dn,
        feature_group_count=C2, precision=lax.Precision.HIGHEST)
    h = h + b_dep[None, :, None, None]
    hh, gate = jnp.split(h, 2, axis=1)
    h = hh * jax.nn.silu(gate)
    y = lax.conv_general_dilated(
        h.astype(jnp.bfloat16), w_pnt.astype(jnp.bfloat16), (1, 1), "VALID",
        dimension_numbers=dn, preferred_element_type=jnp.float32)
    var = jnp.mean(jnp.square(y), axis=1, keepdims=True)
    y = y * lax.rsqrt(var + 1e-5)
    y = y * nw[None, :, None, None] + nb[None, :, None, None]
    return y + x


if __name__ == "__main__":
    # Small shapes consistent with GLUMBConv(in_channels=4, out_channels=4)
    N, Cin, H, W = 2, 4, 16, 16
    Cout = Cin
    Chid = 4 * Cin          # hidden_channels
    C2 = 2 * Chid           # hidden_channels * 2

    key = jax.random.PRNGKey(0)
    ks = jax.random.split(key, 8)
    w_inv = jax.random.normal(ks[0], (C2, Cin, 1, 1), jnp.float32) * 0.3
    b_inv = jax.random.normal(ks[1], (C2,), jnp.float32) * 0.1
    w_dep = jax.random.normal(ks[2], (C2, 1, 3, 3), jnp.float32) * 0.3
    b_dep = jax.random.normal(ks[3], (C2,), jnp.float32) * 0.1
    w_pnt = jax.random.normal(ks[4], (Cout, Chid, 1, 1), jnp.float32) * 0.3
    nw = jnp.ones((Cout,), jnp.float32) + 0.1 * jax.random.normal(ks[5], (Cout,), jnp.float32)
    nb = 0.1 * jax.random.normal(ks[6], (Cout,), jnp.float32)
    params = (w_inv, b_inv, w_dep, b_dep, w_pnt, nw, nb)

    x = jax.random.normal(ks[7], (N, Cin, H, W), jnp.float32)

    ref = jax.block_until_ready(reference(x, params))

    # Halo-tiled path: grid = (2 batches, 2 row tiles), TH=8 with 1-row halos.
    out_tiled = jax.block_until_ready(glumb_conv(x, params, row_tile=8))
    # Auto-tiled path: exercises the generation-aware VMEM-budget row-tile
    # chooser (picks TH = H here, so a single row tile per batch element).
    out_auto = jax.block_until_ready(glumb_conv(x, params))

    assert out_tiled.shape == (N, Cout, H, W)
    assert out_auto.shape == (N, Cout, H, W)
    for out in (out_tiled, out_auto):
        max_err = float(jnp.max(jnp.abs(out - ref)))
        assert max_err < 2e-2, f"mismatch vs reference, max abs err = {max_err}"

    print("KERNEL_OK")
</pallas_src>

<mosaic_0001>
module attributes {stable_mosaic.version = 11 : i64} {
  func.func @_glumbconv_kernel(%arg0: i32, %arg1: i32, %arg2: memref<1x8x16x4xf32, #tpu.memory_space<vmem>>, %arg3: memref<1x1x16x4xf32, #tpu.memory_space<vmem>>, %arg4: memref<1x1x16x4xf32, #tpu.memory_space<vmem>>, %arg5: memref<4x32xbf16, #tpu.memory_space<vmem>>, %arg6: memref<1x32xf32, #tpu.memory_space<vmem>>, %arg7: memref<9x32xf32, #tpu.memory_space<vmem>>, %arg8: memref<1x32xf32, #tpu.memory_space<vmem>>, %arg9: memref<16x4xbf16, #tpu.memory_space<vmem>>, %arg10: memref<1x4xf32, #tpu.memory_space<vmem>>, %arg11: memref<1x4xf32, #tpu.memory_space<vmem>>, %arg12: memref<1x8x16x4xf32, #tpu.memory_space<vmem>>, %arg13: memref<160x32xbf16, #tpu.memory_space<vmem>>) attributes {dimension_semantics = [#tpu.dimension_semantics<parallel>, #tpu.dimension_semantics<parallel>], iteration_bounds = array<i64: 2, 2>, scalar_prefetch = 0 : i64, scratch_operands = 1 : i64, tpu.core_type = #tpu.core_type<tc>, window_params = [{transform_indices = @transform_0, window_bounds = array<i64: 1, 8, 16, 4>}, {transform_indices = @transform_1, window_bounds = array<i64: 1, 1, 16, 4>}, {transform_indices = @transform_2, window_bounds = array<i64: 1, 1, 16, 4>}, {pipeline_mode = #tpu.pipeline_mode<synchronous>, transform_indices = @transform_3, window_bounds = array<i64: 4, 32>}, {pipeline_mode = #tpu.pipeline_mode<synchronous>, transform_indices = @transform_4, window_bounds = array<i64: 1, 32>}, {pipeline_mode = #tpu.pipeline_mode<synchronous>, transform_indices = @transform_5, window_bounds = array<i64: 9, 32>}, {pipeline_mode = #tpu.pipeline_mode<synchronous>, transform_indices = @transform_6, window_bounds = array<i64: 1, 32>}, {pipeline_mode = #tpu.pipeline_mode<synchronous>, transform_indices = @transform_7, window_bounds = array<i64: 16, 4>}, {pipeline_mode = #tpu.pipeline_mode<synchronous>, transform_indices = @transform_8, window_bounds = array<i64: 1, 4>}, {pipeline_mode = #tpu.pipeline_mode<synchronous>, transform_indices = @transform_9, window_bounds = array<i64: 1, 4>}, {transform_indices = @transform_10, window_bounds = array<i64: 1, 8, 16, 4>}]} {
    %c0 = arith.constant 0 : index
    %c0_0 = arith.constant 0 : index
    %c0_1 = arith.constant 0 : index
    %c0_2 = arith.constant 0 : index
    %0 = vector.load %arg2[%c0, %c0_0, %c0_1, %c0_2] : memref<1x8x16x4xf32, #tpu.memory_space<vmem>>, vector<1x8x16x4xf32>
    %1 = vector.shape_cast %0 : vector<1x8x16x4xf32> to vector<8x16x4xf32>
    %2 = vector.shape_cast %1 : vector<8x16x4xf32> to vector<128x4xf32>
    %c0_3 = arith.constant 0 : index
    %c0_4 = arith.constant 0 : index
    %c0_5 = arith.constant 0 : index
    %c0_6 = arith.constant 0 : index
    %3 = vector.load %arg3[%c0_3, %c0_4, %c0_5, %c0_6] : memref<1x1x16x4xf32, #tpu.memory_space<vmem>>, vector<1x1x16x4xf32>
    %4 = vector.shape_cast %3 : vector<1x1x16x4xf32> to vector<1x16x4xf32>
    %5 = vector.shape_cast %4 : vector<1x16x4xf32> to vector<16x4xf32>
    %6 = arith.truncf %5 : vector<16x4xf32> to vector<16x4xbf16>
    %7 = arith.truncf %2 : vector<128x4xf32> to vector<128x4xbf16>
    %c0_7 = arith.constant 0 : index
    %c0_8 = arith.constant 0 : index
    %c0_9 = arith.constant 0 : index
    %c0_10 = arith.constant 0 : index
    %8 = vector.load %arg4[%c0_7, %c0_8, %c0_9, %c0_10] : memref<1x1x16x4xf32, #tpu.memory_space<vmem>>, vector<1x1x16x4xf32>
    %9 = vector.shape_cast %8 : vector<1x1x16x4xf32> to vector<1x16x4xf32>
    %10 = vector.shape_cast %9 : vector<1x16x4xf32> to vector<16x4xf32>
    %11 = arith.truncf %10 : vector<16x4xf32> to vector<16x4xbf16>
    %12 = tpu.concatenate %6, %7, %11 in 0 : vector<16x4xbf16>, vector<128x4xbf16>, vector<16x4xbf16> -> vector<160x4xbf16>
    %c0_11 = arith.constant 0 : index
    %c0_12 = arith.constant 0 : index
    %13 = vector.load %arg5[%c0_11, %c0_12] : memref<4x32xbf16, #tpu.memory_space<vmem>>, vector<4x32xbf16>
    %cst = arith.constant dense<0.000000e+00> : vector<160x32xf32>
    %14 = tpu.matmul %12, %13, %cst {dimension_numbers = #tpu.dot_dimension_numbers<[1], [0], [0], [1], [0, 0, 1, 1], [], []>} : vector<160x4xbf16>, vector<4x32xbf16>, vector<160x32xf32> -> vector<160x32xf32>
    %c0_13 = arith.constant 0 : index
    %c0_14 = arith.constant 0 : index
    %15 = vector.load %arg6[%c0_13, %c0_14] : memref<1x32xf32, #tpu.memory_space<vmem>>, vector<1x32xf32>
    %16 = vector.broadcast %15 : vector<1x32xf32> to vector<160x32xf32>
    %17 = arith.addf %14, %16 : vector<160x32xf32>
    %18 = arith.negf %17 : vector<160x32xf32>
    %19 = math.exp %18 : vector<160x32xf32>
    %cst_15 = arith.constant 1.000000e+00 : f32
    %20 = vector.broadcast %cst_15 : f32 to vector<160x32xf32>
    %21 = arith.addf %20, %19 : vector<160x32xf32>
    %22 = arith.divf %20, %21 : vector<160x32xf32>
    %23 = arith.mulf %17, %22 : vector<160x32xf32>
    %24 = arith.truncf %23 : vector<160x32xf32> to vector<160x32xbf16>
    %c0_16 = arith.constant 0 : index
    %c0_17 = arith.constant 0 : index
    %25 = vector.load %arg13[%c0_16, %c0_17] : memref<160x32xbf16, #tpu.memory_space<vmem>>, vector<160x32xbf16>
    tpu.vector_store %arg13[%c0_16, %c0_17], %24 {strides = array<i32>} : memref<160x32xbf16, #tpu.memory_space<vmem>>, vector<160x32xbf16>,
    %c0_i32 = arith.constant 0 : i32
    %26 = arith.cmpi eq, %arg1, %c0_i32 : i32
    %27 = arith.extui %26 : i1 to i32
    %c0_i32_18 = arith.constant 0 : i32
    %28 = arith.cmpi ne, %27, %c0_i32_18 : i32
    scf.if %28 {
      %cst_49 = arith.constant 0.000000e+00 : bf16
      %148 = vector.broadcast %cst_49 : bf16 to vector<16x32xbf16>
      %c0_50 = arith.constant 0 : index
      %c0_51 = arith.constant 0 : index
      %149 = vector.load %arg13[%c0_50, %c0_51] : memref<160x32xbf16, #tpu.memory_space<vmem>>, vector<16x32xbf16>
      tpu.vector_store %arg13[%c0_50, %c0_51], %148 {strides = array<i32>} : memref<160x32xbf16, #tpu.memory_space<vmem>>, vector<16x32xbf16>,
    } else {
    }
    %c1_i32 = arith.constant 1 : i32
    %29 = arith.cmpi eq, %arg1, %c1_i32 : i32
    %30 = arith.extui %29 : i1 to i32
    %c0_i32_19 = arith.constant 0 : i32
    %31 = arith.cmpi ne, %30, %c0_i32_19 : i32
    scf.if %31 {
      %cst_49 = arith.constant 0.000000e+00 : bf16
      %148 = vector.broadcast %cst_49 : bf16 to vector<16x32xbf16>
      %c144 = arith.constant 144 : index
      %c0_50 = arith.constant 0 : index
      %149 = vector.load %arg13[%c144, %c0_50] : memref<160x32xbf16, #tpu.memory_space<vmem>>, vector<16x32xbf16>
      tpu.vector_store %arg13[%c144, %c0_50], %148 {strides = array<i32>} : memref<160x32xbf16, #tpu.memory_space<vmem>>, vector<16x32xbf16>,
    } else {
    }
    %c0_20 = arith.constant 0 : index
    %c0_21 = arith.constant 0 : index
    %32 = vector.load %arg13[%c0_20, %c0_21] : memref<160x32xbf16, #tpu.memory_space<vmem>>, vector<160x32xbf16>
    %33 = arith.extf %32 : vector<160x32xbf16> to vector<160x32xf32>
    %34 = tpu.iota {dimensions = array<i32: 0>} : vector<160x1xi32>
    %c16_i32 = arith.constant 16 : i32
    %c0_i32_22 = arith.constant 0 : i32
    %35 = arith.cmpi eq, %c16_i32, %c0_i32_22 : i32
    %c1_i32_23 = arith.constant 1 : i32
    %36 = arith.select %35, %c1_i32_23, %c16_i32 : i32
    %37 = vector.broadcast %36 : i32 to vector<160x1xi32>
    %38 = arith.remsi %34, %37 : vector<160x1xi32>
    %c0_i32_24 = arith.constant 0 : i32
    %39 = vector.broadcast %c0_i32_24 : i32 to vector<160x1xi32>
    %40 = arith.cmpi ne, %38, %39 : vector<160x1xi32>
    %c0_i32_25 = arith.constant 0 : i32
    %41 = vector.broadcast %c0_i32_25 : i32 to vector<160x1xi32>
    %42 = arith.cmpi slt, %38, %41 : vector<160x1xi32>
    %c0_i32_26 = arith.constant 0 : i32
    %43 = arith.cmpi slt, %36, %c0_i32_26 : i32
    %44 = vector.broadcast %43 : i1 to vector<160x1xi1>
    %45 = vector.broadcast %44 : vector<160x1xi1> to vector<160x1xi1>
    %46 = arith.xori %42, %45 : vector<160x1xi1>
    %47 = arith.andi %46, %40 : vector<160x1xi1>
    %48 = vector.broadcast %36 : i32 to vector<160x1xi32>
    %49 = arith.addi %38, %48 : vector<160x1xi32>
    %50 = arith.select %47, %49, %38 : vector<160x1xi1>, vector<160x1xi32>
    %c0_i32_27 = arith.constant 0 : i32
    %51 = vector.broadcast %c0_i32_27 : i32 to vector<160x1xi32>
    %52 = arith.cmpi sgt, %50, %51 : vector<160x1xi32>
    %53 = arith.extui %52 : vector<160x1xi1> to vector<160x1xi32>
    %54 = arith.sitofp %53 : vector<160x1xi32> to vector<160x1xf32>
    %c15_i32 = arith.constant 15 : i32
    %55 = vector.broadcast %c15_i32 : i32 to vector<160x1xi32>
    %56 = arith.cmpi slt, %50, %55 : vector<160x1xi32>
    %57 = arith.extui %56 : vector<160x1xi1> to vector<160x1xi32>
    %58 = arith.sitofp %57 : vector<160x1xi32> to vector<160x1xf32>
    %c0_28 = arith.constant 0 : index
    %c0_29 = arith.constant 0 : index
    %59 = vector.load %arg7[%c0_28, %c0_29] : memref<9x32xf32, #tpu.memory_space<vmem>>, vector<9x32xf32>
    %cst_30 = arith.constant 0.000000e+00 : f32
    %60 = vector.broadcast %cst_30 : f32 to vector<128x32xf32>
    %c1_i32_31 = arith.constant 1 : i32
    %61 = tpu.dynamic_rotate %33 by %c1_i32_31 dim 0 : vector<160x32xf32>, i32 -> vector<160x32xf32>
    %62 = vector.broadcast %54 : vector<160x1xf32> to vector<160x32xf32>
    %63 = arith.mulf %61, %62 : vector<160x32xf32>
    %64 = vector.extract_strided_slice %59 {offsets = [0, 0], sizes = [1, 32], strides = [1, 1]} : vector<9x32xf32> to vector<1x32xf32>
    %65 = vector.extract_strided_slice %63 {offsets = [0, 0], sizes = [128, 32], strides = [1, 1]} : vector<160x32xf32> to vector<128x32xf32>
    %66 = vector.broadcast %64 : vector<1x32xf32> to vector<128x32xf32>
    %67 = arith.mulf %65, %66 : vector<128x32xf32>
    %68 = arith.addf %60, %67 : vector<128x32xf32>
    %69 = vector.extract_strided_slice %59 {offsets = [3, 0], sizes = [1, 32], strides = [1, 1]} : vector<9x32xf32> to vector<1x32xf32>
    %70 = vector.extract_strided_slice %63 {offsets = [16, 0], sizes = [128, 32], strides = [1, 1]} : vector<160x32xf32> to vector<128x32xf32>
    %71 = vector.broadcast %69 : vector<1x32xf32> to vector<128x32xf32>
    %72 = arith.mulf %70, %71 : vector<128x32xf32>
    %73 = arith.addf %68, %72 : vector<128x32xf32>
    %74 = vector.extract_strided_slice %59 {offsets = [6, 0], sizes = [1, 32], strides = [1, 1]} : vector<9x32xf32> to vector<1x32xf32>
    %75 = vector.extract_strided_slice %63 {offsets = [32, 0], sizes = [128, 32], strides = [1, 1]} : vector<160x32xf32> to vector<128x32xf32>
    %76 = vector.broadcast %74 : vector<1x32xf32> to vector<128x32xf32>
    %77 = arith.mulf %75, %76 : vector<128x32xf32>
    %78 = arith.addf %73, %77 : vector<128x32xf32>
    %79 = vector.extract_strided_slice %59 {offsets = [1, 0], sizes = [1, 32], strides = [1, 1]} : vector<9x32xf32> to vector<1x32xf32>
    %80 = vector.extract_strided_slice %33 {offsets = [0, 0], sizes = [128, 32], strides = [1, 1]} : vector<160x32xf32> to vector<128x32xf32>
    %81 = vector.broadcast %79 : vector<1x32xf32> to vector<128x32xf32>
    %82 = arith.mulf %80, %81 : vector<128x32xf32>
    %83 = arith.addf %78, %82 : vector<128x32xf32>
    %84 = vector.extract_strided_slice %59 {offsets = [4, 0], sizes = [1, 32], strides = [1, 1]} : vector<9x32xf32> to vector<1x32xf32>
    %85 = vector.extract_strided_slice %33 {offsets = [16, 0], sizes = [128, 32], strides = [1, 1]} : vector<160x32xf32> to vector<128x32xf32>
    %86 = vector.broadcast %84 : vector<1x32xf32> to vector<128x32xf32>
    %87 = arith.mulf %85, %86 : vector<128x32xf32>
    %88 = arith.addf %83, %87 : vector<128x32xf32>
    %89 = vector.extract_strided_slice %59 {offsets = [7, 0], sizes = [1, 32], strides = [1, 1]} : vector<9x32xf32> to vector<1x32xf32>
    %90 = vector.extract_strided_slice %33 {offsets = [32, 0], sizes = [128, 32], strides = [1, 1]} : vector<160x32xf32> to vector<128x32xf32>
    %91 = vector.broadcast %89 : vector<1x32xf32> to vector<128x32xf32>
    %92 = arith.mulf %90, %91 : vector<128x32xf32>
    %93 = arith.addf %88, %92 : vector<128x32xf32>
    %c159_i32 = arith.constant 159 : i32
    %94 = tpu.dynamic_rotate %33 by %c159_i32 dim 0 : vector<160x32xf32>, i32 -> vector<160x32xf32>
    %95 = vector.broadcast %58 : vector<160x1xf32> to vector<160x32xf32>
    %96 = arith.mulf %94, %95 : vector<160x32xf32>
    %97 = vector.extract_strided_slice %59 {offsets = [2, 0], sizes = [1, 32], strides = [1, 1]} : vector<9x32xf32> to vector<1x32xf32>
    %98 = vector.extract_strided_slice %96 {offsets = [0, 0], sizes = [128, 32], strides = [1, 1]} : vector<160x32xf32> to vector<128x32xf32>
    %99 = vector.broadcast %97 : vector<1x32xf32> to vector<128x32xf32>
    %100 = arith.mulf %98, %99 : vector<128x32xf32>
    %101 = arith.addf %93, %100 : vector<128x32xf32>
    %102 = vector.extract_strided_slice %59 {offsets = [5, 0], sizes = [1, 32], strides = [1, 1]} : vector<9x32xf32> to vector<1x32xf32>
    %103 = vector.extract_strided_slice %96 {offsets = [16, 0], sizes = [128, 32], strides = [1, 1]} : vector<160x32xf32> to vector<128x32xf32>
    %104 = vector.broadcast %102 : vector<1x32xf32> to vector<128x32xf32>
    %105 = arith.mulf %103, %104 : vector<128x32xf32>
    %106 = arith.addf %101, %105 : vector<128x32xf32>
    %107 = vector.extract_strided_slice %59 {offsets = [8, 0], sizes = [1, 32], strides = [1, 1]} : vector<9x32xf32> to vector<1x32xf32>
    %108 = vector.extract_strided_slice %96 {offsets = [32, 0], sizes = [128, 32], strides = [1, 1]} : vector<160x32xf32> to vector<128x32xf32>
    %109 = vector.broadcast %107 : vector<1x32xf32> to vector<128x32xf32>
    %110 = arith.mulf %108, %109 : vector<128x32xf32>
    %111 = arith.addf %106, %110 : vector<128x32xf32>
    %c0_32 = arith.constant 0 : index
    %c0_33 = arith.constant 0 : index
    %112 = vector.load %arg8[%c0_32, %c0_33] : memref<1x32xf32, #tpu.memory_space<vmem>>, vector<1x32xf32>
    %113 = vector.broadcast %112 : vector<1x32xf32> to vector<128x32xf32>
    %114 = arith.addf %111, %113 : vector<128x32xf32>
    %115 = vector.extract_strided_slice %114 {offsets = [0, 0], sizes = [128, 16], strides = [1, 1]} : vector<128x32xf32> to vector<128x16xf32>
    %116 = vector.extract_strided_slice %114 {offsets = [0, 16], sizes = [128, 16], strides = [1, 1]} : vector<128x32xf32> to vector<128x16xf32>
    %117 = arith.negf %116 : vector<128x16xf32>
    %118 = math.exp %117 : vector<128x16xf32>
    %cst_34 = arith.constant 1.000000e+00 : f32
    %119 = vector.broadcast %cst_34 : f32 to vector<128x16xf32>
    %120 = arith.addf %119, %118 : vector<128x16xf32>
    %121 = arith.divf %119, %120 : vector<128x16xf32>
    %122 = arith.mulf %116, %121 : vector<128x16xf32>
    %123 = arith.mulf %115, %122 : vector<128x16xf32>
    %124 = arith.truncf %123 : vector<128x16xf32> to vector<128x16xbf16>
    %c0_35 = arith.constant 0 : index
    %c0_36 = arith.constant 0 : index
    %125 = vector.load %arg9[%c0_35, %c0_36] : memref<16x4xbf16, #tpu.memory_space<vmem>>, vector<16x4xbf16>
    %cst_37 = arith.constant dense<0.000000e+00> : vector<128x4xf32>
    %126 = tpu.matmul %124, %125, %cst_37 {dimension_numbers = #tpu.dot_dimension_numbers<[1], [0], [0], [1], [0, 0, 1, 1], [], []>} : vector<128x16xbf16>, vector<16x4xbf16>, vector<128x4xf32> -> vector<128x4xf32>
    %127 = arith.mulf %126, %126 : vector<128x4xf32>
    %cst_38 = arith.constant dense<0.000000e+00> : vector<128xf32>
    %128 = vector.multi_reduction <add>, %127, %cst_38 [1] : vector<128x4xf32> to vector<128xf32>
    %129 = vector.shape_cast %128 : vector<128xf32> to vector<128x1xf32>
    %cst_39 = arith.constant 4.000000e+00 : f32
    %130 = vector.broadcast %cst_39 : f32 to vector<128x1xf32>
    %131 = arith.divf %129, %130 : vector<128x1xf32>
    %cst_40 = arith.constant 9.99999974E-6 : f32
    %132 = vector.broadcast %cst_40 : f32 to vector<128x1xf32>
    %133 = arith.addf %131, %132 : vector<128x1xf32>
    %134 = math.rsqrt %133 : vector<128x1xf32>
    %135 = vector.broadcast %134 : vector<128x1xf32> to vector<128x4xf32>
    %136 = arith.mulf %126, %135 : vector<128x4xf32>
    %c0_41 = arith.constant 0 : index
    %c0_42 = arith.constant 0 : index
    %137 = vector.load %arg10[%c0_41, %c0_42] : memref<1x4xf32, #tpu.memory_space<vmem>>, vector<1x4xf32>
    %138 = vector.broadcast %137 : vector<1x4xf32> to vector<128x4xf32>
    %139 = arith.mulf %136, %138 : vector<128x4xf32>
    %c0_43 = arith.constant 0 : index
    %c0_44 = arith.constant 0 : index
    %140 = vector.load %arg11[%c0_43, %c0_44] : memref<1x4xf32, #tpu.memory_space<vmem>>, vector<1x4xf32>
    %141 = vector.broadcast %140 : vector<1x4xf32> to vector<128x4xf32>
    %142 = arith.addf %139, %141 : vector<128x4xf32>
    %143 = arith.addf %142, %2 : vector<128x4xf32>
    %144 = vector.shape_cast %143 : vector<128x4xf32> to vector<8x16x4xf32>
    %c0_45 = arith.constant 0 : index
    %c0_46 = arith.constant 0 : index
    %c0_47 = arith.constant 0 : index
    %c0_48 = arith.constant 0 : index
    %145 = vector.load %arg12[%c0_45, %c0_46, %c0_47, %c0_48] : memref<1x8x16x4xf32, #tpu.memory_space<vmem>>, vector<1x8x16x4xf32>
    %146 = vector.shape_cast %145 : vector<1x8x16x4xf32> to vector<8x16x4xf32>
    %147 = vector.shape_cast %144 : vector<8x16x4xf32> to vector<1x8x16x4xf32>
    tpu.vector_store %arg12[%c0_45, %c0_46, %c0_47, %c0_48], %147 {strides = array<i32>} : memref<1x8x16x4xf32, #tpu.memory_space<vmem>>, vector<1x8x16x4xf32>,
    return
  }
  func.func @transform_0(%arg0: i32, %arg1: i32) -> (i32, i32, i32, i32) {
    %c0_i32 = arith.constant 0 : i32
    %c0_i32_0 = arith.constant 0 : i32
    %c0_i32_1 = arith.constant 0 : i32
    return %arg0, %arg1, %c0_i32, %c0_i32_0 : i32, i32, i32, i32
  }
  func.func @transform_1(%arg0: i32, %arg1: i32) -> (i32, i32, i32, i32) {
    %c8_i32 = arith.constant 8 : i32
    %0 = arith.muli %arg1, %c8_i32 : i32
    %c1_i32 = arith.constant 1 : i32
    %1 = arith.subi %0, %c1_i32 : i32
    %c0_i32 = arith.constant 0 : i32
    %2 = arith.maxsi %1, %c0_i32 : i32
    %c0_i32_0 = arith.constant 0 : i32
    %c0_i32_1 = arith.constant 0 : i32
    %c0_i32_2 = arith.constant 0 : i32
    return %arg0, %2, %c0_i32_0, %c0_i32_1 : i32, i32, i32, i32
  }
  func.func @transform_2(%arg0: i32, %arg1: i32) -> (i32, i32, i32, i32) {
    %c8_i32 = arith.constant 8 : i32
    %0 = arith.muli %arg1, %c8_i32 : i32
    %c8_i32_0 = arith.constant 8 : i32
    %1 = arith.addi %0, %c8_i32_0 : i32
    %c15_i32 = arith.constant 15 : i32
    %2 = arith.minsi %1, %c15_i32 : i32
    %c0_i32 = arith.constant 0 : i32
    %c0_i32_1 = arith.constant 0 : i32
    %c0_i32_2 = arith.constant 0 : i32
    return %arg0, %2, %c0_i32, %c0_i32_1 : i32, i32, i32, i32
  }
  func.func @transform_3(%arg0: i32, %arg1: i32) -> (i32, i32) {
    %c0_i32 = arith.constant 0 : i32
    %c0_i32_0 = arith.constant 0 : i32
    %c0_i32_1 = arith.constant 0 : i32
    return %c0_i32, %c0_i32_0 : i32, i32
  }
  func.func @transform_4(%arg0: i32, %arg1: i32) -> (i32, i32) {
    %c0_i32 = arith.constant 0 : i32
    %c0_i32_0 = arith.constant 0 : i32
    %c0_i32_1 = arith.constant 0 : i32
    return %c0_i32, %c0_i32_0 : i32, i32
  }
  func.func @transform_5(%arg0: i32, %arg1: i32) -> (i32, i32) {
    %c0_i32 = arith.constant 0 : i32
    %c0_i32_0 = arith.constant 0 : i32
    %c0_i32_1 = arith.constant 0 : i32
    return %c0_i32, %c0_i32_0 : i32, i32
  }
  func.func @transform_6(%arg0: i32, %arg1: i32) -> (i32, i32) {
    %c0_i32 = arith.constant 0 : i32
    %c0_i32_0 = arith.constant 0 : i32
    %c0_i32_1 = arith.constant 0 : i32
    return %c0_i32, %c0_i32_0 : i32, i32
  }
  func.func @transform_7(%arg0: i32, %arg1: i32) -> (i32, i32) {
    %c0_i32 = arith.constant 0 : i32
    %c0_i32_0 = arith.constant 0 : i32
    %c0_i32_1 = arith.constant 0 : i32
    return %c0_i32, %c0_i32_0 : i32, i32
  }
  func.func @transform_8(%arg0: i32, %arg1: i32) -> (i32, i32) {
    %c0_i32 = arith.constant 0 : i32
    %c0_i32_0 = arith.constant 0 : i32
    %c0_i32_1 = arith.constant 0 : i32
    return %c0_i32, %c0_i32_0 : i32, i32
  }
  func.func @transform_9(%arg0: i32, %arg1: i32) -> (i32, i32) {
    %c0_i32 = arith.constant 0 : i32
    %c0_i32_0 = arith.constant 0 : i32
    %c0_i32_1 = arith.constant 0 : i32
    return %c0_i32, %c0_i32_0 : i32, i32
  }
  func.func @transform_10(%arg0: i32, %arg1: i32) -> (i32, i32, i32, i32) {
    %c0_i32 = arith.constant 0 : i32
    %c0_i32_0 = arith.constant 0 : i32
    %c0_i32_1 = arith.constant 0 : i32
    return %arg0, %arg1, %c0_i32, %c0_i32_0 : i32, i32, i32, i32
  }
}

module attributes {stable_mosaic.version = 11 : i64} {
  func.func @_glumbconv_kernel(%arg0: i32, %arg1: i32, %arg2: memref<1x8x16x4xf32, #tpu.memory_space<vmem>>, %arg3: memref<1x1x16x4xf32, #tpu.memory_space<vmem>>, %arg4: memref<1x1x16x4xf32, #tpu.memory_space<vmem>>, %arg5: memref<4x32xbf16, #tpu.memory_space<vmem>>, %arg6: memref<1x32xf32, #tpu.memory_space<vmem>>, %arg7: memref<9x32xf32, #tpu.memory_space<vmem>>, %arg8: memref<1x32xf32, #tpu.memory_space<vmem>>, %arg9: memref<16x4xbf16, #tpu.memory_space<vmem>>, %arg10: memref<1x4xf32, #tpu.memory_space<vmem>>, %arg11: memref<1x4xf32, #tpu.memory_space<vmem>>, %arg12: memref<1x8x16x4xf32, #tpu.memory_space<vmem>>, %arg13: memref<160x32xbf16, #tpu.memory_space<vmem>>) attributes {dimension_semantics = [#tpu.dimension_semantics<parallel>, #tpu.dimension_semantics<parallel>], iteration_bounds = array<i64: 2, 2>, scalar_prefetch = 0 : i64, scratch_operands = 1 : i64, tpu.core_type = #tpu.core_type<tc>, window_params = [{transform_indices = @transform_0, window_bounds = array<i64: 1, 8, 16, 4>}, {transform_indices = @transform_1, window_bounds = array<i64: 1, 1, 16, 4>}, {transform_indices = @transform_2, window_bounds = array<i64: 1, 1, 16, 4>}, {pipeline_mode = #tpu.pipeline_mode<synchronous>, transform_indices = @transform_3, window_bounds = array<i64: 4, 32>}, {pipeline_mode = #tpu.pipeline_mode<synchronous>, transform_indices = @transform_4, window_bounds = array<i64: 1, 32>}, {pipeline_mode = #tpu.pipeline_mode<synchronous>, transform_indices = @transform_5, window_bounds = array<i64: 9, 32>}, {pipeline_mode = #tpu.pipeline_mode<synchronous>, transform_indices = @transform_6, window_bounds = array<i64: 1, 32>}, {pipeline_mode = #tpu.pipeline_mode<synchronous>, transform_indices = @transform_7, window_bounds = array<i64: 16, 4>}, {pipeline_mode = #tpu.pipeline_mode<synchronous>, transform_indices = @transform_8, window_bounds = array<i64: 1, 4>}, {pipeline_mode = #tpu.pipeline_mode<synchronous>, transform_indices = @transform_9, window_bounds = array<i64: 1, 4>}, {transform_indices = @transform_10, window_bounds = array<i64: 1, 8, 16, 4>}]} {
    %c0 = arith.constant 0 : index
    %c0_0 = arith.constant 0 : index
    %c0_1 = arith.constant 0 : index
    %c0_2 = arith.constant 0 : index
    %0 = vector.load %arg2[%c0, %c0_0, %c0_1, %c0_2] : memref<1x8x16x4xf32, #tpu.memory_space<vmem>>, vector<1x8x16x4xf32>
    %1 = vector.shape_cast %0 : vector<1x8x16x4xf32> to vector<8x16x4xf32>
    %2 = vector.shape_cast %1 : vector<8x16x4xf32> to vector<128x4xf32>
    %c0_3 = arith.constant 0 : index
    %c0_4 = arith.constant 0 : index
    %c0_5 = arith.constant 0 : index
    %c0_6 = arith.constant 0 : index
    %3 = vector.load %arg3[%c0_3, %c0_4, %c0_5, %c0_6] : memref<1x1x16x4xf32, #tpu.memory_space<vmem>>, vector<1x1x16x4xf32>
    %4 = vector.shape_cast %3 : vector<1x1x16x4xf32> to vector<1x16x4xf32>
    %5 = vector.shape_cast %4 : vector<1x16x4xf32> to vector<16x4xf32>
    %6 = arith.truncf %5 : vector<16x4xf32> to vector<16x4xbf16>
    %7 = arith.truncf %2 : vector<128x4xf32> to vector<128x4xbf16>
    %c0_7 = arith.constant 0 : index
    %c0_8 = arith.constant 0 : index
    %c0_9 = arith.constant 0 : index
    %c0_10 = arith.constant 0 : index
    %8 = vector.load %arg4[%c0_7, %c0_8, %c0_9, %c0_10] : memref<1x1x16x4xf32, #tpu.memory_space<vmem>>, vector<1x1x16x4xf32>
    %9 = vector.shape_cast %8 : vector<1x1x16x4xf32> to vector<1x16x4xf32>
    %10 = vector.shape_cast %9 : vector<1x16x4xf32> to vector<16x4xf32>
    %11 = arith.truncf %10 : vector<16x4xf32> to vector<16x4xbf16>
    %12 = tpu.concatenate %6, %7, %11 in 0 : vector<16x4xbf16>, vector<128x4xbf16>, vector<16x4xbf16> -> vector<160x4xbf16>
    %c0_11 = arith.constant 0 : index
    %c0_12 = arith.constant 0 : index
    %13 = vector.load %arg5[%c0_11, %c0_12] : memref<4x32xbf16, #tpu.memory_space<vmem>>, vector<4x32xbf16>
    %cst = arith.constant dense<0.000000e+00> : vector<160x32xf32>
    %14 = tpu.matmul %12, %13, %cst {dimension_numbers = #tpu.dot_dimension_numbers<[1], [0], [0], [1], [0, 0, 1, 1], [], []>} : vector<160x4xbf16>, vector<4x32xbf16>, vector<160x32xf32> -> vector<160x32xf32>
    %c0_13 = arith.constant 0 : index
    %c0_14 = arith.constant 0 : index
    %15 = vector.load %arg6[%c0_13, %c0_14] : memref<1x32xf32, #tpu.memory_space<vmem>>, vector<1x32xf32>
    %16 = vector.broadcast %15 : vector<1x32xf32> to vector<160x32xf32>
    %17 = arith.addf %14, %16 : vector<160x32xf32>
    %18 = arith.negf %17 : vector<160x32xf32>
    %19 = math.exp %18 : vector<160x32xf32>
    %cst_15 = arith.constant 1.000000e+00 : f32
    %20 = vector.broadcast %cst_15 : f32 to vector<160x32xf32>
    %21 = arith.addf %20, %19 : vector<160x32xf32>
    %22 = arith.divf %20, %21 : vector<160x32xf32>
    %23 = arith.mulf %17, %22 : vector<160x32xf32>
    %24 = arith.truncf %23 : vector<160x32xf32> to vector<160x32xbf16>
    %c0_16 = arith.constant 0 : index
    %c0_17 = arith.constant 0 : index
    %25 = vector.load %arg13[%c0_16, %c0_17] : memref<160x32xbf16, #tpu.memory_space<vmem>>, vector<160x32xbf16>
    tpu.vector_store %arg13[%c0_16, %c0_17], %24 {strides = array<i32>} : memref<160x32xbf16, #tpu.memory_space<vmem>>, vector<160x32xbf16>,
    %c0_i32 = arith.constant 0 : i32
    %26 = arith.cmpi eq, %arg1, %c0_i32 : i32
    %27 = arith.extui %26 : i1 to i32
    %c0_i32_18 = arith.constant 0 : i32
    %28 = arith.cmpi ne, %27, %c0_i32_18 : i32
    scf.if %28 {
      %cst_49 = arith.constant 0.000000e+00 : bf16
      %148 = vector.broadcast %cst_49 : bf16 to vector<16x32xbf16>
      %c0_50 = arith.constant 0 : index
      %c0_51 = arith.constant 0 : index
      %149 = vector.load %arg13[%c0_50, %c0_51] : memref<160x32xbf16, #tpu.memory_space<vmem>>, vector<16x32xbf16>
      tpu.vector_store %arg13[%c0_50, %c0_51], %148 {strides = array<i32>} : memref<160x32xbf16, #tpu.memory_space<vmem>>, vector<16x32xbf16>,
    } else {
    }
    %c1_i32 = arith.constant 1 : i32
    %29 = arith.cmpi eq, %arg1, %c1_i32 : i32
    %30 = arith.extui %29 : i1 to i32
    %c0_i32_19 = arith.constant 0 : i32
    %31 = arith.cmpi ne, %30, %c0_i32_19 : i32
    scf.if %31 {
      %cst_49 = arith.constant 0.000000e+00 : bf16
      %148 = vector.broadcast %cst_49 : bf16 to vector<16x32xbf16>
      %c144 = arith.constant 144 : index
      %c0_50 = arith.constant 0 : index
      %149 = vector.load %arg13[%c144, %c0_50] : memref<160x32xbf16, #tpu.memory_space<vmem>>, vector<16x32xbf16>
      tpu.vector_store %arg13[%c144, %c0_50], %148 {strides = array<i32>} : memref<160x32xbf16, #tpu.memory_space<vmem>>, vector<16x32xbf16>,
    } else {
    }
    %c0_20 = arith.constant 0 : index
    %c0_21 = arith.constant 0 : index
    %32 = vector.load %arg13[%c0_20, %c0_21] : memref<160x32xbf16, #tpu.memory_space<vmem>>, vector<160x32xbf16>
    %33 = arith.extf %32 : vector<160x32xbf16> to vector<160x32xf32>
    %34 = tpu.iota {dimensions = array<i32: 0>} : vector<160x1xi32>
    %c16_i32 = arith.constant 16 : i32
    %c0_i32_22 = arith.constant 0 : i32
    %35 = arith.cmpi eq, %c16_i32, %c0_i32_22 : i32
    %c1_i32_23 = arith.constant 1 : i32
    %36 = arith.select %35, %c1_i32_23, %c16_i32 : i32
    %37 = vector.broadcast %36 : i32 to vector<160x1xi32>
    %38 = arith.remsi %34, %37 : vector<160x1xi32>
    %c0_i32_24 = arith.constant 0 : i32
    %39 = vector.broadcast %c0_i32_24 : i32 to vector<160x1xi32>
    %40 = arith.cmpi ne, %38, %39 : vector<160x1xi32>
    %c0_i32_25 = arith.constant 0 : i32
    %41 = vector.broadcast %c0_i32_25 : i32 to vector<160x1xi32>
    %42 = arith.cmpi slt, %38, %41 : vector<160x1xi32>
    %c0_i32_26 = arith.constant 0 : i32
    %43 = arith.cmpi slt, %36, %c0_i32_26 : i32
    %44 = vector.broadcast %43 : i1 to vector<160x1xi1>
    %45 = vector.broadcast %44 : vector<160x1xi1> to vector<160x1xi1>
    %46 = arith.xori %42, %45 : vector<160x1xi1>
    %47 = arith.andi %46, %40 : vector<160x1xi1>
    %48 = vector.broadcast %36 : i32 to vector<160x1xi32>
    %49 = arith.addi %38, %48 : vector<160x1xi32>
    %50 = arith.select %47, %49, %38 : vector<160x1xi1>, vector<160x1xi32>
    %c0_i32_27 = arith.constant 0 : i32
    %51 = vector.broadcast %c0_i32_27 : i32 to vector<160x1xi32>
    %52 = arith.cmpi sgt, %50, %51 : vector<160x1xi32>
    %53 = arith.extui %52 : vector<160x1xi1> to vector<160x1xi32>
    %54 = arith.sitofp %53 : vector<160x1xi32> to vector<160x1xf32>
    %c15_i32 = arith.constant 15 : i32
    %55 = vector.broadcast %c15_i32 : i32 to vector<160x1xi32>
    %56 = arith.cmpi slt, %50, %55 : vector<160x1xi32>
    %57 = arith.extui %56 : vector<160x1xi1> to vector<160x1xi32>
    %58 = arith.sitofp %57 : vector<160x1xi32> to vector<160x1xf32>
    %c0_28 = arith.constant 0 : index
    %c0_29 = arith.constant 0 : index
    %59 = vector.load %arg7[%c0_28, %c0_29] : memref<9x32xf32, #tpu.memory_space<vmem>>, vector<9x32xf32>
    %cst_30 = arith.constant 0.000000e+00 : f32
    %60 = vector.broadcast %cst_30 : f32 to vector<128x32xf32>
    %c1_i32_31 = arith.constant 1 : i32
    %61 = tpu.dynamic_rotate %33 by %c1_i32_31 dim 0 : vector<160x32xf32>, i32 -> vector<160x32xf32>
    %62 = vector.broadcast %54 : vector<160x1xf32> to vector<160x32xf32>
    %63 = arith.mulf %61, %62 : vector<160x32xf32>
    %64 = vector.extract_strided_slice %59 {offsets = [0, 0], sizes = [1, 32], strides = [1, 1]} : vector<9x32xf32> to vector<1x32xf32>
    %65 = vector.extract_strided_slice %63 {offsets = [0, 0], sizes = [128, 32], strides = [1, 1]} : vector<160x32xf32> to vector<128x32xf32>
    %66 = vector.broadcast %64 : vector<1x32xf32> to vector<128x32xf32>
    %67 = arith.mulf %65, %66 : vector<128x32xf32>
    %68 = arith.addf %60, %67 : vector<128x32xf32>
    %69 = vector.extract_strided_slice %59 {offsets = [3, 0], sizes = [1, 32], strides = [1, 1]} : vector<9x32xf32> to vector<1x32xf32>
    %70 = vector.extract_strided_slice %63 {offsets = [16, 0], sizes = [128, 32], strides = [1, 1]} : vector<160x32xf32> to vector<128x32xf32>
    %71 = vector.broadcast %69 : vector<1x32xf32> to vector<128x32xf32>
    %72 = arith.mulf %70, %71 : vector<128x32xf32>
    %73 = arith.addf %68, %72 : vector<128x32xf32>
    %74 = vector.extract_strided_slice %59 {offsets = [6, 0], sizes = [1, 32], strides = [1, 1]} : vector<9x32xf32> to vector<1x32xf32>
    %75 = vector.extract_strided_slice %63 {offsets = [32, 0], sizes = [128, 32], strides = [1, 1]} : vector<160x32xf32> to vector<128x32xf32>
    %76 = vector.broadcast %74 : vector<1x32xf32> to vector<128x32xf32>
    %77 = arith.mulf %75, %76 : vector<128x32xf32>
    %78 = arith.addf %73, %77 : vector<128x32xf32>
    %79 = vector.extract_strided_slice %59 {offsets = [1, 0], sizes = [1, 32], strides = [1, 1]} : vector<9x32xf32> to vector<1x32xf32>
    %80 = vector.extract_strided_slice %33 {offsets = [0, 0], sizes = [128, 32], strides = [1, 1]} : vector<160x32xf32> to vector<128x32xf32>
    %81 = vector.broadcast %79 : vector<1x32xf32> to vector<128x32xf32>
    %82 = arith.mulf %80, %81 : vector<128x32xf32>
    %83 = arith.addf %78, %82 : vector<128x32xf32>
    %84 = vector.extract_strided_slice %59 {offsets = [4, 0], sizes = [1, 32], strides = [1, 1]} : vector<9x32xf32> to vector<1x32xf32>
    %85 = vector.extract_strided_slice %33 {offsets = [16, 0], sizes = [128, 32], strides = [1, 1]} : vector<160x32xf32> to vector<128x32xf32>
    %86 = vector.broadcast %84 : vector<1x32xf32> to vector<128x32xf32>
    %87 = arith.mulf %85, %86 : vector<128x32xf32>
    %88 = arith.addf %83, %87 : vector<128x32xf32>
    %89 = vector.extract_strided_slice %59 {offsets = [7, 0], sizes = [1, 32], strides = [1, 1]} : vector<9x32xf32> to vector<1x32xf32>
    %90 = vector.extract_strided_slice %33 {offsets = [32, 0], sizes = [128, 32], strides = [1, 1]} : vector<160x32xf32> to vector<128x32xf32>
    %91 = vector.broadcast %89 : vector<1x32xf32> to vector<128x32xf32>
    %92 = arith.mulf %90, %91 : vector<128x32xf32>
    %93 = arith.addf %88, %92 : vector<128x32xf32>
    %c159_i32 = arith.constant 159 : i32
    %94 = tpu.dynamic_rotate %33 by %c159_i32 dim 0 : vector<160x32xf32>, i32 -> vector<160x32xf32>
    %95 = vector.broadcast %58 : vector<160x1xf32> to vector<160x32xf32>
    %96 = arith.mulf %94, %95 : vector<160x32xf32>
    %97 = vector.extract_strided_slice %59 {offsets = [2, 0], sizes = [1, 32], strides = [1, 1]} : vector<9x32xf32> to vector<1x32xf32>
    %98 = vector.extract_strided_slice %96 {offsets = [0, 0], sizes = [128, 32], strides = [1, 1]} : vector<160x32xf32> to vector<128x32xf32>
    %99 = vector.broadcast %97 : vector<1x32xf32> to vector<128x32xf32>
    %100 = arith.mulf %98, %99 : vector<128x32xf32>
    %101 = arith.addf %93, %100 : vector<128x32xf32>
    %102 = vector.extract_strided_slice %59 {offsets = [5, 0], sizes = [1, 32], strides = [1, 1]} : vector<9x32xf32> to vector<1x32xf32>
    %103 = vector.extract_strided_slice %96 {offsets = [16, 0], sizes = [128, 32], strides = [1, 1]} : vector<160x32xf32> to vector<128x32xf32>
    %104 = vector.broadcast %102 : vector<1x32xf32> to vector<128x32xf32>
    %105 = arith.mulf %103, %104 : vector<128x32xf32>
    %106 = arith.addf %101, %105 : vector<128x32xf32>
    %107 = vector.extract_strided_slice %59 {offsets = [8, 0], sizes = [1, 32], strides = [1, 1]} : vector<9x32xf32> to vector<1x32xf32>
    %108 = vector.extract_strided_slice %96 {offsets = [32, 0], sizes = [128, 32], strides = [1, 1]} : vector<160x32xf32> to vector<128x32xf32>
    %109 = vector.broadcast %107 : vector<1x32xf32> to vector<128x32xf32>
    %110 = arith.mulf %108, %109 : vector<128x32xf32>
    %111 = arith.addf %106, %110 : vector<128x32xf32>
    %c0_32 = arith.constant 0 : index
    %c0_33 = arith.constant 0 : index
    %112 = vector.load %arg8[%c0_32, %c0_33] : memref<1x32xf32, #tpu.memory_space<vmem>>, vector<1x32xf32>
    %113 = vector.broadcast %112 : vector<1x32xf32> to vector<128x32xf32>
    %114 = arith.addf %111, %113 : vector<128x32xf32>
    %115 = vector.extract_strided_slice %114 {offsets = [0, 0], sizes = [128, 16], strides = [1, 1]} : vector<128x32xf32> to vector<128x16xf32>
    %116 = vector.extract_strided_slice %114 {offsets = [0, 16], sizes = [128, 16], strides = [1, 1]} : vector<128x32xf32> to vector<128x16xf32>
    %117 = arith.negf %116 : vector<128x16xf32>
    %118 = math.exp %117 : vector<128x16xf32>
    %cst_34 = arith.constant 1.000000e+00 : f32
    %119 = vector.broadcast %cst_34 : f32 to vector<128x16xf32>
    %120 = arith.addf %119, %118 : vector<128x16xf32>
    %121 = arith.divf %119, %120 : vector<128x16xf32>
    %122 = arith.mulf %116, %121 : vector<128x16xf32>
    %123 = arith.mulf %115, %122 : vector<128x16xf32>
    %124 = arith.truncf %123 : vector<128x16xf32> to vector<128x16xbf16>
    %c0_35 = arith.constant 0 : index
    %c0_36 = arith.constant 0 : index
    %125 = vector.load %arg9[%c0_35, %c0_36] : memref<16x4xbf16, #tpu.memory_space<vmem>>, vector<16x4xbf16>
    %cst_37 = arith.constant dense<0.000000e+00> : vector<128x4xf32>
    %126 = tpu.matmul %124, %125, %cst_37 {dimension_numbers = #tpu.dot_dimension_numbers<[1], [0], [0], [1], [0, 0, 1, 1], [], []>} : vector<128x16xbf16>, vector<16x4xbf16>, vector<128x4xf32> -> vector<128x4xf32>
    %127 = arith.mulf %126, %126 : vector<128x4xf32>
    %cst_38 = arith.constant dense<0.000000e+00> : vector<128xf32>
    %128 = vector.multi_reduction <add>, %127, %cst_38 [1] : vector<128x4xf32> to vector<128xf32>
    %129 = vector.shape_cast %128 : vector<128xf32> to vector<128x1xf32>
    %cst_39 = arith.constant 4.000000e+00 : f32
    %130 = vector.broadcast %cst_39 : f32 to vector<128x1xf32>
    %131 = arith.divf %129, %130 : vector<128x1xf32>
    %cst_40 = arith.constant 9.99999974E-6 : f32
    %132 = vector.broadcast %cst_40 : f32 to vector<128x1xf32>
    %133 = arith.addf %131, %132 : vector<128x1xf32>
    %134 = math.rsqrt %133 : vector<128x1xf32>
    %135 = vector.broadcast %134 : vector<128x1xf32> to vector<128x4xf32>
    %136 = arith.mulf %126, %135 : vector<128x4xf32>
    %c0_41 = arith.constant 0 : index
    %c0_42 = arith.constant 0 : index
    %137 = vector.load %arg10[%c0_41, %c0_42] : memref<1x4xf32, #tpu.memory_space<vmem>>, vector<1x4xf32>
    %138 = vector.broadcast %137 : vector<1x4xf32> to vector<128x4xf32>
    %139 = arith.mulf %136, %138 : vector<128x4xf32>
    %c0_43 = arith.constant 0 : index
    %c0_44 = arith.constant 0 : index
    %140 = vector.load %arg11[%c0_43, %c0_44] : memref<1x4xf32, #tpu.memory_space<vmem>>, vector<1x4xf32>
    %141 = vector.broadcast %140 : vector<1x4xf32> to vector<128x4xf32>
    %142 = arith.addf %139, %141 : vector<128x4xf32>
    %143 = arith.addf %142, %2 : vector<128x4xf32>
    %144 = vector.shape_cast %143 : vector<128x4xf32> to vector<8x16x4xf32>
    %c0_45 = arith.constant 0 : index
    %c0_46 = arith.constant 0 : index
    %c0_47 = arith.constant 0 : index
    %c0_48 = arith.constant 0 : index
    %145 = vector.load %arg12[%c0_45, %c0_46, %c0_47, %c0_48] : memref<1x8x16x4xf32, #tpu.memory_space<vmem>>, vector<1x8x16x4xf32>
    %146 = vector.shape_cast %145 : vector<1x8x16x4xf32> to vector<8x16x4xf32>
    %147 = vector.shape_cast %144 : vector<8x16x4xf32> to vector<1x8x16x4xf32>
    tpu.vector_store %arg12[%c0_45, %c0_46, %c0_47, %c0_48], %147 {strides = array<i32>} : memref<1x8x16x4xf32, #tpu.memory_space<vmem>>, vector<1x8x16x4xf32>,
    return
  }
  func.func @transform_0(%arg0: i32, %arg1: i32) -> (i32, i32, i32, i32) {
    %c0_i32 = arith.constant 0 : i32
    %c0_i32_0 = arith.constant 0 : i32
    %c0_i32_1 = arith.constant 0 : i32
    return %arg0, %arg1, %c0_i32, %c0_i32_0 : i32, i32, i32, i32
  }
  func.func @transform_1(%arg0: i32, %arg1: i32) -> (i32, i32, i32, i32) {
    %c8_i32 = arith.constant 8 : i32
    %0 = arith.muli %arg1, %c8_i32 : i32
    %c1_i32 = arith.constant 1 : i32
    %1 = arith.subi %0, %c1_i32 : i32
    %c0_i32 = arith.constant 0 : i32
    %2 = arith.maxsi %1, %c0_i32 : i32
    %c0_i32_0 = arith.constant 0 : i32
    %c0_i32_1 = arith.constant 0 : i32
    %c0_i32_2 = arith.constant 0 : i32
    return %arg0, %2, %c0_i32_0, %c0_i32_1 : i32, i32, i32, i32
  }
  func.func @transform_2(%arg0: i32, %arg1: i32) -> (i32, i32, i32, i32) {
    %c8_i32 = arith.constant 8 : i32
    %0 = arith.muli %arg1, %c8_i32 : i32
    %c8_i32_0 = arith.constant 8 : i32
    %1 = arith.addi %0, %c8_i32_0 : i32
    %c15_i32 = arith.constant 15 : i32
    %2 = arith.minsi %1, %c15_i32 : i32
    %c0_i32 = arith.constant 0 : i32
    %c0_i32_1 = arith.constant 0 : i32
    %c0_i32_2 = arith.constant 0 : i32
    return %arg0, %2, %c0_i32, %c0_i32_1 : i32, i32, i32, i32
  }
  func.func @transform_3(%arg0: i32, %arg1: i32) -> (i32, i32) {
    %c0_i32 = arith.constant 0 : i32
    %c0_i32_0 = arith.constant 0 : i32
    %c0_i32_1 = arith.constant 0 : i32
    return %c0_i32, %c0_i32_0 : i32, i32
  }
  func.func @transform_4(%arg0: i32, %arg1: i32) -> (i32, i32) {
    %c0_i32 = arith.constant 0 : i32
    %c0_i32_0 = arith.constant 0 : i32
    %c0_i32_1 = arith.constant 0 : i32
    return %c0_i32, %c0_i32_0 : i32, i32
  }
  func.func @transform_5(%arg0: i32, %arg1: i32) -> (i32, i32) {
    %c0_i32 = arith.constant 0 : i32
    %c0_i32_0 = arith.constant 0 : i32
    %c0_i32_1 = arith.constant 0 : i32
    return %c0_i32, %c0_i32_0 : i32, i32
  }
  func.func @transform_6(%arg0: i32, %arg1: i32) -> (i32, i32) {
    %c0_i32 = arith.constant 0 : i32
    %c0_i32_0 = arith.constant 0 : i32
    %c0_i32_1 = arith.constant 0 : i32
    return %c0_i32, %c0_i32_0 : i32, i32
  }
  func.func @transform_7(%arg0: i32, %arg1: i32) -> (i32, i32) {
    %c0_i32 = arith.constant 0 : i32
    %c0_i32_0 = arith.constant 0 : i32
    %c0_i32_1 = arith.constant 0 : i32
    return %c0_i32, %c0_i32_0 : i32, i32
  }
  func.func @transform_8(%arg0: i32, %arg1: i32) -> (i32, i32) {
    %c0_i32 = arith.constant 0 : i32
    %c0_i32_0 = arith.constant 0 : i32
    %c0_i32_1 = arith.constant 0 : i32
    return %c0_i32, %c0_i32_0 : i32, i32
  }
  func.func @transform_9(%arg0: i32, %arg1: i32) -> (i32, i32) {
    %c0_i32 = arith.constant 0 : i32
    %c0_i32_0 = arith.constant 0 : i32
    %c0_i32_1 = arith.constant 0 : i32
    return %c0_i32, %c0_i32_0 : i32, i32
  }
  func.func @transform_10(%arg0: i32, %arg1: i32) -> (i32, i32, i32, i32) {
    %c0_i32 = arith.constant 0 : i32
    %c0_i32_0 = arith.constant 0 : i32
    %c0_i32_1 = arith.constant 0 : i32
    return %arg0, %arg1, %c0_i32, %c0_i32_0 : i32, i32, i32, i32
  }
}

</mosaic_0001>

<llo_original>
// kernel: tpu_custom_call.1
$region0: #{tpu_custom_call.1}
  #allocation0 [shape = 'u32[]', space=smem, size = 0x4, offset = 0x4, fixed_abs, tag = 'smem constant byte address 0x4 - core index']
  #allocation1 [shape = 'u32[144,128]{1,0:T(1,128)}', space=vmem, size = 0x12000, scoped, tag = 'internal scratch']
  #allocation2 [shape = 'bf16[160,32]{1,0:T(8,128)(2,1)}', space=vmem, size = 0xa000, scoped, tag = 'scratch operand']
  %s0 = inlined_call_operand.vmem [shape: f32[2,16,16,4], index: 0, kind: input, shape index: {}]
  %s1 = inlined_call_operand.vmem [shape: f32[2,16,16,4], index: 1, kind: input, shape index: {}]
  %s2 = inlined_call_operand.vmem [shape: f32[2,16,16,4], index: 2, kind: input, shape index: {}]
  %s3 = inlined_call_operand.vmem [shape: bf16[4,32], index: 3, kind: input, shape index: {}]
  %s4 = inlined_call_operand.vmem [shape: f32[1,32], index: 4, kind: input, shape index: {}]
  %s5 = inlined_call_operand.vmem [shape: f32[9,32], index: 5, kind: input, shape index: {}]
  %s6 = inlined_call_operand.vmem [shape: f32[1,32], index: 6, kind: input, shape index: {}]
  %s7 = inlined_call_operand.vmem [shape: bf16[16,4], index: 7, kind: input, shape index: {}]
  %s8 = inlined_call_operand.vmem [shape: f32[1,4], index: 8, kind: input, shape index: {}]
  %s9 = inlined_call_operand.vmem [shape: f32[1,4], index: 9, kind: input, shape index: {}]
  %s10 = inlined_call_operand.vmem [shape: f32[2,16,16,4], index: 10, kind: output, shape index: {}]
  %s11 = sld [smem:[#allocation0]]
  $region81: #{tpu_custom_call.1} parent=0
    _
  %s13 = ssub.s32 1, %s11
  %s14 = scalar_select 0, %s13, %s11
  loop: start=0, step=1, limit=6
  $region2: #{tpu_custom_call.1} parent=0 // loop_pre_header
    _
  $region3: #{tpu_custom_call.1} parent=0 // loop_header
    %s16 = sphi 0, %s20
    %p17 = scmp.ge.s32.totalorder %s16, 6
    %s23 = sphi 0, %s35
    %s24 = sphi 0, %s31
    %s25 = sphi 0, %s23
    %s26 = sphi 0, %s24
    %s27 = sphi 0, %s25
    %s28 = sphi 0, %s26
    %s40 = sphi 0, %s42
    %s43 = sphi 0, %s40
    %s44 = sphi 0, %s43
    %s60 = sphi 0, %s44
    %s76 = sphi 0, %s78
    %s79 = sphi 0, %s76
    %s80 = sphi 0, %s79
    %s96 = sphi 0, %s80
    %s112 = sphi 0, %s114
    %s115 = sphi 0, %s112
    %s116 = sphi 0, %s115
    %s132 = sphi 0, %s116
    %s136 = sphi 0, %s136
    %s138 = sphi 0, %s136
    %s139 = sphi 0, %s138
    %s153 = sphi 0, %s139
    %s157 = sphi 0, %s157
    %s159 = sphi 0, %s157
    %s160 = sphi 0, %s159
    %s174 = sphi 0, %s160
    %s178 = sphi 0, %s178
    %s180 = sphi 0, %s178
    %s181 = sphi 0, %s180
    %s195 = sphi 0, %s181
    %s199 = sphi 0, %s199
    %s201 = sphi 0, %s199
    %s202 = sphi 0, %s201
    %s216 = sphi 0, %s202
    %s220 = sphi 0, %s220
    %s222 = sphi 0, %s220
    %s223 = sphi 0, %s222
    %s237 = sphi 0, %s223
    %s241 = sphi 0, %s241
    %s243 = sphi 0, %s241
    %s244 = sphi 0, %s243
    %s258 = sphi 0, %s244
    %s262 = sphi 0, %s262
    %s264 = sphi 0, %s262
    %s265 = sphi 0, %s264
    %s279 = sphi 0, %s265
    %s287 = sphi 0, %s289
    %s290 = sphi 0, %s287
    %s291 = sphi 0, %s290
    %s307 = sphi 0, %s291
  $region4: #{tpu_custom_call.1} parent=0 // loop_header_branch
    %19 = sbr.rel (%p17) target = $region8
  $region5: #{tpu_custom_call.1} parent=0 // loop_body
    %s21 = ssub.s32 %s16, 1
    %s22 = ssub.s32 %s16, 2
    %s29 = sadd.s32 1, %s24
    %p30 = scmp.ge.s32.totalorder %s29, 2
    %s31 = scalar_select %p30, 0, %s29
    %s32 = sadd.s32 1, %s23
    %s33 = scalar_select %p30, %s32, %s23
    %p34 = scmp.ge.s32.totalorder %s33, 2
    %s35 = scalar_select %p34, 0, %s33
    %s36 = ssub.s32 %s23, %s35
    %s37 = ssub.s32 %s24, %s31
    %s38 = sor.u32 %s36, %s37
    %p39 = scmp.eq.s32.totalorder %s38, 0
    %s41 = sadd.s32 %s40, 1
    %s42 = scalar_select %p39, %s40, %s41
    %p45 = pneg %p39
    %p46 = scmp.eq.s32.totalorder %s16, 3
    %p47 = por %p45, %p46
    %p48 = scmp.ne.s32.totalorder %s40, %s43
    %p49 = scmp.eq.s32.totalorder %s16, 0
    %p50 = por %p48, %p49
    %p51 = scmp.ne.s32.totalorder %s40, %s43
    %p52 = scmp.eq.s32.totalorder %s21, 3
    %p53 = por %p51, %p52
    %p54 = scmp.ne.s32.totalorder %s43, %s44
    %p55 = scmp.eq.s32.totalorder %s21, 0
    %p56 = por %p54, %p55
    %p57 = scmp.ne.s32.totalorder %s43, %s44
    %p58 = scmp.eq.s32.totalorder %s22, 3
    %p59 = por %p57, %p58
    %p61 = scmp.ne.s32.totalorder %s44, %s60
    %p62 = scmp.eq.s32.totalorder %s22, 0
    %p63 = por %p61, %p62
    %s64 = smul.u32 %s24, 8
    %s65 = ssub.s32 %s64, 1
    %p66 = scmp.gt.s32.totalorder %s65, 0
    %s67 = scalar_select %p66, %s65, 0
    %s68 = smul.u32 %s31, 8
    %s69 = ssub.s32 %s68, 1
    %p70 = scmp.gt.s32.totalorder %s69, 0
    %s71 = scalar_select %p70, %s69, 0
    %s72 = ssub.s32 %s23, %s35
    %s73 = ssub.s32 %s67, %s71
    %s74 = sor.u32 %s72, %s73
    %p75 = scmp.eq.s32.totalorder %s74, 0
    %s77 = sadd.s32 %s76, 1
    %s78 = scalar_select %p75, %s76, %s77
    %p81 = pneg %p75
    %p82 = scmp.eq.s32.totalorder %s16, 3
    %p83 = por %p81, %p82
    %p84 = scmp.ne.s32.totalorder %s76, %s79
    %p85 = scmp.eq.s32.totalorder %s16, 0
    %p86 = por %p84, %p85
    %p87 = scmp.ne.s32.totalorder %s76, %s79
    %p88 = scmp.eq.s32.totalorder %s21, 3
    %p89 = por %p87, %p88
    %p90 = scmp.ne.s32.totalorder %s79, %s80
    %p91 = scmp.eq.s32.totalorder %s21, 0
    %p92 = por %p90, %p91
    %p93 = scmp.ne.s32.totalorder %s79, %s80
    %p94 = scmp.eq.s32.totalorder %s22, 3
    %p95 = por %p93, %p94
    %p97 = scmp.ne.s32.totalorder %s80, %s96
    %p98 = scmp.eq.s32.totalorder %s22, 0
    %p99 = por %p97, %p98
    %s100 = smul.u32 %s24, 8
    %s101 = sadd.s32 %s100, 8
    %p102 = scmp.lt.s32.totalorder %s101, 15
    %s103 = scalar_select %p102, %s101, 15
    %s104 = smul.u32 %s31, 8
    %s105 = sadd.s32 %s104, 8
    %p106 = scmp.lt.s32.totalorder %s105, 15
    %s107 = scalar_select %p106, %s105, 15
    %s108 = ssub.s32 %s23, %s35
    %s109 = ssub.s32 %s103, %s107
    %s110 = sor.u32 %s108, %s109
    %p111 = scmp.eq.s32.totalorder %s110, 0
    %s113 = sadd.s32 %s112, 1
    %s114 = scalar_select %p111, %s112, %s113
    %p117 = pneg %p111
    %p118 = scmp.eq.s32.totalorder %s16, 3
    %p119 = por %p117, %p118
    %p120 = scmp.ne.s32.totalorder %s112, %s115
    %p121 = scmp.eq.s32.totalorder %s16, 0
    %p122 = por %p120, %p121
    %p123 = scmp.ne.s32.totalorder %s112, %s115
    %p124 = scmp.eq.s32.totalorder %s21, 3
    %p125 = por %p123, %p124
    %p126 = scmp.ne.s32.totalorder %s115, %s116
    %p127 = scmp.eq.s32.totalorder %s21, 0
    %p128 = por %p126, %p127
    %p129 = scmp.ne.s32.totalorder %s115, %s116
    %p130 = scmp.eq.s32.totalorder %s22, 3
    %p131 = por %p129, %p130
    %p133 = scmp.ne.s32.totalorder %s116, %s132
    %p134 = scmp.eq.s32.totalorder %s22, 0
    %p135 = por %p133, %p134
    %s137 = sadd.s32 %s136, 1
    %p140 = scmp.eq.s32.totalorder %s16, 3
    %p141 = scmp.ne.s32.totalorder %s136, %s138
    %p142 = scmp.eq.s32.totalorder %s16, 0
    %p143 = por %p141, %p142
    %p144 = scmp.ne.s32.totalorder %s136, %s138
    %p145 = scmp.eq.s32.totalorder %s21, 3
    %p146 = por %p144, %p145
    %p147 = scmp.ne.s32.totalorder %s138, %s139
    %p148 = scmp.eq.s32.totalorder %s21, 0
    %p149 = por %p147, %p148
    %p150 = scmp.ne.s32.totalorder %s138, %s139
    %p151 = scmp.eq.s32.totalorder %s22, 3
    %p152 = por %p150, %p151
    %p154 = scmp.ne.s32.totalorder %s139, %s153
    %p155 = scmp.eq.s32.totalorder %s22, 0
    %p156 = por %p154, %p155
    %s158 = sadd.s32 %s157, 1
    %p161 = scmp.eq.s32.totalorder %s16, 3
    %p162 = scmp.ne.s32.totalorder %s157, %s159
    %p163 = scmp.eq.s32.totalorder %s16, 0
    %p164 = por %p162, %p163
    %p165 = scmp.ne.s32.totalorder %s157, %s159
    %p166 = scmp.eq.s32.totalorder %s21, 3
    %p167 = por %p165, %p166
    %p168 = scmp.ne.s32.totalorder %s159, %s160
    %p169 = scmp.eq.s32.totalorder %s21, 0
    %p170 = por %p168, %p169
    %p171 = scmp.ne.s32.totalorder %s159, %s160
    %p172 = scmp.eq.s32.totalorder %s22, 3
    %p173 = por %p171, %p172
    %p175 = scmp.ne.s32.totalorder %s160, %s174
    %p176 = scmp.eq.s32.totalorder %s22, 0
    %p177 = por %p175, %p176
    %s179 = sadd.s32 %s178, 1
    %p182 = scmp.eq.s32.totalorder %s16, 3
    %p183 = scmp.ne.s32.totalorder %s178, %s180
    %p184 = scmp.eq.s32.totalorder %s16, 0
    %p185 = por %p183, %p184
    %p186 = scmp.ne.s32.totalorder %s178, %s180
    %p187 = scmp.eq.s32.totalorder %s21, 3
    %p188 = por %p186, %p187
    %p189 = scmp.ne.s32.totalorder %s180, %s181
    %p190 = scmp.eq.s32.totalorder %s21, 0
    %p191 = por %p189, %p190
    %p192 = scmp.ne.s32.totalorder %s180, %s181
    %p193 = scmp.eq.s32.totalorder %s22, 3
    %p194 = por %p192, %p193
    %p196 = scmp.ne.s32.totalorder %s181, %s195
    %p197 = scmp.eq.s32.totalorder %s22, 0
    %p198 = por %p196, %p197
    %s200 = sadd.s32 %s199, 1
    %p203 = scmp.eq.s32.totalorder %s16, 3
    %p204 = scmp.ne.s32.totalorder %s199, %s201
    %p205 = scmp.eq.s32.totalorder %s16, 0
    %p206 = por %p204, %p205
    %p207 = scmp.ne.s32.totalorder %s199, %s201
    %p208 = scmp.eq.s32.totalorder %s21, 3
    %p209 = por %p207, %p208
    %p210 = scmp.ne.s32.totalorder %s201, %s202
    %p211 = scmp.eq.s32.totalorder %s21, 0
    %p212 = por %p210, %p211
    %p213 = scmp.ne.s32.totalorder %s201, %s202
    %p214 = scmp.eq.s32.totalorder %s22, 3
    %p215 = por %p213, %p214
    %p217 = scmp.ne.s32.totalorder %s202, %s216
    %p218 = scmp.eq.s32.totalorder %s22, 0
    %p219 = por %p217, %p218
    %s221 = sadd.s32 %s220, 1
    %p224 = scmp.eq.s32.totalorder %s16, 3
    %p225 = scmp.ne.s32.totalorder %s220, %s222
    %p226 = scmp.eq.s32.totalorder %s16, 0
    %p227 = por %p225, %p226
    %p228 = scmp.ne.s32.totalorder %s220, %s222
    %p229 = scmp.eq.s32.totalorder %s21, 3
    %p230 = por %p228, %p229
    %p231 = scmp.ne.s32.totalorder %s222, %s223
    %p232 = scmp.eq.s32.totalorder %s21, 0
    %p233 = por %p231, %p232
    %p234 = scmp.ne.s32.totalorder %s222, %s223
    %p235 = scmp.eq.s32.totalorder %s22, 3
    %p236 = por %p234, %p235
    %p238 = scmp.ne.s32.totalorder %s223, %s237
    %p239 = scmp.eq.s32.totalorder %s22, 0
    %p240 = por %p238, %p239
    %s242 = sadd.s32 %s241, 1
    %p245 = scmp.eq.s32.totalorder %s16, 3
    %p246 = scmp.ne.s32.totalorder %s241, %s243
    %p247 = scmp.eq.s32.totalorder %s16, 0
    %p248 = por %p246, %p247
    %p249 = scmp.ne.s32.totalorder %s241, %s243
    %p250 = scmp.eq.s32.totalorder %s21, 3
    %p251 = por %p249, %p250
    %p252 = scmp.ne.s32.totalorder %s243, %s244
    %p253 = scmp.eq.s32.totalorder %s21, 0
    %p254 = por %p252, %p253
    %p255 = scmp.ne.s32.totalorder %s243, %s244
    %p256 = scmp.eq.s32.totalorder %s22, 3
    %p257 = por %p255, %p256
    %p259 = scmp.ne.s32.totalorder %s244, %s258
    %p260 = scmp.eq.s32.totalorder %s22, 0
    %p261 = por %p259, %p260
    %s263 = sadd.s32 %s262, 1
    %p266 = scmp.eq.s32.totalorder %s16, 3
    %p267 = scmp.ne.s32.totalorder %s262, %s264
    %p268 = scmp.eq.s32.totalorder %s16, 0
    %p269 = por %p267, %p268
    %p270 = scmp.ne.s32.totalorder %s262, %s264
    %p271 = scmp.eq.s32.totalorder %s21, 3
    %p272 = por %p270, %p271
    %p273 = scmp.ne.s32.totalorder %s264, %s265
    %p274 = scmp.eq.s32.totalorder %s21, 0
    %p275 = por %p273, %p274
    %p276 = scmp.ne.s32.totalorder %s264, %s265
    %p277 = scmp.eq.s32.totalorder %s22, 3
    %p278 = por %p276, %p277
    %p280 = scmp.ne.s32.totalorder %s265, %s279
    %p281 = scmp.eq.s32.totalorder %s22, 0
    %p282 = por %p280, %p281
    %s283 = ssub.s32 %s23, %s35
    %s284 = ssub.s32 %s24, %s31
    %s285 = sor.u32 %s283, %s284
    %p286 = scmp.eq.s32.totalorder %s285, 0
    %s288 = sadd.s32 %s287, 1
    %s289 = scalar_select %p286, %s287, %s288
    %p292 = pneg %p286
    %p293 = scmp.eq.s32.totalorder %s16, 3
    %p294 = por %p292, %p293
    %p295 = scmp.ne.s32.totalorder %s287, %s290
    %p296 = scmp.eq.s32.totalorder %s16, 0
    %p297 = por %p295, %p296
    %p298 = scmp.ne.s32.totalorder %s287, %s290
    %p299 = scmp.eq.s32.totalorder %s21, 3
    %p300 = por %p298, %p299
    %p301 = scmp.ne.s32.totalorder %s290, %s291
    %p302 = scmp.eq.s32.totalorder %s21, 0
    %p303 = por %p301, %p302
    %p304 = scmp.ne.s32.totalorder %s290, %s291
    %p305 = scmp.eq.s32.totalorder %s22, 3
    %p306 = por %p304, %p305
    %p308 = scmp.ne.s32.totalorder %s291, %s307
    %p309 = scmp.eq.s32.totalorder %s22, 0
    %p310 = por %p308, %p309
    %p311 = scmp.le.s32.totalorder 1, %s16
    %p312 = scmp.lt.s32.totalorder %s16, 5
    %p313 = pnand %p311, %p312
    %p314 = pneg %p313
    // Predicated region
    $region9: #{tpu_custom_call.1} parent=5 // pred_check
      _
    $region10: #{tpu_custom_call.1} parent=5 // pred_check_branch
      %316 = sbr.rel (%p313) target = $region12
    $region11: #{tpu_custom_call.1} parent=5 // pred_region
      %s317 = ssub.s32 %s16, 1
      // Predicated region
      $region13: #{tpu_custom_call.1} parent=11 // pred_check
        %p318 = pneg %p149
      $region14: #{tpu_custom_call.1} parent=11 // pred_check_branch
        %320 = sbr.rel (%p318) target = $region16
      $region15: #{tpu_custom_call.1} parent=11 // pred_region
        _
      $region16: #{tpu_custom_call.1} parent=11 // pred_fallthru
        _
      // Predicated region
      $region17: #{tpu_custom_call.1} parent=11 // pred_check
        %p321 = pneg %p170
      $region18: #{tpu_custom_call.1} parent=11 // pred_check_branch
        %323 = sbr.rel (%p321) target = $region20
      $region19: #{tpu_custom_call.1} parent=11 // pred_region
        _
      $region20: #{tpu_custom_call.1} parent=11 // pred_fallthru
        _
      // Predicated region
      $region21: #{tpu_custom_call.1} parent=11 // pred_check
        %p324 = pneg %p191
      $region22: #{tpu_custom_call.1} parent=11 // pred_check_branch
        %326 = sbr.rel (%p324) target = $region24
      $region23: #{tpu_custom_call.1} parent=11 // pred_region
        _
      $region24: #{tpu_custom_call.1} parent=11 // pred_fallthru
        _
      // Predicated region
      $region25: #{tpu_custom_call.1} parent=11 // pred_check
        %p327 = pneg %p212
      $region26: #{tpu_custom_call.1} parent=11 // pred_check_branch
        %329 = sbr.rel (%p327) target = $region28
      $region27: #{tpu_custom_call.1} parent=11 // pred_region
        _
      $region28: #{tpu_custom_call.1} parent=11 // pred_fallthru
        _
      // Predicated region
      $region29: #{tpu_custom_call.1} parent=11 // pred_check
        %p330 = pneg %p233
      $region30: #{tpu_custom_call.1} parent=11 // pred_check_branch
        %332 = sbr.rel (%p330) target = $region32
      $region31: #{tpu_custom_call.1} parent=11 // pred_region
        _
      $region32: #{tpu_custom_call.1} parent=11 // pred_fallthru
        _
      // Predicated region
      $region33: #{tpu_custom_call.1} parent=11 // pred_check
        %p333 = pneg %p254
      $region34: #{tpu_custom_call.1} parent=11 // pred_check_branch
        %335 = sbr.rel (%p333) target = $region36
      $region35: #{tpu_custom_call.1} parent=11 // pred_region
        _
      $region36: #{tpu_custom_call.1} parent=11 // pred_fallthru
        _
      // Predicated region
      $region37: #{tpu_custom_call.1} parent=11 // pred_check
        %p336 = pneg %p275
      $region38: #{tpu_custom_call.1} parent=11 // pred_check_branch
        %338 = sbr.rel (%p336) target = $region40
      $region39: #{tpu_custom_call.1} parent=11 // pred_region
        _
      $region40: #{tpu_custom_call.1} parent=11 // pred_fallthru
        _
    $region12: #{tpu_custom_call.1} parent=5 // pred_fallthru
      _
    %p339 = scmp.lt.s32.totalorder %s16, 4
    // Predicated region
    $region41: #{tpu_custom_call.1} parent=5 // pred_check
      %p340 = pneg %p339
    $region42: #{tpu_custom_call.1} parent=5 // pred_check_branch
      %342 = sbr.rel (%p340) target = $region44
    $region43: #{tpu_custom_call.1} parent=5 // pred_region
      // Predicated region
      $region45: #{tpu_custom_call.1} parent=43 // pred_check
        %p343 = pneg %p50
      $region46: #{tpu_custom_call.1} parent=43 // pred_check_branch
        %345 = sbr.rel (%p343) target = $region48
      $region47: #{tpu_custom_call.1} parent=43 // pred_region
        %s346 = smul.u32 8, %s24
        %p347 = scmp.lt.s32.totalorder %s23, 1
        %s348 = scalar_select %p347, %s23, 1
        %p349 = scmp.lt.s32.totalorder %s346, 15
        %s350 = scalar_select %p349, %s346, 15
        %s351 = smul.addr %s350, 2
        %s352 = smul.addr %s348, 32
        %s353 = sadd.s32 %s351, %s352
        %s354 = smul.addr %s353, 8
        %s355 = scalar_lea.vmem %s0, %s354
        %s356 = smul.u32 8, %s24
      $region48: #{tpu_custom_call.1} parent=43 // pred_fallthru
        _
      // Predicated region
      $region49: #{tpu_custom_call.1} parent=43 // pred_check
        %p357 = pneg %p86
      $region50: #{tpu_custom_call.1} parent=43 // pred_check_branch
        %359 = sbr.rel (%p357) target = $region52
      $region51: #{tpu_custom_call.1} parent=43 // pred_region
        %s360 = smul.u32 %s24, 8
        %s361 = ssub.s32 %s360, 1
        %p362 = scmp.gt.s32.totalorder %s361, 0
        %s363 = scalar_select %p362, %s361, 0
        %p364 = scmp.lt.s32.totalorder %s23, 1
        %s365 = scalar_select %p364, %s23, 1
        %p366 = scmp.lt.s32.totalorder %s363, 15
        %s367 = scalar_select %p366, %s363, 15
        %s368 = smul.addr %s367, 2
        %s369 = smul.addr %s365, 32
        %s370 = sadd.s32 %s368, %s369
        %s371 = smul.addr %s370, 8
        %s372 = scalar_lea.vmem %s1, %s371
        %s373 = smul.u32 %s24, 8
        %s374 = ssub.s32 %s373, 1
        %p375 = scmp.gt.s32.totalorder %s374, 0
        %s376 = scalar_select %p375, %s374, 0
      $region52: #{tpu_custom_call.1} parent=43 // pred_fallthru
        _
      // Predicated region
      $region53: #{tpu_custom_call.1} parent=43 // pred_check
        %p377 = pneg %p122
      $region54: #{tpu_custom_call.1} parent=43 // pred_check_branch
        %379 = sbr.rel (%p377) target = $region56
      $region55: #{tpu_custom_call.1} parent=43 // pred_region
        %s380 = smul.u32 %s24, 8
        %s381 = sadd.s32 %s380, 8
        %p382 = scmp.lt.s32.totalorder %s381, 15
        %s383 = scalar_select %p382, %s381, 15
        %p384 = scmp.lt.s32.totalorder %s23, 1
        %s385 = scalar_select %p384, %s23, 1
        %p386 = scmp.lt.s32.totalorder %s383, 15
        %s387 = scalar_select %p386, %s383, 15
        %s388 = smul.addr %s387, 2
        %s389 = smul.addr %s385, 32
        %s390 = sadd.s32 %s388, %s389
        %s391 = smul.addr %s390, 8
        %s392 = scalar_lea.vmem %s2, %s391
        %s393 = smul.u32 %s24, 8
        %s394 = sadd.s32 %s393, 8
        %p395 = scmp.lt.s32.totalorder %s394, 15
        %s396 = scalar_select %p395, %s394, 15
      $region56: #{tpu_custom_call.1} parent=43 // pred_fallthru
        _
    $region44: #{tpu_custom_call.1} parent=5 // pred_fallthru
      _
    %p397 = scmp.le.s32.totalorder 1, %s16
    %p398 = scmp.lt.s32.totalorder %s16, 5
    %p399 = pnand %p397, %p398
    %p400 = pneg %p399
    // Predicated region
    $region57: #{tpu_custom_call.1} parent=5 // pred_check
      _
    $region58: #{tpu_custom_call.1} parent=5 // pred_check_branch
      %402 = sbr.rel (%p399) target = $region60
    $region59: #{tpu_custom_call.1} parent=5 // pred_region
      %s403 = ssub.s32 %s16, 1
      %s404 = smul.u32 8, %s26
      %p405 = scmp.lt.s32.totalorder %s25, 1
      %s406 = scalar_select %p405, %s25, 1
      %p407 = scmp.lt.s32.totalorder %s404, 15
      %s408 = scalar_select %p407, %s404, 15
      %s409 = smul.addr %s408, 2
      %s410 = smul.addr %s406, 32
      %s411 = sadd.s32 %s409, %s410
      %s412 = smul.addr %s411, 8
      %s413 = scalar_lea.vmem %s0, %s412
      %p414 = pneg %p56
      %p415 = pneg %p53
      %s416 = smul.u32 %s26, 8
      %s417 = ssub.s32 %s416, 1
      %p418 = scmp.gt.s32.totalorder %s417, 0
      %s419 = scalar_select %p418, %s417, 0
      %p420 = scmp.lt.s32.totalorder %s25, 1
      %s421 = scalar_select %p420, %s25, 1
      %p422 = scmp.lt.s32.totalorder %s419, 15
      %s423 = scalar_select %p422, %s419, 15
      %s424 = smul.addr %s423, 2
      %s425 = smul.addr %s421, 32
      %s426 = sadd.s32 %s424, %s425
      %s427 = smul.addr %s426, 8
      %s428 = scalar_lea.vmem %s1, %s427
      %p429 = pneg %p92
      %p430 = pneg %p89
      %s431 = smul.u32 %s26, 8
      %s432 = sadd.s32 %s431, 8
      %p433 = scmp.lt.s32.totalorder %s432, 15
      %s434 = scalar_select %p433, %s432, 15
      %p435 = scmp.lt.s32.totalorder %s25, 1
      %s436 = scalar_select %p435, %s25, 1
      %p437 = scmp.lt.s32.totalorder %s434, 15
      %s438 = scalar_select %p437, %s434, 15
      %s439 = smul.addr %s438, 2
      %s440 = smul.addr %s436, 32
      %s441 = sadd.s32 %s439, %s440
      %s442 = smul.addr %s441, 8
      %s443 = scalar_lea.vmem %s2, %s442
      %p444 = pneg %p128
      %p445 = pneg %p125
      %p446 = pneg %p149
      %p447 = pneg %p146
      %p448 = pneg %p170
      %p449 = pneg %p167
      %p450 = pneg %p191
      %p451 = pneg %p188
      %p452 = pneg %p212
      %p453 = pneg %p209
      %p454 = pneg %p233
      %p455 = pneg %p230
      %p456 = pneg %p254
      %p457 = pneg %p251
      %p458 = pneg %p275
      %p459 = pneg %p272
      %p460 = pneg %p303
      %p461 = pneg %p300
      %s462 = smul.u32 8, %s26
      %p463 = scmp.lt.s32.totalorder %s25, 1
      %s464 = scalar_select %p463, %s25, 1
      %p465 = scmp.lt.s32.totalorder %s462, 15
      %s466 = scalar_select %p465, %s462, 15
      %s467 = smul.addr %s466, 2
      %s468 = smul.addr %s464, 32
      %s469 = sadd.s32 %s467, %s468
      %s470 = smul.addr %s469, 8
      %s471 = scalar_lea.vmem %s10, %s470
      %s472 = smul.u32 8, %s26
      %p473 = scmp.lt.s32.totalorder %s25, 1
      %s474 = scalar_select %p473, %s25, 1
      %p475 = scmp.lt.s32.totalorder %s472, 15
      %s476 = scalar_select %p475, %s472, 15
      %s477 = smul.addr %s476, 2
      %s478 = smul.addr %s474, 32
      %s479 = sadd.s32 %s477, %s478
      %s480 = smul.addr %s479, 8
      %s481 = scalar_lea.vmem %s0, %s480
      %s482 = smul.u32 8, %s26
      %s483 = smul.u32 %s26, 8
      %s484 = ssub.s32 %s483, 1
      %p485 = scmp.gt.s32.totalorder %s484, 0
      %s486 = scalar_select %p485, %s484, 0
      %p487 = scmp.lt.s32.totalorder %s25, 1
      %s488 = scalar_select %p487, %s25, 1
      %p489 = scmp.lt.s32.totalorder %s486, 15
      %s490 = scalar_select %p489, %s486, 15
      %s491 = smul.addr %s490, 2
      %s492 = smul.addr %s488, 32
      %s493 = sadd.s32 %s491, %s492
      %s494 = smul.addr %s493, 8
      %s495 = scalar_lea.vmem %s1, %s494
      %s496 = smul.u32 %s26, 8
      %s497 = ssub.s32 %s496, 1
      %p498 = scmp.gt.s32.totalorder %s497, 0
      %s499 = scalar_select %p498, %s497, 0
      %s500 = smul.u32 %s26, 8
      %s501 = sadd.s32 %s500, 8
      %p502 = scmp.lt.s32.totalorder %s501, 15
      %s503 = scalar_select %p502, %s501, 15
      %p504 = scmp.lt.s32.totalorder %s25, 1
      %s505 = scalar_select %p504, %s25, 1
      %p506 = scmp.lt.s32.totalorder %s503, 15
      %s507 = scalar_select %p506, %s503, 15
      %s508 = smul.addr %s507, 2
      %s509 = smul.addr %s505, 32
      %s510 = sadd.s32 %s508, %s509
      %s511 = smul.addr %s510, 8
      %s512 = scalar_lea.vmem %s2, %s511
      %s513 = smul.u32 %s26, 8
      %s514 = sadd.s32 %s513, 8
      %p515 = scmp.lt.s32.totalorder %s514, 15
      %s516 = scalar_select %p515, %s514, 15
      %s517 = smul.u32 8, %s26
      %p518 = scmp.lt.s32.totalorder %s25, 1
      %s519 = scalar_select %p518, %s25, 1
      %p520 = scmp.lt.s32.totalorder %s517, 15
      %s521 = scalar_select %p520, %s517, 15
      %s522 = smul.addr %s521, 2
      %s523 = smul.addr %s519, 32
      %s524 = sadd.s32 %s522, %s523
      %s525 = smul.addr %s524, 8
      %s526 = scalar_lea.vmem %s10, %s525
      %s527 = smul.u32 8, %s26
      %v529 = vld [vmem:[%s481] sm:$0xff]
      %v530 = vld [vmem:[%s481 + $0x8] sm:$0xff]
      %v531 = vld [vmem:[%s481 + $0x10] sm:$0xff]
      %v532 = vld [vmem:[%s481 + $0x18] sm:$0xff]
      %v533 = vld [vmem:[%s481 + $0x20] sm:$0xff]
      %v534 = vld [vmem:[%s481 + $0x28] sm:$0xff]
      %v535 = vld [vmem:[%s481 + $0x30] sm:$0xff]
      %v536 = vld [vmem:[%s481 + $0x38] sm:$0xff]
      %v537 = vld [vmem:[%s481 + $0x40] sm:$0xff]
      %v538 = vld [vmem:[%s481 + $0x48] sm:$0xff]
      %v539 = vld [vmem:[%s481 + $0x50] sm:$0xff]
      %v540 = vld [vmem:[%s481 + $0x58] sm:$0xff]
      %v541 = vld [vmem:[%s481 + $0x60] sm:$0xff]
      %v542 = vld [vmem:[%s481 + $0x68] sm:$0xff]
      %v543 = vld [vmem:[%s481 + $0x70] sm:$0xff]
      %v544 = vld [vmem:[%s481 + $0x78] sm:$0xff]
      %v545 = vld [vmem:[%s495] sm:$0xff]
      %v546 = vld [vmem:[%s495 + $0x8] sm:$0xff]
      %v547 = vpack.c.bf16 %v546, %v545
      %v548 = vpack.c.bf16 %v530, %v529
      %v549 = vpack.c.bf16 %v532, %v531
      %v550 = vpack.c.bf16 %v534, %v533
      %v551 = vpack.c.bf16 %v536, %v535
      %v552 = vpack.c.bf16 %v538, %v537
      %v553 = vpack.c.bf16 %v540, %v539
      %v554 = vpack.c.bf16 %v542, %v541
      %v555 = vpack.c.bf16 %v544, %v543
      %v556 = vld [vmem:[%s512] sm:$0xff]
      %v557 = vld [vmem:[%s512 + $0x8] sm:$0xff]
      %v558 = vpack.c.bf16 %v557, %v556
      %v559 = vld [vmem:[%s3] sm:$0x3]
      %v560 = vld [vmem:[%s4] sm:$0x1]
      %v562 = vlaneseq
      %v563 = vshrl.u32 %v562, 7
      %v564 = vsub.s32 0, %v563
      %v565 = vrot.slane %v560, %v564
      %vm567 = vcmask 31744
      %v569 = vsel %vm567, %v547, 0
      %v572 = vsel %vm567, %v548, 0
      %v575 = vsel %vm567, %v549, 0
      %v578 = vsel %vm567, %v550, 0
      %v581 = vsel %vm567, %v551, 0
      %v584 = vsel %vm567, %v552, 0
      %v587 = vsel %vm567, %v553, 0
      %v590 = vsel %vm567, %v554, 0
      %v593 = vsel %vm567, %v555, 0
      %v596 = vsel %vm567, %v558, 0
      %vm598 = vcmask 1041408
      %v600 = vsel %vm598, %v559, 0
      %602 = vmatprep.subr.bf16.mxu0 0
      %603 = vmatpush1.bf16.msra.mxu0 0
      %604 = vmatprep.subr.bf16.mxu0 0
      %605 = vmatpush1.bf16.msra.mxu0 0
      %606 = vmatprep.subr.bf16.mxu0 0
      %607 = vmatpush1.bf16.msra.mxu0 0
      %608 = vmatprep.subr.bf16.mxu0 0
      %609 = vmatpush1.bf16.msra.mxu0 0
      %610 = vmatprep.subr.bf16.mxu0 0
      %611 = vmatpush1.bf16.msra.mxu0 0
      %612 = vmatprep.subr.bf16.mxu0 0
      %613 = vmatpush1.bf16.msra.mxu0 0
      %614 = vmatprep.subr.bf16.mxu0 0
      %615 = vmatpush1.bf16.msra.mxu0 0
      %616 = vmatprep.subr.bf16.mxu0 0
      %617 = vmatpush1.bf16.msra.mxu0 %v600
      %618 = vmatprep.subr.bf16.mxu0 0
      %619 = vmatpush2.bf16.msra.mxu0 0
      %620 = vmatprep.subr.bf16.mxu0 0
      %621 = vmatpush2.bf16.msra.mxu0 0
      %622 = vmatprep.subr.bf16.mxu0 0
      %623 = vmatpush2.bf16.msra.mxu0 0
      %624 = vmatprep.subr.bf16.mxu0 0
      %625 = vmatpush2.bf16.msra.mxu0 0
      %626 = vmatprep.subr.bf16.mxu0 0
      %627 = vmatpush2.bf16.msra.mxu0 0
      %628 = vmatprep.subr.bf16.mxu0 0
      %629 = vmatpush2.bf16.msra.mxu0 0
      %630 = vmatprep.subr.bf16.mxu0 0
      %631 = vmatpush2.bf16.msra.mxu0 0
      %632 = vmatprep.subr.bf16.mxu0 0
      %633 = vmatpush2.bf16.msra.mxu0 0
      %634 = vmatprep.mubr.bf16.mxu0 0
      %635 = vmatmul.mubr.bf16.gmra.mxu0 %v569
      %v636 = vpop.f32.mrf.mxu0
      %v637 = vadd.f32 %v565, %v636
      %v638 = vpop.f32.mrf.mxu0
      %v639 = vpop.f32.mrf.mxu0
      %v640 = vadd.f32 %v565, %v639
      %v641 = vpop.f32.mrf.mxu0
      %642 = vmatprep.mubr.bf16.mxu0 0
      %643 = vmatmul.mubr.bf16.gmra.mxu0 %v572
      %v644 = vpop.f32.mrf.mxu0
      %v645 = vadd.f32 %v565, %v644
      %v646 = vpop.f32.mrf.mxu0
      %v647 = vpop.f32.mrf.mxu0
      %v648 = vadd.f32 %v565, %v647
      %v649 = vpop.f32.mrf.mxu0
      %650 = vmatprep.mubr.bf16.mxu0 0
      %651 = vmatmul.mubr.bf16.gmra.mxu0 %v575
      %v652 = vpop.f32.mrf.mxu0
      %v653 = vadd.f32 %v565, %v652
      %v654 = vpop.f32.mrf.mxu0
      %v655 = vpop.f32.mrf.mxu0
      %v656 = vadd.f32 %v565, %v655
      %v657 = vpop.f32.mrf.mxu0
      %658 = vmatprep.mubr.bf16.mxu0 0
      %659 = vmatmul.mubr.bf16.gmra.mxu0 %v578
      %v660 = vpop.f32.mrf.mxu0
      %v661 = vadd.f32 %v565, %v660
      %v662 = vpop.f32.mrf.mxu0
      %v663 = vpop.f32.mrf.mxu0
      %v664 = vadd.f32 %v565, %v663
      %v665 = vpop.f32.mrf.mxu0
      %666 = vmatprep.mubr.bf16.mxu0 0
      %667 = vmatmul.mubr.bf16.gmra.mxu0 %v581
      %v668 = vpop.f32.mrf.mxu0
      %v669 = vadd.f32 %v565, %v668
      %v670 = vpop.f32.mrf.mxu0
      %v671 = vpop.f32.mrf.mxu0
      %v672 = vadd.f32 %v565, %v671
      %v673 = vpop.f32.mrf.mxu0
      %674 = vmatprep.mubr.bf16.mxu0 0
      %675 = vmatmul.mubr.bf16.gmra.mxu0 %v584
      %v676 = vpop.f32.mrf.mxu0
      %v677 = vadd.f32 %v565, %v676
      %v678 = vpop.f32.mrf.mxu0
      %v679 = vpop.f32.mrf.mxu0
      %v680 = vadd.f32 %v565, %v679
      %v681 = vpop.f32.mrf.mxu0
      %682 = vmatprep.mubr.bf16.mxu0 0
      %683 = vmatmul.mubr.bf16.gmra.mxu0 %v587
      %v684 = vpop.f32.mrf.mxu0
      %v685 = vadd.f32 %v565, %v684
      %v686 = vpop.f32.mrf.mxu0
      %v687 = vpop.f32.mrf.mxu0
      %v688 = vadd.f32 %v565, %v687
      %v689 = vpop.f32.mrf.mxu0
      %690 = vmatprep.mubr.bf16.mxu0 0
      %691 = vmatmul.mubr.bf16.gmra.mxu0 %v590
      %v692 = vpop.f32.mrf.mxu0
      %v693 = vadd.f32 %v565, %v692
      %v694 = vpop.f32.mrf.mxu0
      %v695 = vpop.f32.mrf.mxu0
      %v696 = vadd.f32 %v565, %v695
      %v697 = vpop.f32.mrf.mxu0
      %698 = vmatprep.mubr.bf16.mxu0 0
      %699 = vmatmul.mubr.bf16.gmra.mxu0 %v593
      %v700 = vpop.f32.mrf.mxu0
      %v701 = vadd.f32 %v565, %v700
      %v702 = vpop.f32.mrf.mxu0
      %v703 = vpop.f32.mrf.mxu0
      %v704 = vadd.f32 %v565, %v703
      %v705 = vpop.f32.mrf.mxu0
      %706 = vmatprep.mubr.bf16.mxu0 0
      %707 = vmatmul.mubr.bf16.gmra.mxu0 %v596
      %v708 = vpop.f32.mrf.mxu0
      %v709 = vadd.f32 %v565, %v708
      %v710 = vpop.f32.mrf.mxu0
      %v711 = vpop.f32.mrf.mxu0
      %v712 = vadd.f32 %v565, %v711
      %v713 = vpop.f32.mrf.mxu0
      %714 = vdwg.mxu0
      %v715 = vxor.u32 %v637, 2147483648
      %v716 = vxor.u32 %v640, 2147483648
      %v717 = vxor.u32 %v645, 2147483648
      %v718 = vxor.u32 %v648, 2147483648
      %v719 = vxor.u32 %v653, 2147483648
      %v720 = vxor.u32 %v656, 2147483648
      %v721 = vxor.u32 %v661, 2147483648
      %v722 = vxor.u32 %v664, 2147483648
      %v723 = vxor.u32 %v669, 2147483648
      %v724 = vxor.u32 %v672, 2147483648
      %v725 = vxor.u32 %v677, 2147483648
      %v726 = vxor.u32 %v680, 2147483648
      %v727 = vxor.u32 %v685, 2147483648
      %v728 = vxor.u32 %v688, 2147483648
      %v729 = vxor.u32 %v693, 2147483648
      %v730 = vxor.u32 %v696, 2147483648
      %v731 = vxor.u32 %v701, 2147483648
      %v732 = vxor.u32 %v704, 2147483648
      %v733 = vxor.u32 %v709, 2147483648
      %v734 = vxor.u32 %v712, 2147483648
      %v735 = vmul.f32 %v715, 1.442695
      %v736 = vpow.pop %v735
      %v737 = vmul.f32 %v716, 1.442695
      %v738 = vpow.pop %v737
      %v739 = vmul.f32 %v717, 1.442695
      %v740 = vpow.pop %v739
      %v741 = vmul.f32 %v718, 1.442695
      %v742 = vpow.pop %v741
      %v743 = vmul.f32 %v719, 1.442695
      %v744 = vpow.pop %v743
      %v745 = vmul.f32 %v720, 1.442695
      %v746 = vpow.pop %v745
      %v747 = vmul.f32 %v721, 1.442695
      %v748 = vpow.pop %v747
      %v749 = vmul.f32 %v722, 1.442695
      %v750 = vpow.pop %v749
      %v751 = vmul.f32 %v723, 1.442695
      %v752 = vpow.pop %v751
      %v753 = vmul.f32 %v724, 1.442695
      %v754 = vpow.pop %v753
      %v755 = vmul.f32 %v725, 1.442695
      %v756 = vpow.pop %v755
      %v757 = vmul.f32 %v726, 1.442695
      %v758 = vpow.pop %v757
      %v759 = vmul.f32 %v727, 1.442695
      %v760 = vpow.pop %v759
      %v761 = vmul.f32 %v728, 1.442695
      %v762 = vpow.pop %v761
      %v763 = vmul.f32 %v729, 1.442695
      %v764 = vpow.pop %v763
      %v765 = vmul.f32 %v730, 1.442695
      %v766 = vpow.pop %v765
      %v767 = vmul.f32 %v731, 1.442695
      %v768 = vpow.pop %v767
      %v769 = vmul.f32 %v732, 1.442695
      %v770 = vpow.pop %v769
      %v771 = vmul.f32 %v733, 1.442695
      %v772 = vpow.pop %v771
      %v773 = vmul.f32 %v734, 1.442695
      %v774 = vpow.pop %v773
      %v775 = vadd.f32 %v736, 1.0
      %v776 = vadd.f32 %v738, 1.0
      %v777 = vadd.f32 %v740, 1.0
      %v778 = vadd.f32 %v742, 1.0
      %v779 = vadd.f32 %v744, 1.0
      %v780 = vadd.f32 %v746, 1.0
      %v781 = vadd.f32 %v748, 1.0
      %v782 = vadd.f32 %v750, 1.0
      %v783 = vadd.f32 %v752, 1.0
      %v784 = vadd.f32 %v754, 1.0
      %v785 = vadd.f32 %v756, 1.0
      %v786 = vadd.f32 %v758, 1.0
      %v787 = vadd.f32 %v760, 1.0
      %v788 = vadd.f32 %v762, 1.0
      %v789 = vadd.f32 %v764, 1.0
      %v790 = vadd.f32 %v766, 1.0
      %v791 = vadd.f32 %v768, 1.0
      %v792 = vadd.f32 %v770, 1.0
      %v793 = vadd.f32 %v772, 1.0
      %v794 = vadd.f32 %v774, 1.0
      %v795 = vrcp.pop %v775
      %v796 = vmul.f32 1.0, %v795
      %v797 = vrcp.pop %v776
      %v798 = vmul.f32 1.0, %v797
      %v799 = vrcp.pop %v777
      %v800 = vmul.f32 1.0, %v799
      %v801 = vrcp.pop %v778
      %v802 = vmul.f32 1.0, %v801
      %v803 = vrcp.pop %v779
      %v804 = vmul.f32 1.0, %v803
      %v805 = vrcp.pop %v780
      %v806 = vmul.f32 1.0, %v805
      %v807 = vrcp.pop %v781
      %v808 = vmul.f32 1.0, %v807
      %v809 = vrcp.pop %v782
      %v810 = vmul.f32 1.0, %v809
      %v811 = vrcp.pop %v783
      %v812 = vmul.f32 1.0, %v811
      %v813 = vrcp.pop %v784
      %v814 = vmul.f32 1.0, %v813
      %v815 = vrcp.pop %v785
      %v816 = vmul.f32 1.0, %v815
      %v817 = vrcp.pop %v786
      %v818 = vmul.f32 1.0, %v817
      %v819 = vrcp.pop %v787
      %v820 = vmul.f32 1.0, %v819
      %v821 = vrcp.pop %v788
      %v822 = vmul.f32 1.0, %v821
      %v823 = vrcp.pop %v789
      %v824 = vmul.f32 1.0, %v823
      %v825 = vrcp.pop %v790
      %v826 = vmul.f32 1.0, %v825
      %v827 = vrcp.pop %v791
      %v828 = vmul.f32 1.0, %v827
      %v829 = vrcp.pop %v792
      %v830 = vmul.f32 1.0, %v829
      %v831 = vrcp.pop %v793
      %v832 = vmul.f32 1.0, %v831
      %v833 = vrcp.pop %v794
      %v834 = vmul.f32 1.0, %v833
      %v835 = vmul.f32 %v637, %v796
      %v836 = vmul.f32 %v640, %v798
      %v837 = vmul.f32 %v645, %v800
      %v838 = vmul.f32 %v648, %v802
      %v839 = vmul.f32 %v653, %v804
      %v840 = vmul.f32 %v656, %v806
      %v841 = vmul.f32 %v661, %v808
      %v842 = vmul.f32 %v664, %v810
      %v843 = vmul.f32 %v669, %v812
      %v844 = vmul.f32 %v672, %v814
      %v845 = vmul.f32 %v677, %v816
      %v846 = vmul.f32 %v680, %v818
      %v847 = vmul.f32 %v685, %v820
      %v848 = vmul.f32 %v688, %v822
      %v849 = vmul.f32 %v693, %v824
      %v850 = vmul.f32 %v696, %v826
      %v851 = vmul.f32 %v701, %v828
      %v852 = vmul.f32 %v704, %v830
      %v853 = vmul.f32 %v709, %v832
      %v854 = vmul.f32 %v712, %v834
      %v855 = vpack.c.bf16 %v836, %v835
      %v856 = vpack.c.bf16 %v838, %v837
      %v857 = vpack.c.bf16 %v840, %v839
      %v858 = vpack.c.bf16 %v842, %v841
      %v859 = vpack.c.bf16 %v844, %v843
      %v860 = vpack.c.bf16 %v846, %v845
      %v861 = vpack.c.bf16 %v848, %v847
      %v862 = vpack.c.bf16 %v850, %v849
      %v863 = vpack.c.bf16 %v852, %v851
      %v864 = vpack.c.bf16 %v854, %v853
      %v875 = vunpack.c.l.b16 %v855
      %v876 = vunpack.c.h.b16 %v855
      %v877 = vunpack.c.l.b16 %v856
      %v878 = vunpack.c.h.b16 %v856
      %v879 = vunpack.c.l.b16 %v857
      %v880 = vunpack.c.h.b16 %v857
      %v881 = vunpack.c.l.b16 %v858
      %v882 = vunpack.c.h.b16 %v858
      %v883 = vunpack.c.l.b16 %v859
      %v884 = vunpack.c.h.b16 %v859
      %v885 = vunpack.c.l.b16 %v860
      %v886 = vunpack.c.h.b16 %v860
      %v887 = vunpack.c.l.b16 %v861
      %v888 = vunpack.c.h.b16 %v861
      %v889 = vunpack.c.l.b16 %v862
      %v890 = vunpack.c.h.b16 %v862
      %v891 = vunpack.c.l.b16 %v863
      %v892 = vunpack.c.h.b16 %v863
      %v893 = vunpack.c.l.b16 %v864
      %v894 = vunpack.c.h.b16 %v864
      %v895 = vpack.c.b16 %v875, %v875
      %v896 = vpack.c.b16 %v876, %v876
      %v897 = vpack.c.b16 %v877, %v877
      %v898 = vpack.c.b16 %v878, %v878
      %v899 = vpack.c.b16 %v879, %v879
      %v900 = vpack.c.b16 %v880, %v880
      %v901 = vpack.c.b16 %v881, %v881
      %v902 = vpack.c.b16 %v882, %v882
      %v903 = vpack.c.b16 %v883, %v883
      %v904 = vpack.c.b16 %v884, %v884
      %v905 = vpack.c.b16 %v885, %v885
      %v906 = vpack.c.b16 %v886, %v886
      %v907 = vpack.c.b16 %v887, %v887
      %v908 = vpack.c.b16 %v888, %v888
      %v909 = vpack.c.b16 %v889, %v889
      %v910 = vpack.c.b16 %v890, %v890
      %v911 = vpack.c.b16 %v891, %v891
      %v912 = vpack.c.b16 %v892, %v892
      %v913 = vpack.c.b16 %v893, %v893
      %v914 = vpack.c.b16 %v894, %v894
      %vm935 = vcmask 257024
      %936 = vst.msk [vmem:[#allocation2] sm:$0xf] %vm935, %v895
      %937 = vst.msk [vmem:[#allocation2 + $0x4] sm:$0xf] %vm935, %v896
      %938 = vst.msk [vmem:[#allocation2 + $0x8] sm:$0xf] %vm935, %v897
      %939 = vst.msk [vmem:[#allocation2 + $0xc] sm:$0xf] %vm935, %v898
      %940 = vst.msk [vmem:[#allocation2 + $0x10] sm:$0xf] %vm935, %v899
      %941 = vst.msk [vmem:[#allocation2 + $0x14] sm:$0xf] %vm935, %v900
      %942 = vst.msk [vmem:[#allocation2 + $0x18] sm:$0xf] %vm935, %v901
      %943 = vst.msk [vmem:[#allocation2 + $0x1c] sm:$0xf] %vm935, %v902
      %944 = vst.msk [vmem:[#allocation2 + $0x20] sm:$0xf] %vm935, %v903
      %945 = vst.msk [vmem:[#allocation2 + $0x24] sm:$0xf] %vm935, %v904
      %946 = vst.msk [vmem:[#allocation2 + $0x28] sm:$0xf] %vm935, %v905
      %947 = vst.msk [vmem:[#allocation2 + $0x2c] sm:$0xf] %vm935, %v906
      %948 = vst.msk [vmem:[#allocation2 + $0x30] sm:$0xf] %vm935, %v907
      %949 = vst.msk [vmem:[#allocation2 + $0x34] sm:$0xf] %vm935, %v908
      %950 = vst.msk [vmem:[#allocation2 + $0x38] sm:$0xf] %vm935, %v909
      %951 = vst.msk [vmem:[#allocation2 + $0x3c] sm:$0xf] %vm935, %v910
      %952 = vst.msk [vmem:[#allocation2 + $0x40] sm:$0xf] %vm935, %v911
      %953 = vst.msk [vmem:[#allocation2 + $0x44] sm:$0xf] %vm935, %v912
      %954 = vst.msk [vmem:[#allocation2 + $0x48] sm:$0xf] %vm935, %v913
      %955 = vst.msk [vmem:[#allocation2 + $0x4c] sm:$0xf] %vm935, %v914
      %p956 = scmp.eq.s32.totalorder %s26, 0
      // Predicated region
      $region61: #{tpu_custom_call.1} parent=59 // pred_check
        %p957 = pneg %p956
      $region62: #{tpu_custom_call.1} parent=59 // pred_check_branch
        %959 = sbr.rel (%p957) target = $region64
      $region63: #{tpu_custom_call.1} parent=59 // pred_region
        %960 = vst.msk [vmem:[#allocation2] sm:$0xf] %vm935, 0
        %961 = vst.msk [vmem:[#allocation2 + $0x4] sm:$0xf] %vm935, 0
      $region64: #{tpu_custom_call.1} parent=59 // pred_fallthru
        _
      %p962 = scmp.eq.s32.totalorder %s26, 1
      // Predicated region
      $region65: #{tpu_custom_call.1} parent=59 // pred_check
        %p963 = pneg %p962
      $region66: #{tpu_custom_call.1} parent=59 // pred_check_branch
        %965 = sbr.rel (%p963) target = $region68
      $region67: #{tpu_custom_call.1} parent=59 // pred_region
        %966 = vst.msk [vmem:[#allocation2 + $0x48] sm:$0xf] %vm935, 0
        %967 = vst.msk [vmem:[#allocation2 + $0x4c] sm:$0xf] %vm935, 0
      $region68: #{tpu_custom_call.1} parent=59 // pred_fallthru
        _
      %v968 = vld [vmem:[#allocation2] sm:$0xf]
      %v969 = vld [vmem:[#allocation2 + $0x4] sm:$0xf]
      %v970 = vld [vmem:[#allocation2 + $0x8] sm:$0xf]
      %v971 = vld [vmem:[#allocation2 + $0xc] sm:$0xf]
      %v972 = vld [vmem:[#allocation2 + $0x10] sm:$0xf]
      %v973 = vld [vmem:[#allocation2 + $0x14] sm:$0xf]
      %v974 = vld [vmem:[#allocation2 + $0x18] sm:$0xf]
      %v975 = vld [vmem:[#allocation2 + $0x1c] sm:$0xf]
      %v976 = vld [vmem:[#allocation2 + $0x20] sm:$0xf]
      %v977 = vld [vmem:[#allocation2 + $0x24] sm:$0xf]
      %v978 = vld [vmem:[#allocation2 + $0x28] sm:$0xf]
      %v979 = vld [vmem:[#allocation2 + $0x2c] sm:$0xf]
      %v980 = vld [vmem:[#allocation2 + $0x30] sm:$0xf]
      %v981 = vld [vmem:[#allocation2 + $0x34] sm:$0xf]
      %v982 = vld [vmem:[#allocation2 + $0x38] sm:$0xf]
      %v983 = vld [vmem:[#allocation2 + $0x3c] sm:$0xf]
      %v984 = vld [vmem:[#allocation2 + $0x40] sm:$0xf]
      %v985 = vld [vmem:[#allocation2 + $0x44] sm:$0xf]
      %v986 = vld [vmem:[#allocation2 + $0x48] sm:$0xf]
      %v987 = vld [vmem:[#allocation2 + $0x4c] sm:$0xf]
      %v988 = vunpack.c.l.bf16 %v968
      %v989 = vunpack.c.l.bf16 %v969
      %v990 = vunpack.c.l.bf16 %v970
      %v991 = vunpack.c.l.bf16 %v971
      %v992 = vunpack.c.l.bf16 %v972
      %v993 = vunpack.c.l.bf16 %v973
      %v994 = vunpack.c.l.bf16 %v974
      %v995 = vunpack.c.l.bf16 %v975
      %v996 = vunpack.c.l.bf16 %v976
      %v997 = vunpack.c.l.bf16 %v977
      %v998 = vunpack.c.l.bf16 %v978
      %v999 = vunpack.c.l.bf16 %v979
      %v1000 = vunpack.c.l.bf16 %v980
      %v1001 = vunpack.c.l.bf16 %v981
      %v1002 = vunpack.c.l.bf16 %v982
      %v1003 = vunpack.c.l.bf16 %v983
      %v1004 = vunpack.c.l.bf16 %v984
      %v1005 = vunpack.c.l.bf16 %v985
      %v1006 = vunpack.c.l.bf16 %v986
      %v1007 = vunpack.c.l.bf16 %v987
      %v1008 = vlaneseq
      %v1009 = vshrl.u32 %v1008, 7
      %v1010 = vadd.s32 %v1009, 8
      %v1011 = vadd.s32 %v1009, 16
      %v1012 = vadd.s32 %v1009, 24
      %v1013 = vadd.s32 %v1009, 32
      %v1014 = vadd.s32 %v1009, 40
      %v1015 = vadd.s32 %v1009, 48
      %v1016 = vadd.s32 %v1009, 56
      %v1017 = vadd.s32 %v1009, 64
      %v1018 = vadd.s32 %v1009, 72
      %v1019 = vadd.s32 %v1009, 80
      %v1020 = vadd.s32 %v1009, 88
      %v1021 = vadd.s32 %v1009, 96
      %v1022 = vadd.s32 %v1009, 104
      %v1023 = vadd.s32 %v1009, 112
      %v1024 = vadd.s32 %v1009, 120
      %v1025 = vadd.s32 %v1009, 128
      %v1026 = vadd.s32 %v1009, 136
      %v1027 = vadd.s32 %v1009, 144
      %v1028 = vadd.s32 %v1009, 152
      %vm1029 = vcmp.lt.s32.totalorder %v1009, 0
      %v1030 = vsub.s32 0, %v1009
      %v1031 = vsel %vm1029, %v1030, %v1009
      %v1032 = vshrl.u32 %v1031, 4
      %v1033 = vand.u32 %v1031, 15
      %v1034 = vsub.s32 0, %v1033
      %v1035 = vsel %vm1029, %v1034, %v1033
      %vm1036 = vcmp.lt.s32.totalorder %v1010, 0
      %v1037 = vsub.s32 0, %v1010
      %v1038 = vsel %vm1036, %v1037, %v1010
      %v1039 = vshrl.u32 %v1038, 4
      %v1040 = vand.u32 %v1038, 15
      %v1041 = vsub.s32 0, %v1040
      %v1042 = vsel %vm1036, %v1041, %v1040
      %vm1043 = vcmp.lt.s32.totalorder %v1011, 0
      %v1044 = vsub.s32 0, %v1011
      %v1045 = vsel %vm1043, %v1044, %v1011
      %v1046 = vshrl.u32 %v1045, 4
      %v1047 = vand.u32 %v1045, 15
      %v1048 = vsub.s32 0, %v1047
      %v1049 = vsel %vm1043, %v1048, %v1047
      %vm1050 = vcmp.lt.s32.totalorder %v1012, 0
      %v1051 = vsub.s32 0, %v1012
      %v1052 = vsel %vm1050, %v1051, %v1012
      %v1053 = vshrl.u32 %v1052, 4
      %v1054 = vand.u32 %v1052, 15
      %v1055 = vsub.s32 0, %v1054
      %v1056 = vsel %vm1050, %v1055, %v1054
      %vm1057 = vcmp.lt.s32.totalorder %v1013, 0
      %v1058 = vsub.s32 0, %v1013
      %v1059 = vsel %vm1057, %v1058, %v1013
      %v1060 = vshrl.u32 %v1059, 4
      %v1061 = vand.u32 %v1059, 15
      %v1062 = vsub.s32 0, %v1061
      %v1063 = vsel %vm1057, %v1062, %v1061
      %vm1064 = vcmp.lt.s32.totalorder %v1014, 0
      %v1065 = vsub.s32 0, %v1014
      %v1066 = vsel %vm1064, %v1065, %v1014
      %v1067 = vshrl.u32 %v1066, 4
      %v1068 = vand.u32 %v1066, 15
      %v1069 = vsub.s32 0, %v1068
      %v1070 = vsel %vm1064, %v1069, %v1068
      %vm1071 = vcmp.lt.s32.totalorder %v1015, 0
      %v1072 = vsub.s32 0, %v1015
      %v1073 = vsel %vm1071, %v1072, %v1015
      %v1074 = vshrl.u32 %v1073, 4
      %v1075 = vand.u32 %v1073, 15
      %v1076 = vsub.s32 0, %v1075
      %v1077 = vsel %vm1071, %v1076, %v1075
      %vm1078 = vcmp.lt.s32.totalorder %v1016, 0
      %v1079 = vsub.s32 0, %v1016
      %v1080 = vsel %vm1078, %v1079, %v1016
      %v1081 = vshrl.u32 %v1080, 4
      %v1082 = vand.u32 %v1080, 15
      %v1083 = vsub.s32 0, %v1082
      %v1084 = vsel %vm1078, %v1083, %v1082
      %vm1085 = vcmp.lt.s32.totalorder %v1017, 0
      %v1086 = vsub.s32 0, %v1017
      %v1087 = vsel %vm1085, %v1086, %v1017
      %v1088 = vshrl.u32 %v1087, 4
      %v1089 = vand.u32 %v1087, 15
      %v1090 = vsub.s32 0, %v1089
      %v1091 = vsel %vm1085, %v1090, %v1089
      %vm1092 = vcmp.lt.s32.totalorder %v1018, 0
      %v1093 = vsub.s32 0, %v1018
      %v1094 = vsel %vm1092, %v1093, %v1018
      %v1095 = vshrl.u32 %v1094, 4
      %v1096 = vand.u32 %v1094, 15
      %v1097 = vsub.s32 0, %v1096
      %v1098 = vsel %vm1092, %v1097, %v1096
      %vm1099 = vcmp.lt.s32.totalorder %v1019, 0
      %v1100 = vsub.s32 0, %v1019
      %v1101 = vsel %vm1099, %v1100, %v1019
      %v1102 = vshrl.u32 %v1101, 4
      %v1103 = vand.u32 %v1101, 15
      %v1104 = vsub.s32 0, %v1103
      %v1105 = vsel %vm1099, %v1104, %v1103
      %vm1106 = vcmp.lt.s32.totalorder %v1020, 0
      %v1107 = vsub.s32 0, %v1020
      %v1108 = vsel %vm1106, %v1107, %v1020
      %v1109 = vshrl.u32 %v1108, 4
      %v1110 = vand.u32 %v1108, 15
      %v1111 = vsub.s32 0, %v1110
      %v1112 = vsel %vm1106, %v1111, %v1110
      %vm1113 = vcmp.lt.s32.totalorder %v1021, 0
      %v1114 = vsub.s32 0, %v1021
      %v1115 = vsel %vm1113, %v1114, %v1021
      %v1116 = vshrl.u32 %v1115, 4
      %v1117 = vand.u32 %v1115, 15
      %v1118 = vsub.s32 0, %v1117
      %v1119 = vsel %vm1113, %v1118, %v1117
      %vm1120 = vcmp.lt.s32.totalorder %v1022, 0
      %v1121 = vsub.s32 0, %v1022
      %v1122 = vsel %vm1120, %v1121, %v1022
      %v1123 = vshrl.u32 %v1122, 4
      %v1124 = vand.u32 %v1122, 15
      %v1125 = vsub.s32 0, %v1124
      %v1126 = vsel %vm1120, %v1125, %v1124
      %vm1127 = vcmp.lt.s32.totalorder %v1023, 0
      %v1128 = vsub.s32 0, %v1023
      %v1129 = vsel %vm1127, %v1128, %v1023
      %v1130 = vshrl.u32 %v1129, 4
      %v1131 = vand.u32 %v1129, 15
      %v1132 = vsub.s32 0, %v1131
      %v1133 = vsel %vm1127, %v1132, %v1131
      %vm1134 = vcmp.lt.s32.totalorder %v1024, 0
      %v1135 = vsub.s32 0, %v1024
      %v1136 = vsel %vm1134, %v1135, %v1024
      %v1137 = vshrl.u32 %v1136, 4
      %v1138 = vand.u32 %v1136, 15
      %v1139 = vsub.s32 0, %v1138
      %v1140 = vsel %vm1134, %v1139, %v1138
      %vm1141 = vcmp.lt.s32.totalorder %v1025, 0
      %v1142 = vsub.s32 0, %v1025
      %v1143 = vsel %vm1141, %v1142, %v1025
      %v1144 = vshrl.u32 %v1143, 4
      %v1145 = vand.u32 %v1143, 15
      %v1146 = vsub.s32 0, %v1145
      %v1147 = vsel %vm1141, %v1146, %v1145
      %vm1148 = vcmp.lt.s32.totalorder %v1026, 0
      %v1149 = vsub.s32 0, %v1026
      %v1150 = vsel %vm1148, %v1149, %v1026
      %v1151 = vshrl.u32 %v1150, 4
      %v1152 = vand.u32 %v1150, 15
      %v1153 = vsub.s32 0, %v1152
      %v1154 = vsel %vm1148, %v1153, %v1152
      %vm1155 = vcmp.lt.s32.totalorder %v1027, 0
      %v1156 = vsub.s32 0, %v1027
      %v1157 = vsel %vm1155, %v1156, %v1027
      %v1158 = vshrl.u32 %v1157, 4
      %v1159 = vand.u32 %v1157, 15
      %v1160 = vsub.s32 0, %v1159
      %v1161 = vsel %vm1155, %v1160, %v1159
      %vm1162 = vcmp.lt.s32.totalorder %v1028, 0
      %v1163 = vsub.s32 0, %v1028
      %v1164 = vsel %vm1162, %v1163, %v1028
      %v1165 = vshrl.u32 %v1164, 4
      %v1166 = vand.u32 %v1164, 15
      %v1167 = vsub.s32 0, %v1166
      %v1168 = vsel %vm1162, %v1167, %v1166
      %vm1169 = vcmp.ne.s32.totalorder %v1035, 0
      %vm1170 = vcmp.ne.s32.totalorder %v1042, 0
      %vm1171 = vcmp.ne.s32.totalorder %v1049, 0
      %vm1172 = vcmp.ne.s32.totalorder %v1056, 0
      %vm1173 = vcmp.ne.s32.totalorder %v1063, 0
      %vm1174 = vcmp.ne.s32.totalorder %v1070, 0
      %vm1175 = vcmp.ne.s32.totalorder %v1077, 0
      %vm1176 = vcmp.ne.s32.totalorder %v1084, 0
      %vm1177 = vcmp.ne.s32.totalorder %v1091, 0
      %vm1178 = vcmp.ne.s32.totalorder %v1098, 0
      %vm1179 = vcmp.ne.s32.totalorder %v1105, 0
      %vm1180 = vcmp.ne.s32.totalorder %v1112, 0
      %vm1181 = vcmp.ne.s32.totalorder %v1119, 0
      %vm1182 = vcmp.ne.s32.totalorder %v1126, 0
      %vm1183 = vcmp.ne.s32.totalorder %v1133, 0
      %vm1184 = vcmp.ne.s32.totalorder %v1140, 0
      %vm1185 = vcmp.ne.s32.totalorder %v1147, 0
      %vm1186 = vcmp.ne.s32.totalorder %v1154, 0
      %vm1187 = vcmp.ne.s32.totalorder %v1161, 0
      %vm1188 = vcmp.ne.s32.totalorder %v1168, 0
      %vm1189 = vcmp.lt.s32.totalorder %v1035, 0
      %vm1190 = vcmp.lt.s32.totalorder %v1042, 0
      %vm1191 = vcmp.lt.s32.totalorder %v1049, 0
      %vm1192 = vcmp.lt.s32.totalorder %v1056, 0
      %vm1193 = vcmp.lt.s32.totalorder %v1063, 0
      %vm1194 = vcmp.lt.s32.totalorder %v1070, 0
      %vm1195 = vcmp.lt.s32.totalorder %v1077, 0
      %vm1196 = vcmp.lt.s32.totalorder %v1084, 0
      %vm1197 = vcmp.lt.s32.totalorder %v1091, 0
      %vm1198 = vcmp.lt.s32.totalorder %v1098, 0
      %vm1199 = vcmp.lt.s32.totalorder %v1105, 0
      %vm1200 = vcmp.lt.s32.totalorder %v1112, 0
      %vm1201 = vcmp.lt.s32.totalorder %v1119, 0
      %vm1202 = vcmp.lt.s32.totalorder %v1126, 0
      %vm1203 = vcmp.lt.s32.totalorder %v1133, 0
      %vm1204 = vcmp.lt.s32.totalorder %v1140, 0
      %vm1205 = vcmp.lt.s32.totalorder %v1147, 0
      %vm1206 = vcmp.lt.s32.totalorder %v1154, 0
      %vm1207 = vcmp.lt.s32.totalorder %v1161, 0
      %vm1208 = vcmp.lt.s32.totalorder %v1168, 0
      %vm1209 = vmand %vm1189, %vm1169
      %vm1210 = vmand %vm1190, %vm1170
      %vm1211 = vmand %vm1191, %vm1171
      %vm1212 = vmand %vm1192, %vm1172
      %vm1213 = vmand %vm1193, %vm1173
      %vm1214 = vmand %vm1194, %vm1174
      %vm1215 = vmand %vm1195, %vm1175
      %vm1216 = vmand %vm1196, %vm1176
      %vm1217 = vmand %vm1197, %vm1177
      %vm1218 = vmand %vm1198, %vm1178
      %vm1219 = vmand %vm1199, %vm1179
      %vm1220 = vmand %vm1200, %vm1180
      %vm1221 = vmand %vm1201, %vm1181
      %vm1222 = vmand %vm1202, %vm1182
      %vm1223 = vmand %vm1203, %vm1183
      %vm1224 = vmand %vm1204, %vm1184
      %vm1225 = vmand %vm1205, %vm1185
      %vm1226 = vmand %vm1206, %vm1186
      %vm1227 = vmand %vm1207, %vm1187
      %vm1228 = vmand %vm1208, %vm1188
      %v1229 = vadd.s32 %v1035, 16
      %v1230 = vadd.s32 %v1042, 16
      %v1231 = vadd.s32 %v1049, 16
      %v1232 = vadd.s32 %v1056, 16
      %v1233 = vadd.s32 %v1063, 16
      %v1234 = vadd.s32 %v1070, 16
      %v1235 = vadd.s32 %v1077, 16
      %v1236 = vadd.s32 %v1084, 16
      %v1237 = vadd.s32 %v1091, 16
      %v1238 = vadd.s32 %v1098, 16
      %v1239 = vadd.s32 %v1105, 16
      %v1240 = vadd.s32 %v1112, 16
      %v1241 = vadd.s32 %v1119, 16
      %v1242 = vadd.s32 %v1126, 16
      %v1243 = vadd.s32 %v1133, 16
      %v1244 = vadd.s32 %v1140, 16
      %v1245 = vadd.s32 %v1147, 16
      %v1246 = vadd.s32 %v1154, 16
      %v1247 = vadd.s32 %v1161, 16
      %v1248 = vadd.s32 %v1168, 16
      %v1249 = vsel %vm1209, %v1229, %v1035
      %v1250 = vsel %vm1210, %v1230, %v1042
      %v1251 = vsel %vm1211, %v1231, %v1049
      %v1252 = vsel %vm1212, %v1232, %v1056
      %v1253 = vsel %vm1213, %v1233, %v1063
      %v1254 = vsel %vm1214, %v1234, %v1070
      %v1255 = vsel %vm1215, %v1235, %v1077
      %v1256 = vsel %vm1216, %v1236, %v1084
      %v1257 = vsel %vm1217, %v1237, %v1091
      %v1258 = vsel %vm1218, %v1238, %v1098
      %v1259 = vsel %vm1219, %v1239, %v1105
      %v1260 = vsel %vm1220, %v1240, %v1112
      %v1261 = vsel %vm1221, %v1241, %v1119
      %v1262 = vsel %vm1222, %v1242, %v1126
      %v1263 = vsel %vm1223, %v1243, %v1133
      %v1264 = vsel %vm1224, %v1244, %v1140
      %v1265 = vsel %vm1225, %v1245, %v1147
      %v1266 = vsel %vm1226, %v1246, %v1154
      %v1267 = vsel %vm1227, %v1247, %v1161
      %v1268 = vsel %vm1228, %v1248, %v1168
      %vm1269 = vcmp.gt.s32.totalorder %v1249, 0
      %vm1270 = vcmp.gt.s32.totalorder %v1250, 0
      %vm1271 = vcmp.gt.s32.totalorder %v1251, 0
      %vm1272 = vcmp.gt.s32.totalorder %v1252, 0
      %vm1273 = vcmp.gt.s32.totalorder %v1253, 0
      %vm1274 = vcmp.gt.s32.totalorder %v1254, 0
      %vm1275 = vcmp.gt.s32.totalorder %v1255, 0
      %vm1276 = vcmp.gt.s32.totalorder %v1256, 0
      %vm1277 = vcmp.gt.s32.totalorder %v1257, 0
      %vm1278 = vcmp.gt.s32.totalorder %v1258, 0
      %vm1279 = vcmp.gt.s32.totalorder %v1259, 0
      %vm1280 = vcmp.gt.s32.totalorder %v1260, 0
      %vm1281 = vcmp.gt.s32.totalorder %v1261, 0
      %vm1282 = vcmp.gt.s32.totalorder %v1262, 0
      %vm1283 = vcmp.gt.s32.totalorder %v1263, 0
      %vm1284 = vcmp.gt.s32.totalorder %v1264, 0
      %vm1285 = vcmp.gt.s32.totalorder %v1265, 0
      %vm1286 = vcmp.gt.s32.totalorder %v1266, 0
      %vm1287 = vcmp.gt.s32.totalorder %v1267, 0
      %vm1288 = vcmp.gt.s32.totalorder %v1268, 0
      %v1289 = vsel %vm1269, 1, 0
      %v1290 = vsel %vm1270, 1, 0
      %v1291 = vsel %vm1271, 1, 0
      %v1292 = vsel %vm1272, 1, 0
      %v1293 = vsel %vm1273, 1, 0
      %v1294 = vsel %vm1274, 1, 0
      %v1295 = vsel %vm1275, 1, 0
      %v1296 = vsel %vm1276, 1, 0
      %v1297 = vsel %vm1277, 1, 0
      %v1298 = vsel %vm1278, 1, 0
      %v1299 = vsel %vm1279, 1, 0
      %v1300 = vsel %vm1280, 1, 0
      %v1301 = vsel %vm1281, 1, 0
      %v1302 = vsel %vm1282, 1, 0
      %v1303 = vsel %vm1283, 1, 0
      %v1304 = vsel %vm1284, 1, 0
      %v1305 = vsel %vm1285, 1, 0
      %v1306 = vsel %vm1286, 1, 0
      %v1307 = vsel %vm1287, 1, 0
      %v1308 = vsel %vm1288, 1, 0
      %v1309 = vcvt.s32.f32 %v1289
      %v1310 = vcvt.s32.f32 %v1290
      %v1311 = vcvt.s32.f32 %v1291
      %v1312 = vcvt.s32.f32 %v1292
      %v1313 = vcvt.s32.f32 %v1293
      %v1314 = vcvt.s32.f32 %v1294
      %v1315 = vcvt.s32.f32 %v1295
      %v1316 = vcvt.s32.f32 %v1296
      %v1317 = vcvt.s32.f32 %v1297
      %v1318 = vcvt.s32.f32 %v1298
      %v1319 = vcvt.s32.f32 %v1299
      %v1320 = vcvt.s32.f32 %v1300
      %v1321 = vcvt.s32.f32 %v1301
      %v1322 = vcvt.s32.f32 %v1302
      %v1323 = vcvt.s32.f32 %v1303
      %v1324 = vcvt.s32.f32 %v1304
      %v1325 = vcvt.s32.f32 %v1305
      %v1326 = vcvt.s32.f32 %v1306
      %v1327 = vcvt.s32.f32 %v1307
      %v1328 = vcvt.s32.f32 %v1308
      %vm1329 = vcmp.lt.s32.totalorder %v1249, 15
      %vm1330 = vcmp.lt.s32.totalorder %v1250, 15
      %vm1331 = vcmp.lt.s32.totalorder %v1251, 15
      %vm1332 = vcmp.lt.s32.totalorder %v1252, 15
      %vm1333 = vcmp.lt.s32.totalorder %v1253, 15
      %vm1334 = vcmp.lt.s32.totalorder %v1254, 15
      %vm1335 = vcmp.lt.s32.totalorder %v1255, 15
      %vm1336 = vcmp.lt.s32.totalorder %v1256, 15
      %vm1337 = vcmp.lt.s32.totalorder %v1257, 15
      %vm1338 = vcmp.lt.s32.totalorder %v1258, 15
      %vm1339 = vcmp.lt.s32.totalorder %v1259, 15
      %vm1340 = vcmp.lt.s32.totalorder %v1260, 15
      %vm1341 = vcmp.lt.s32.totalorder %v1261, 15
      %vm1342 = vcmp.lt.s32.totalorder %v1262, 15
      %vm1343 = vcmp.lt.s32.totalorder %v1263, 15
      %vm1344 = vcmp.lt.s32.totalorder %v1264, 15
      %vm1345 = vcmp.lt.s32.totalorder %v1265, 15
      %vm1346 = vcmp.lt.s32.totalorder %v1266, 15
      %vm1347 = vcmp.lt.s32.totalorder %v1267, 15
      %vm1348 = vcmp.lt.s32.totalorder %v1268, 15
      %v1349 = vsel %vm1329, 1, 0
      %v1350 = vsel %vm1330, 1, 0
      %v1351 = vsel %vm1331, 1, 0
      %v1352 = vsel %vm1332, 1, 0
      %v1353 = vsel %vm1333, 1, 0
      %v1354 = vsel %vm1334, 1, 0
      %v1355 = vsel %vm1335, 1, 0
      %v1356 = vsel %vm1336, 1, 0
      %v1357 = vsel %vm1337, 1, 0
      %v1358 = vsel %vm1338, 1, 0
      %v1359 = vsel %vm1339, 1, 0
      %v1360 = vsel %vm1340, 1, 0
      %v1361 = vsel %vm1341, 1, 0
      %v1362 = vsel %vm1342, 1, 0
      %v1363 = vsel %vm1343, 1, 0
      %v1364 = vsel %vm1344, 1, 0
      %v1365 = vsel %vm1345, 1, 0
      %v1366 = vsel %vm1346, 1, 0
      %v1367 = vsel %vm1347, 1, 0
      %v1368 = vsel %vm1348, 1, 0
      %v1369 = vcvt.s32.f32 %v1349
      %v1370 = vcvt.s32.f32 %v1350
      %v1371 = vcvt.s32.f32 %v1351
      %v1372 = vcvt.s32.f32 %v1352
      %v1373 = vcvt.s32.f32 %v1353
      %v1374 = vcvt.s32.f32 %v1354
      %v1375 = vcvt.s32.f32 %v1355
      %v1376 = vcvt.s32.f32 %v1356
      %v1377 = vcvt.s32.f32 %v1357
      %v1378 = vcvt.s32.f32 %v1358
      %v1379 = vcvt.s32.f32 %v1359
      %v1380 = vcvt.s32.f32 %v1360
      %v1381 = vcvt.s32.f32 %v1361
      %v1382 = vcvt.s32.f32 %v1362
      %v1383 = vcvt.s32.f32 %v1363
      %v1384 = vcvt.s32.f32 %v1364
      %v1385 = vcvt.s32.f32 %v1365
      %v1386 = vcvt.s32.f32 %v1366
      %v1387 = vcvt.s32.f32 %v1367
      %v1388 = vcvt.s32.f32 %v1368
      %v1389 = vld [vmem:[%s5] sm:$0xff]
      %v1390 = vld [vmem:[%s5 + $0x8] sm:$0x1]
      %v1391 = vrot.slane %v988, 7
      %v1392 = vrot.slane %v989, 7
      %v1393 = vrot.slane %v990, 7
      %v1394 = vrot.slane %v991, 7
      %v1395 = vrot.slane %v992, 7
      %v1396 = vrot.slane %v993, 7
      %v1397 = vrot.slane %v994, 7
      %v1398 = vrot.slane %v995, 7
      %v1399 = vrot.slane %v996, 7
      %v1400 = vrot.slane %v997, 7
      %v1401 = vrot.slane %v998, 7
      %v1402 = vrot.slane %v999, 7
      %v1403 = vrot.slane %v1000, 7
      %v1404 = vrot.slane %v1001, 7
      %v1405 = vrot.slane %v1002, 7
      %v1406 = vrot.slane %v1003, 7
      %v1407 = vrot.slane %v1004, 7
      %v1408 = vrot.slane %v1005, 7
      %v1409 = vrot.slane %v1006, 7
      %v1410 = vrot.slane %v1007, 7
      %vm1411 = vcmp.lt.s32.totalorder %v1009, 1
      %v1412 = vsel %vm1411, %v1409, %v1410
      %v1413 = vsel %vm1411, %v1408, %v1409
      %v1414 = vsel %vm1411, %v1407, %v1408
      %v1415 = vsel %vm1411, %v1406, %v1407
      %v1416 = vsel %vm1411, %v1405, %v1406
      %v1417 = vsel %vm1411, %v1404, %v1405
      %v1418 = vsel %vm1411, %v1403, %v1404
      %v1419 = vsel %vm1411, %v1402, %v1403
      %v1420 = vsel %vm1411, %v1401, %v1402
      %v1421 = vsel %vm1411, %v1400, %v1401
      %v1422 = vsel %vm1411, %v1399, %v1400
      %v1423 = vsel %vm1411, %v1398, %v1399
      %v1424 = vsel %vm1411, %v1397, %v1398
      %v1425 = vsel %vm1411, %v1396, %v1397
      %v1426 = vsel %vm1411, %v1395, %v1396
      %v1427 = vsel %vm1411, %v1394, %v1395
      %v1428 = vsel %vm1411, %v1393, %v1394
      %v1429 = vsel %vm1411, %v1392, %v1393
      %v1430 = vsel %vm1411, %v1391, %v1392
      %v1431 = vsel %vm1411, %v1410, %v1391
      %v1432 = vmul.f32 %v1431, %v1309
      %v1433 = vmul.f32 %v1430, %v1310
      %v1434 = vmul.f32 %v1429, %v1311
      %v1435 = vmul.f32 %v1428, %v1312
      %v1436 = vmul.f32 %v1427, %v1313
      %v1437 = vmul.f32 %v1426, %v1314
      %v1438 = vmul.f32 %v1425, %v1315
      %v1439 = vmul.f32 %v1424, %v1316
      %v1440 = vmul.f32 %v1423, %v1317
      %v1441 = vmul.f32 %v1422, %v1318
      %v1442 = vmul.f32 %v1421, %v1319
      %v1443 = vmul.f32 %v1420, %v1320
      %v1444 = vmul.f32 %v1419, %v1321
      %v1445 = vmul.f32 %v1418, %v1322
      %v1446 = vmul.f32 %v1417, %v1323
      %v1447 = vmul.f32 %v1416, %v1324
      %v1448 = vmul.f32 %v1415, %v1325
      %v1449 = vmul.f32 %v1414, %v1326
      %v1450 = vmul.f32 %v1413, %v1327
      %v1451 = vmul.f32 %v1412, %v1328
      %v1452 = vlaneseq
      %v1453 = vshrl.u32 %v1452, 7
      %v1454 = vsub.s32 0, %v1453
      %v1455 = vrot.slane %v1389, %v1454
      %v1456 = vmul.f32 %v1432, %v1455
      %v1457 = vmul.f32 %v1433, %v1455
      %v1458 = vmul.f32 %v1434, %v1455
      %v1459 = vmul.f32 %v1435, %v1455
      %v1460 = vmul.f32 %v1436, %v1455
      %v1461 = vmul.f32 %v1437, %v1455
      %v1462 = vmul.f32 %v1438, %v1455
      %v1463 = vmul.f32 %v1439, %v1455
      %v1464 = vmul.f32 %v1440, %v1455
      %v1465 = vmul.f32 %v1441, %v1455
      %v1466 = vmul.f32 %v1442, %v1455
      %v1467 = vmul.f32 %v1443, %v1455
      %v1468 = vmul.f32 %v1444, %v1455
      %v1469 = vmul.f32 %v1445, %v1455
      %v1470 = vmul.f32 %v1446, %v1455
      %v1471 = vmul.f32 %v1447, %v1455
      %v1472 = vadd.f32 %v1456, 0.0
      %v1473 = vadd.f32 %v1457, 0.0
      %v1474 = vadd.f32 %v1458, 0.0
      %v1475 = vadd.f32 %v1459, 0.0
      %v1476 = vadd.f32 %v1460, 0.0
      %v1477 = vadd.f32 %v1461, 0.0
      %v1478 = vadd.f32 %v1462, 0.0
      %v1479 = vadd.f32 %v1463, 0.0
      %v1480 = vadd.f32 %v1464, 0.0
      %v1481 = vadd.f32 %v1465, 0.0
      %v1482 = vadd.f32 %v1466, 0.0
      %v1483 = vadd.f32 %v1467, 0.0
      %v1484 = vadd.f32 %v1468, 0.0
      %v1485 = vadd.f32 %v1469, 0.0
      %v1486 = vadd.f32 %v1470, 0.0
      %v1487 = vadd.f32 %v1471, 0.0
      %v1488 = vlaneseq
      %v1489 = vshrl.u32 %v1488, 7
      %v1490 = vsub.s32 3, %v1489
      %v1491 = vrot.slane %v1389, %v1490
      %v1492 = vmul.f32 %v1434, %v1491
      %v1493 = vmul.f32 %v1435, %v1491
      %v1494 = vmul.f32 %v1436, %v1491
      %v1495 = vmul.f32 %v1437, %v1491
      %v1496 = vmul.f32 %v1438, %v1491
      %v1497 = vmul.f32 %v1439, %v1491
      %v1498 = vmul.f32 %v1440, %v1491
      %v1499 = vmul.f32 %v1441, %v1491
      %v1500 = vmul.f32 %v1442, %v1491
      %v1501 = vmul.f32 %v1443, %v1491
      %v1502 = vmul.f32 %v1444, %v1491
      %v1503 = vmul.f32 %v1445, %v1491
      %v1504 = vmul.f32 %v1446, %v1491
      %v1505 = vmul.f32 %v1447, %v1491
      %v1506 = vmul.f32 %v1448, %v1491
      %v1507 = vmul.f32 %v1449, %v1491
      %v1508 = vadd.f32 %v1472, %v1492
      %v1509 = vadd.f32 %v1473, %v1493
      %v1510 = vadd.f32 %v1474, %v1494
      %v1511 = vadd.f32 %v1475, %v1495
      %v1512 = vadd.f32 %v1476, %v1496
      %v1513 = vadd.f32 %v1477, %v1497
      %v1514 = vadd.f32 %v1478, %v1498
      %v1515 = vadd.f32 %v1479, %v1499
      %v1516 = vadd.f32 %v1480, %v1500
      %v1517 = vadd.f32 %v1481, %v1501
      %v1518 = vadd.f32 %v1482, %v1502
      %v1519 = vadd.f32 %v1483, %v1503
      %v1520 = vadd.f32 %v1484, %v1504
      %v1521 = vadd.f32 %v1485, %v1505
      %v1522 = vadd.f32 %v1486, %v1506
      %v1523 = vadd.f32 %v1487, %v1507
      %v1524 = vlaneseq
      %v1525 = vshrl.u32 %v1524, 7
      %v1526 = vsub.s32 6, %v1525
      %v1527 = vrot.slane %v1389, %v1526
      %v1528 = vmul.f32 %v1436, %v1527
      %v1529 = vmul.f32 %v1437, %v1527
      %v1530 = vmul.f32 %v1438, %v1527
      %v1531 = vmul.f32 %v1439, %v1527
      %v1532 = vmul.f32 %v1440, %v1527
      %v1533 = vmul.f32 %v1441, %v1527
      %v1534 = vmul.f32 %v1442, %v1527
      %v1535 = vmul.f32 %v1443, %v1527
      %v1536 = vmul.f32 %v1444, %v1527
      %v1537 = vmul.f32 %v1445, %v1527
      %v1538 = vmul.f32 %v1446, %v1527
      %v1539 = vmul.f32 %v1447, %v1527
      %v1540 = vmul.f32 %v1448, %v1527
      %v1541 = vmul.f32 %v1449, %v1527
      %v1542 = vmul.f32 %v1450, %v1527
      %v1543 = vmul.f32 %v1451, %v1527
      %v1544 = vadd.f32 %v1508, %v1528
      %v1545 = vadd.f32 %v1509, %v1529
      %v1546 = vadd.f32 %v1510, %v1530
      %v1547 = vadd.f32 %v1511, %v1531
      %v1548 = vadd.f32 %v1512, %v1532
      %v1549 = vadd.f32 %v1513, %v1533
      %v1550 = vadd.f32 %v1514, %v1534
      %v1551 = vadd.f32 %v1515, %v1535
      %v1552 = vadd.f32 %v1516, %v1536
      %v1553 = vadd.f32 %v1517, %v1537
      %v1554 = vadd.f32 %v1518, %v1538
      %v1555 = vadd.f32 %v1519, %v1539
      %v1556 = vadd.f32 %v1520, %v1540
      %v1557 = vadd.f32 %v1521, %v1541
      %v1558 = vadd.f32 %v1522, %v1542
      %v1559 = vadd.f32 %v1523, %v1543
      %v1560 = vlaneseq
      %v1561 = vshrl.u32 %v1560, 7
      %v1562 = vsub.s32 1, %v1561
      %v1563 = vrot.slane %v1389, %v1562
      %v1564 = vmul.f32 %v988, %v1563
      %v1565 = vmul.f32 %v989, %v1563
      %v1566 = vmul.f32 %v990, %v1563
      %v1567 = vmul.f32 %v991, %v1563
      %v1568 = vmul.f32 %v992, %v1563
      %v1569 = vmul.f32 %v993, %v1563
      %v1570 = vmul.f32 %v994, %v1563
      %v1571 = vmul.f32 %v995, %v1563
      %v1572 = vmul.f32 %v996, %v1563
      %v1573 = vmul.f32 %v997, %v1563
      %v1574 = vmul.f32 %v998, %v1563
      %v1575 = vmul.f32 %v999, %v1563
      %v1576 = vmul.f32 %v1000, %v1563
      %v1577 = vmul.f32 %v1001, %v1563
      %v1578 = vmul.f32 %v1002, %v1563
      %v1579 = vmul.f32 %v1003, %v1563
      %v1580 = vadd.f32 %v1544, %v1564
      %v1581 = vadd.f32 %v1545, %v1565
      %v1582 = vadd.f32 %v1546, %v1566
      %v1583 = vadd.f32 %v1547, %v1567
      %v1584 = vadd.f32 %v1548, %v1568
      %v1585 = vadd.f32 %v1549, %v1569
      %v1586 = vadd.f32 %v1550, %v1570
      %v1587 = vadd.f32 %v1551, %v1571
      %v1588 = vadd.f32 %v1552, %v1572
      %v1589 = vadd.f32 %v1553, %v1573
      %v1590 = vadd.f32 %v1554, %v1574
      %v1591 = vadd.f32 %v1555, %v1575
      %v1592 = vadd.f32 %v1556, %v1576
      %v1593 = vadd.f32 %v1557, %v1577
      %v1594 = vadd.f32 %v1558, %v1578
      %v1595 = vadd.f32 %v1559, %v1579
      %v1596 = vlaneseq
      %v1597 = vshrl.u32 %v1596, 7
      %v1598 = vsub.s32 4, %v1597
      %v1599 = vrot.slane %v1389, %v1598
      %v1600 = vmul.f32 %v990, %v1599
      %v1601 = vmul.f32 %v991, %v1599
      %v1602 = vmul.f32 %v992, %v1599
      %v1603 = vmul.f32 %v993, %v1599
      %v1604 = vmul.f32 %v994, %v1599
      %v1605 = vmul.f32 %v995, %v1599
      %v1606 = vmul.f32 %v996, %v1599
      %v1607 = vmul.f32 %v997, %v1599
      %v1608 = vmul.f32 %v998, %v1599
      %v1609 = vmul.f32 %v999, %v1599
      %v1610 = vmul.f32 %v1000, %v1599
      %v1611 = vmul.f32 %v1001, %v1599
      %v1612 = vmul.f32 %v1002, %v1599
      %v1613 = vmul.f32 %v1003, %v1599
      %v1614 = vmul.f32 %v1004, %v1599
      %v1615 = vmul.f32 %v1005, %v1599
      %v1616 = vadd.f32 %v1580, %v1600
      %v1617 = vadd.f32 %v1581, %v1601
      %v1618 = vadd.f32 %v1582, %v1602
      %v1619 = vadd.f32 %v1583, %v1603
      %v1620 = vadd.f32 %v1584, %v1604
      %v1621 = vadd.f32 %v1585, %v1605
      %v1622 = vadd.f32 %v1586, %v1606
      %v1623 = vadd.f32 %v1587, %v1607
      %v1624 = vadd.f32 %v1588, %v1608
      %v1625 = vadd.f32 %v1589, %v1609
      %v1626 = vadd.f32 %v1590, %v1610
      %v1627 = vadd.f32 %v1591, %v1611
      %v1628 = vadd.f32 %v1592, %v1612
      %v1629 = vadd.f32 %v1593, %v1613
      %v1630 = vadd.f32 %v1594, %v1614
      %v1631 = vadd.f32 %v1595, %v1615
      %v1632 = vlaneseq
      %v1633 = vshrl.u32 %v1632, 7
      %v1634 = vsub.s32 7, %v1633
      %v1635 = vrot.slane %v1389, %v1634
      %v1636 = vmul.f32 %v992, %v1635
      %v1637 = vmul.f32 %v993, %v1635
      %v1638 = vmul.f32 %v994, %v1635
      %v1639 = vmul.f32 %v995, %v1635
      %v1640 = vmul.f32 %v996, %v1635
      %v1641 = vmul.f32 %v997, %v1635
      %v1642 = vmul.f32 %v998, %v1635
      %v1643 = vmul.f32 %v999, %v1635
      %v1644 = vmul.f32 %v1000, %v1635
      %v1645 = vmul.f32 %v1001, %v1635
      %v1646 = vmul.f32 %v1002, %v1635
      %v1647 = vmul.f32 %v1003, %v1635
      %v1648 = vmul.f32 %v1004, %v1635
      %v1649 = vmul.f32 %v1005, %v1635
      %v1650 = vmul.f32 %v1006, %v1635
      %v1651 = vmul.f32 %v1007, %v1635
      %v1652 = vadd.f32 %v1616, %v1636
      %v1653 = vadd.f32 %v1617, %v1637
      %v1654 = vadd.f32 %v1618, %v1638
      %v1655 = vadd.f32 %v1619, %v1639
      %v1656 = vadd.f32 %v1620, %v1640
      %v1657 = vadd.f32 %v1621, %v1641
      %v1658 = vadd.f32 %v1622, %v1642
      %v1659 = vadd.f32 %v1623, %v1643
      %v1660 = vadd.f32 %v1624, %v1644
      %v1661 = vadd.f32 %v1625, %v1645
      %v1662 = vadd.f32 %v1626, %v1646
      %v1663 = vadd.f32 %v1627, %v1647
      %v1664 = vadd.f32 %v1628, %v1648
      %v1665 = vadd.f32 %v1629, %v1649
      %v1666 = vadd.f32 %v1630, %v1650
      %v1667 = vadd.f32 %v1631, %v1651
      %v1668 = vrot.slane %v988, 1
      %v1669 = vrot.slane %v989, 1
      %v1670 = vrot.slane %v990, 1
      %v1671 = vrot.slane %v991, 1
      %v1672 = vrot.slane %v992, 1
      %v1673 = vrot.slane %v993, 1
      %v1674 = vrot.slane %v994, 1
      %v1675 = vrot.slane %v995, 1
      %v1676 = vrot.slane %v996, 1
      %v1677 = vrot.slane %v997, 1
      %v1678 = vrot.slane %v998, 1
      %v1679 = vrot.slane %v999, 1
      %v1680 = vrot.slane %v1000, 1
      %v1681 = vrot.slane %v1001, 1
      %v1682 = vrot.slane %v1002, 1
      %v1683 = vrot.slane %v1003, 1
      %v1684 = vrot.slane %v1004, 1
      %v1685 = vrot.slane %v1005, 1
      %v1686 = vrot.slane %v1006, 1
      %v1687 = vrot.slane %v1007, 1
      %vm1688 = vcmp.lt.s32.totalorder %v1009, 7
      %v1689 = vsel %vm1688, %v1686, %v1687
      %v1690 = vsel %vm1688, %v1685, %v1686
      %v1691 = vsel %vm1688, %v1684, %v1685
      %v1692 = vsel %vm1688, %v1683, %v1684
      %v1693 = vsel %vm1688, %v1682, %v1683
      %v1694 = vsel %vm1688, %v1681, %v1682
      %v1695 = vsel %vm1688, %v1680, %v1681
      %v1696 = vsel %vm1688, %v1679, %v1680
      %v1697 = vsel %vm1688, %v1678, %v1679
      %v1698 = vsel %vm1688, %v1677, %v1678
      %v1699 = vsel %vm1688, %v1676, %v1677
      %v1700 = vsel %vm1688, %v1675, %v1676
      %v1701 = vsel %vm1688, %v1674, %v1675
      %v1702 = vsel %vm1688, %v1673, %v1674
      %v1703 = vsel %vm1688, %v1672, %v1673
      %v1704 = vsel %vm1688, %v1671, %v1672
      %v1705 = vsel %vm1688, %v1670, %v1671
      %v1706 = vsel %vm1688, %v1669, %v1670
      %v1707 = vsel %vm1688, %v1668, %v1669
      %v1708 = vsel %vm1688, %v1687, %v1668
      %v1709 = vmul.f32 %v1707, %v1369
      %v1710 = vmul.f32 %v1706, %v1370
      %v1711 = vmul.f32 %v1705, %v1371
      %v1712 = vmul.f32 %v1704, %v1372
      %v1713 = vmul.f32 %v1703, %v1373
      %v1714 = vmul.f32 %v1702, %v1374
      %v1715 = vmul.f32 %v1701, %v1375
      %v1716 = vmul.f32 %v1700, %v1376
      %v1717 = vmul.f32 %v1699, %v1377
      %v1718 = vmul.f32 %v1698, %v1378
      %v1719 = vmul.f32 %v1697, %v1379
      %v1720 = vmul.f32 %v1696, %v1380
      %v1721 = vmul.f32 %v1695, %v1381
      %v1722 = vmul.f32 %v1694, %v1382
      %v1723 = vmul.f32 %v1693, %v1383
      %v1724 = vmul.f32 %v1692, %v1384
      %v1725 = vmul.f32 %v1691, %v1385
      %v1726 = vmul.f32 %v1690, %v1386
      %v1727 = vmul.f32 %v1689, %v1387
      %v1728 = vmul.f32 %v1708, %v1388
      %v1729 = vlaneseq
      %v1730 = vshrl.u32 %v1729, 7
      %v1731 = vsub.s32 2, %v1730
      %v1732 = vrot.slane %v1389, %v1731
      %v1733 = vmul.f32 %v1709, %v1732
      %v1734 = vmul.f32 %v1710, %v1732
      %v1735 = vmul.f32 %v1711, %v1732
      %v1736 = vmul.f32 %v1712, %v1732
      %v1737 = vmul.f32 %v1713, %v1732
      %v1738 = vmul.f32 %v1714, %v1732
      %v1739 = vmul.f32 %v1715, %v1732
      %v1740 = vmul.f32 %v1716, %v1732
      %v1741 = vmul.f32 %v1717, %v1732
      %v1742 = vmul.f32 %v1718, %v1732
      %v1743 = vmul.f32 %v1719, %v1732
      %v1744 = vmul.f32 %v1720, %v1732
      %v1745 = vmul.f32 %v1721, %v1732
      %v1746 = vmul.f32 %v1722, %v1732
      %v1747 = vmul.f32 %v1723, %v1732
      %v1748 = vmul.f32 %v1724, %v1732
      %v1749 = vadd.f32 %v1652, %v1733
      %v1750 = vadd.f32 %v1653, %v1734
      %v1751 = vadd.f32 %v1654, %v1735
      %v1752 = vadd.f32 %v1655, %v1736
      %v1753 = vadd.f32 %v1656, %v1737
      %v1754 = vadd.f32 %v1657, %v1738
      %v1755 = vadd.f32 %v1658, %v1739
      %v1756 = vadd.f32 %v1659, %v1740
      %v1757 = vadd.f32 %v1660, %v1741
      %v1758 = vadd.f32 %v1661, %v1742
      %v1759 = vadd.f32 %v1662, %v1743
      %v1760 = vadd.f32 %v1663, %v1744
      %v1761 = vadd.f32 %v1664, %v1745
      %v1762 = vadd.f32 %v1665, %v1746
      %v1763 = vadd.f32 %v1666, %v1747
      %v1764 = vadd.f32 %v1667, %v1748
      %v1765 = vlaneseq
      %v1766 = vshrl.u32 %v1765, 7
      %v1767 = vsub.s32 5, %v1766
      %v1768 = vrot.slane %v1389, %v1767
      %v1769 = vmul.f32 %v1711, %v1768
      %v1770 = vmul.f32 %v1712, %v1768
      %v1771 = vmul.f32 %v1713, %v1768
      %v1772 = vmul.f32 %v1714, %v1768
      %v1773 = vmul.f32 %v1715, %v1768
      %v1774 = vmul.f32 %v1716, %v1768
      %v1775 = vmul.f32 %v1717, %v1768
      %v1776 = vmul.f32 %v1718, %v1768
      %v1777 = vmul.f32 %v1719, %v1768
      %v1778 = vmul.f32 %v1720, %v1768
      %v1779 = vmul.f32 %v1721, %v1768
      %v1780 = vmul.f32 %v1722, %v1768
      %v1781 = vmul.f32 %v1723, %v1768
      %v1782 = vmul.f32 %v1724, %v1768
      %v1783 = vmul.f32 %v1725, %v1768
      %v1784 = vmul.f32 %v1726, %v1768
      %v1785 = vadd.f32 %v1749, %v1769
      %v1786 = vadd.f32 %v1750, %v1770
      %v1787 = vadd.f32 %v1751, %v1771
      %v1788 = vadd.f32 %v1752, %v1772
      %v1789 = vadd.f32 %v1753, %v1773
      %v1790 = vadd.f32 %v1754, %v1774
      %v1791 = vadd.f32 %v1755, %v1775
      %v1792 = vadd.f32 %v1756, %v1776
      %v1793 = vadd.f32 %v1757, %v1777
      %v1794 = vadd.f32 %v1758, %v1778
      %v1795 = vadd.f32 %v1759, %v1779
      %v1796 = vadd.f32 %v1760, %v1780
      %v1797 = vadd.f32 %v1761, %v1781
      %v1798 = vadd.f32 %v1762, %v1782
      %v1799 = vadd.f32 %v1763, %v1783
      %v1800 = vadd.f32 %v1764, %v1784
      %v1801 = vlaneseq
      %v1802 = vshrl.u32 %v1801, 7
      %v1803 = vsub.s32 0, %v1802
      %v1804 = vrot.slane %v1390, %v1803
      %v1805 = vmul.f32 %v1713, %v1804
      %v1806 = vmul.f32 %v1714, %v1804
      %v1807 = vmul.f32 %v1715, %v1804
      %v1808 = vmul.f32 %v1716, %v1804
      %v1809 = vmul.f32 %v1717, %v1804
      %v1810 = vmul.f32 %v1718, %v1804
      %v1811 = vmul.f32 %v1719, %v1804
      %v1812 = vmul.f32 %v1720, %v1804
      %v1813 = vmul.f32 %v1721, %v1804
      %v1814 = vmul.f32 %v1722, %v1804
      %v1815 = vmul.f32 %v1723, %v1804
      %v1816 = vmul.f32 %v1724, %v1804
      %v1817 = vmul.f32 %v1725, %v1804
      %v1818 = vmul.f32 %v1726, %v1804
      %v1819 = vmul.f32 %v1727, %v1804
      %v1820 = vmul.f32 %v1728, %v1804
      %v1821 = vadd.f32 %v1785, %v1805
      %v1822 = vadd.f32 %v1786, %v1806
      %v1823 = vadd.f32 %v1787, %v1807
      %v1824 = vadd.f32 %v1788, %v1808
      %v1825 = vadd.f32 %v1789, %v1809
      %v1826 = vadd.f32 %v1790, %v1810
      %v1827 = vadd.f32 %v1791, %v1811
      %v1828 = vadd.f32 %v1792, %v1812
      %v1829 = vadd.f32 %v1793, %v1813
      %v1830 = vadd.f32 %v1794, %v1814
      %v1831 = vadd.f32 %v1795, %v1815
      %v1832 = vadd.f32 %v1796, %v1816
      %v1833 = vadd.f32 %v1797, %v1817
      %v1834 = vadd.f32 %v1798, %v1818
      %v1835 = vadd.f32 %v1799, %v1819
      %v1836 = vadd.f32 %v1800, %v1820
      %v1837 = vld [vmem:[%s6] sm:$0x1]
      %v1839 = vlaneseq
      %v1840 = vshrl.u32 %v1839, 7
      %v1841 = vsub.s32 0, %v1840
      %v1842 = vrot.slane %v1837, %v1841
      %v1844 = vadd.f32 %v1821, %v1842
      %v1845 = vadd.f32 %v1822, %v1842
      %v1846 = vadd.f32 %v1823, %v1842
      %v1847 = vadd.f32 %v1824, %v1842
      %v1848 = vadd.f32 %v1825, %v1842
      %v1849 = vadd.f32 %v1826, %v1842
      %v1850 = vadd.f32 %v1827, %v1842
      %v1851 = vadd.f32 %v1828, %v1842
      %v1852 = vadd.f32 %v1829, %v1842
      %v1853 = vadd.f32 %v1830, %v1842
      %v1854 = vadd.f32 %v1831, %v1842
      %v1855 = vadd.f32 %v1832, %v1842
      %v1856 = vadd.f32 %v1833, %v1842
      %v1857 = vadd.f32 %v1834, %v1842
      %v1858 = vadd.f32 %v1835, %v1842
      %v1859 = vadd.f32 %v1836, %v1842
      %v1860 = vxor.u32 %v1844, 2147483648
      %v1861 = vxor.u32 %v1845, 2147483648
      %v1862 = vxor.u32 %v1846, 2147483648
      %v1863 = vxor.u32 %v1847, 2147483648
      %v1864 = vxor.u32 %v1848, 2147483648
      %v1865 = vxor.u32 %v1849, 2147483648
      %v1866 = vxor.u32 %v1850, 2147483648
      %v1867 = vxor.u32 %v1851, 2147483648
      %v1868 = vxor.u32 %v1852, 2147483648
      %v1869 = vxor.u32 %v1853, 2147483648
      %v1870 = vxor.u32 %v1854, 2147483648
      %v1871 = vxor.u32 %v1855, 2147483648
      %v1872 = vxor.u32 %v1856, 2147483648
      %v1873 = vxor.u32 %v1857, 2147483648
      %v1874 = vxor.u32 %v1858, 2147483648
      %v1875 = vxor.u32 %v1859, 2147483648
      %v1876 = vmul.f32 %v1860, 1.442695
      %v1877 = vpow.pop %v1876
      %v1878 = vmul.f32 %v1861, 1.442695
      %v1879 = vpow.pop %v1878
      %v1880 = vmul.f32 %v1862, 1.442695
      %v1881 = vpow.pop %v1880
      %v1882 = vmul.f32 %v1863, 1.442695
      %v1883 = vpow.pop %v1882
      %v1884 = vmul.f32 %v1864, 1.442695
      %v1885 = vpow.pop %v1884
      %v1886 = vmul.f32 %v1865, 1.442695
      %v1887 = vpow.pop %v1886
      %v1888 = vmul.f32 %v1866, 1.442695
      %v1889 = vpow.pop %v1888
      %v1890 = vmul.f32 %v1867, 1.442695
      %v1891 = vpow.pop %v1890
      %v1892 = vmul.f32 %v1868, 1.442695
      %v1893 = vpow.pop %v1892
      %v1894 = vmul.f32 %v1869, 1.442695
      %v1895 = vpow.pop %v1894
      %v1896 = vmul.f32 %v1870, 1.442695
      %v1897 = vpow.pop %v1896
      %v1898 = vmul.f32 %v1871, 1.442695
      %v1899 = vpow.pop %v1898
      %v1900 = vmul.f32 %v1872, 1.442695
      %v1901 = vpow.pop %v1900
      %v1902 = vmul.f32 %v1873, 1.442695
      %v1903 = vpow.pop %v1902
      %v1904 = vmul.f32 %v1874, 1.442695
      %v1905 = vpow.pop %v1904
      %v1906 = vmul.f32 %v1875, 1.442695
      %v1907 = vpow.pop %v1906
      %v1908 = vadd.f32 %v1877, 1.0
      %v1909 = vadd.f32 %v1879, 1.0
      %v1910 = vadd.f32 %v1881, 1.0
      %v1911 = vadd.f32 %v1883, 1.0
      %v1912 = vadd.f32 %v1885, 1.0
      %v1913 = vadd.f32 %v1887, 1.0
      %v1914 = vadd.f32 %v1889, 1.0
      %v1915 = vadd.f32 %v1891, 1.0
      %v1916 = vadd.f32 %v1893, 1.0
      %v1917 = vadd.f32 %v1895, 1.0
      %v1918 = vadd.f32 %v1897, 1.0
      %v1919 = vadd.f32 %v1899, 1.0
      %v1920 = vadd.f32 %v1901, 1.0
      %v1921 = vadd.f32 %v1903, 1.0
      %v1922 = vadd.f32 %v1905, 1.0
      %v1923 = vadd.f32 %v1907, 1.0
      %v1924 = vrcp.pop %v1908
      %v1925 = vmul.f32 1.0, %v1924
      %v1926 = vrcp.pop %v1909
      %v1927 = vmul.f32 1.0, %v1926
      %v1928 = vrcp.pop %v1910
      %v1929 = vmul.f32 1.0, %v1928
      %v1930 = vrcp.pop %v1911
      %v1931 = vmul.f32 1.0, %v1930
      %v1932 = vrcp.pop %v1912
      %v1933 = vmul.f32 1.0, %v1932
      %v1934 = vrcp.pop %v1913
      %v1935 = vmul.f32 1.0, %v1934
      %v1936 = vrcp.pop %v1914
      %v1937 = vmul.f32 1.0, %v1936
      %v1938 = vrcp.pop %v1915
      %v1939 = vmul.f32 1.0, %v1938
      %v1940 = vrcp.pop %v1916
      %v1941 = vmul.f32 1.0, %v1940
      %v1942 = vrcp.pop %v1917
      %v1943 = vmul.f32 1.0, %v1942
      %v1944 = vrcp.pop %v1918
      %v1945 = vmul.f32 1.0, %v1944
      %v1946 = vrcp.pop %v1919
      %v1947 = vmul.f32 1.0, %v1946
      %v1948 = vrcp.pop %v1920
      %v1949 = vmul.f32 1.0, %v1948
      %v1950 = vrcp.pop %v1921
      %v1951 = vmul.f32 1.0, %v1950
      %v1952 = vrcp.pop %v1922
      %v1953 = vmul.f32 1.0, %v1952
      %v1954 = vrcp.pop %v1923
      %v1955 = vmul.f32 1.0, %v1954
      %v1956 = vmul.f32 %v1844, %v1925
      %v1957 = vmul.f32 %v1845, %v1927
      %v1958 = vmul.f32 %v1846, %v1929
      %v1959 = vmul.f32 %v1847, %v1931
      %v1960 = vmul.f32 %v1848, %v1933
      %v1961 = vmul.f32 %v1849, %v1935
      %v1962 = vmul.f32 %v1850, %v1937
      %v1963 = vmul.f32 %v1851, %v1939
      %v1964 = vmul.f32 %v1852, %v1941
      %v1965 = vmul.f32 %v1853, %v1943
      %v1966 = vmul.f32 %v1854, %v1945
      %v1967 = vmul.f32 %v1855, %v1947
      %v1968 = vmul.f32 %v1856, %v1949
      %v1969 = vmul.f32 %v1857, %v1951
      %v1970 = vmul.f32 %v1858, %v1953
      %v1971 = vmul.f32 %v1859, %v1955
      %1988 = vrot.lane.b32.xlu0 %v1956, 112
      %v1989 = vpop.permute.xlu0 %1988
      %1990 = vrot.lane.b32.xlu0 %v1957, 112
      %v1991 = vpop.permute.xlu0 %1990
      %1992 = vrot.lane.b32.xlu0 %v1958, 112
      %v1993 = vpop.permute.xlu0 %1992
      %1994 = vrot.lane.b32.xlu0 %v1959, 112
      %v1995 = vpop.permute.xlu0 %1994
      %1996 = vrot.lane.b32.xlu0 %v1960, 112
      %v1997 = vpop.permute.xlu0 %1996
      %1998 = vrot.lane.b32.xlu0 %v1961, 112
      %v1999 = vpop.permute.xlu0 %1998
      %2000 = vrot.lane.b32.xlu0 %v1962, 112
      %v2001 = vpop.permute.xlu0 %2000
      %2002 = vrot.lane.b32.xlu0 %v1963, 112
      %v2003 = vpop.permute.xlu0 %2002
      %2004 = vrot.lane.b32.xlu0 %v1964, 112
      %v2005 = vpop.permute.xlu0 %2004
      %2006 = vrot.lane.b32.xlu0 %v1965, 112
      %v2007 = vpop.permute.xlu0 %2006
      %2008 = vrot.lane.b32.xlu0 %v1966, 112
      %v2009 = vpop.permute.xlu0 %2008
      %2010 = vrot.lane.b32.xlu0 %v1967, 112
      %v2011 = vpop.permute.xlu0 %2010
      %2012 = vrot.lane.b32.xlu0 %v1968, 112
      %v2013 = vpop.permute.xlu0 %2012
      %2014 = vrot.lane.b32.xlu0 %v1969, 112
      %v2015 = vpop.permute.xlu0 %2014
      %2016 = vrot.lane.b32.xlu0 %v1970, 112
      %v2017 = vpop.permute.xlu0 %2016
      %2018 = vrot.lane.b32.xlu0 %v1971, 112
      %v2019 = vpop.permute.xlu0 %2018
      %v2036 = vmul.f32 %v1844, %v1989
      %v2037 = vmul.f32 %v1845, %v1991
      %v2038 = vmul.f32 %v1846, %v1993
      %v2039 = vmul.f32 %v1847, %v1995
      %v2040 = vmul.f32 %v1848, %v1997
      %v2041 = vmul.f32 %v1849, %v1999
      %v2042 = vmul.f32 %v1850, %v2001
      %v2043 = vmul.f32 %v1851, %v2003
      %v2044 = vmul.f32 %v1852, %v2005
      %v2045 = vmul.f32 %v1853, %v2007
      %v2046 = vmul.f32 %v1854, %v2009
      %v2047 = vmul.f32 %v1855, %v2011
      %v2048 = vmul.f32 %v1856, %v2013
      %v2049 = vmul.f32 %v1857, %v2015
      %v2050 = vmul.f32 %v1858, %v2017
      %v2051 = vmul.f32 %v1859, %v2019
      %v2052 = vpack.c.bf16 %v2037, %v2036
      %v2053 = vpack.c.bf16 %v2039, %v2038
      %v2054 = vpack.c.bf16 %v2041, %v2040
      %v2055 = vpack.c.bf16 %v2043, %v2042
      %v2056 = vpack.c.bf16 %v2045, %v2044
      %v2057 = vpack.c.bf16 %v2047, %v2046
      %v2058 = vpack.c.bf16 %v2049, %v2048
      %v2059 = vpack.c.bf16 %v2051, %v2050
      %v2060 = vld [vmem:[%s7] sm:$0xf]
      %v2061 = vld [vmem:[%s7 + $0x4] sm:$0xf]
      %v2064 = vunpack.c.l.b16 %v2060
      %v2065 = vunpack.c.l.b16 %v2061
      %v2066 = vpack.c.b16 %v2065, %v2064
      %vm2068 = vcmask 130048
      %v2070 = vsel %vm2068, %v2052, 0
      %v2073 = vsel %vm2068, %v2053, 0
      %v2076 = vsel %vm2068, %v2054, 0
      %v2079 = vsel %vm2068, %v2055, 0
      %v2082 = vsel %vm2068, %v2056, 0
      %v2085 = vsel %vm2068, %v2057, 0
      %v2088 = vsel %vm2068, %v2058, 0
      %v2091 = vsel %vm2068, %v2059, 0
      %2093 = vmatprep.subr.bf16.mxu0 0
      %2094 = vmatpush1.bf16.msra.mxu0 0
      %2095 = vmatprep.subr.bf16.mxu0 0
      %2096 = vmatpush1.bf16.msra.mxu0 0
      %2097 = vmatprep.subr.bf16.mxu0 0
      %2098 = vmatpush1.bf16.msra.mxu0 0
      %2099 = vmatprep.subr.bf16.mxu0 0
      %2100 = vmatpush1.bf16.msra.mxu0 0
      %2101 = vmatprep.subr.bf16.mxu0 0
      %2102 = vmatpush1.bf16.msra.mxu0 0
      %2103 = vmatprep.subr.bf16.mxu0 0
      %2104 = vmatpush1.bf16.msra.mxu0 0
      %2105 = vmatprep.subr.bf16.mxu0 0
      %2106 = vmatpush1.bf16.msra.mxu0 0
      %2107 = vmatprep.subr.bf16.mxu0 0
      %2108 = vmatpush1.bf16.msra.mxu0 %v2066
      %2109 = vmatprep.subr.bf16.mxu0 0
      %2110 = vmatpush2.bf16.msra.mxu0 0
      %2111 = vmatprep.subr.bf16.mxu0 0
      %2112 = vmatpush2.bf16.msra.mxu0 0
      %2113 = vmatprep.subr.bf16.mxu0 0
      %2114 = vmatpush2.bf16.msra.mxu0 0
      %2115 = vmatprep.subr.bf16.mxu0 0
      %2116 = vmatpush2.bf16.msra.mxu0 0
      %2117 = vmatprep.subr.bf16.mxu0 0
      %2118 = vmatpush2.bf16.msra.mxu0 0
      %2119 = vmatprep.subr.bf16.mxu0 0
      %2120 = vmatpush2.bf16.msra.mxu0 0
      %2121 = vmatprep.subr.bf16.mxu0 0
      %2122 = vmatpush2.bf16.msra.mxu0 0
      %2123 = vmatprep.subr.bf16.mxu0 0
      %2124 = vmatpush2.bf16.msra.mxu0 0
      %2125 = vmatprep.mubr.bf16.mxu0 0
      %2126 = vmatmul.mubr.bf16.gmra.mxu0 %v2070
      %v2127 = vpop.f32.mrf.mxu0
      %v2128 = vadd.f32 0.0, %v2127
      %v2129 = vpop.f32.mrf.mxu0
      %v2130 = vpop.f32.mrf.mxu0
      %v2131 = vadd.f32 0.0, %v2130
      %v2132 = vpop.f32.mrf.mxu0
      %2133 = vmatprep.mubr.bf16.mxu0 0
      %2134 = vmatmul.mubr.bf16.gmra.mxu0 %v2073
      %v2135 = vpop.f32.mrf.mxu0
      %v2136 = vadd.f32 0.0, %v2135
      %v2137 = vpop.f32.mrf.mxu0
      %v2138 = vpop.f32.mrf.mxu0
      %v2139 = vadd.f32 0.0, %v2138
      %v2140 = vpop.f32.mrf.mxu0
      %2141 = vmatprep.mubr.bf16.mxu0 0
      %2142 = vmatmul.mubr.bf16.gmra.mxu0 %v2076
      %v2143 = vpop.f32.mrf.mxu0
      %v2144 = vadd.f32 0.0, %v2143
      %v2145 = vpop.f32.mrf.mxu0
      %v2146 = vpop.f32.mrf.mxu0
      %v2147 = vadd.f32 0.0, %v2146
      %v2148 = vpop.f32.mrf.mxu0
      %2149 = vmatprep.mubr.bf16.mxu0 0
      %2150 = vmatmul.mubr.bf16.gmra.mxu0 %v2079
      %v2151 = vpop.f32.mrf.mxu0
      %v2152 = vadd.f32 0.0, %v2151
      %v2153 = vpop.f32.mrf.mxu0
      %v2154 = vpop.f32.mrf.mxu0
      %v2155 = vadd.f32 0.0, %v2154
      %v2156 = vpop.f32.mrf.mxu0
      %2157 = vmatprep.mubr.bf16.mxu0 0
      %2158 = vmatmul.mubr.bf16.gmra.mxu0 %v2082
      %v2159 = vpop.f32.mrf.mxu0
      %v2160 = vadd.f32 0.0, %v2159
      %v2161 = vpop.f32.mrf.mxu0
      %v2162 = vpop.f32.mrf.mxu0
      %v2163 = vadd.f32 0.0, %v2162
      %v2164 = vpop.f32.mrf.mxu0
      %2165 = vmatprep.mubr.bf16.mxu0 0
      %2166 = vmatmul.mubr.bf16.gmra.mxu0 %v2085
      %v2167 = vpop.f32.mrf.mxu0
      %v2168 = vadd.f32 0.0, %v2167
      %v2169 = vpop.f32.mrf.mxu0
      %v2170 = vpop.f32.mrf.mxu0
      %v2171 = vadd.f32 0.0, %v2170
      %v2172 = vpop.f32.mrf.mxu0
      %2173 = vmatprep.mubr.bf16.mxu0 0
      %2174 = vmatmul.mubr.bf16.gmra.mxu0 %v2088
      %v2175 = vpop.f32.mrf.mxu0
      %v2176 = vadd.f32 0.0, %v2175
      %v2177 = vpop.f32.mrf.mxu0
      %v2178 = vpop.f32.mrf.mxu0
      %v2179 = vadd.f32 0.0, %v2178
      %v2180 = vpop.f32.mrf.mxu0
      %2181 = vmatprep.mubr.bf16.mxu0 0
      %2182 = vmatmul.mubr.bf16.gmra.mxu0 %v2091
      %v2183 = vpop.f32.mrf.mxu0
      %v2184 = vadd.f32 0.0, %v2183
      %v2185 = vpop.f32.mrf.mxu0
      %v2186 = vpop.f32.mrf.mxu0
      %v2187 = vadd.f32 0.0, %v2186
      %v2188 = vpop.f32.mrf.mxu0
      %2189 = vdwg.mxu0
      %v2190 = vmul.f32 %v2128, %v2128
      %v2191 = vmul.f32 %v2131, %v2131
      %v2192 = vmul.f32 %v2136, %v2136
      %v2193 = vmul.f32 %v2139, %v2139
      %v2194 = vmul.f32 %v2144, %v2144
      %v2195 = vmul.f32 %v2147, %v2147
      %v2196 = vmul.f32 %v2152, %v2152
      %v2197 = vmul.f32 %v2155, %v2155
      %v2198 = vmul.f32 %v2160, %v2160
      %v2199 = vmul.f32 %v2163, %v2163
      %v2200 = vmul.f32 %v2168, %v2168
      %v2201 = vmul.f32 %v2171, %v2171
      %v2202 = vmul.f32 %v2176, %v2176
      %v2203 = vmul.f32 %v2179, %v2179
      %v2204 = vmul.f32 %v2184, %v2184
      %v2205 = vmul.f32 %v2187, %v2187
      %v2206 = vsel %vm567, %v2190, 0.0
      %2207 = vadd.xlane.f32.xlu0 %v2206
      %v2208 = vpop.xlane.xlu0 %2207
      %v2209 = vsel %vm567, %v2191, 0.0
      %2210 = vadd.xlane.f32.xlu0 %v2209
      %v2211 = vpop.xlane.xlu0 %2210
      %v2212 = vsel %vm567, %v2192, 0.0
      %2213 = vadd.xlane.f32.xlu0 %v2212
      %v2214 = vpop.xlane.xlu0 %2213
      %v2215 = vsel %vm567, %v2193, 0.0
      %2216 = vadd.xlane.f32.xlu0 %v2215
      %v2217 = vpop.xlane.xlu0 %2216
      %v2218 = vsel %vm567, %v2194, 0.0
      %2219 = vadd.xlane.f32.xlu0 %v2218
      %v2220 = vpop.xlane.xlu0 %2219
      %v2221 = vsel %vm567, %v2195, 0.0
      %2222 = vadd.xlane.f32.xlu0 %v2221
      %v2223 = vpop.xlane.xlu0 %2222
      %v2224 = vsel %vm567, %v2196, 0.0
      %2225 = vadd.xlane.f32.xlu0 %v2224
      %v2226 = vpop.xlane.xlu0 %2225
      %v2227 = vsel %vm567, %v2197, 0.0
      %2228 = vadd.xlane.f32.xlu0 %v2227
      %v2229 = vpop.xlane.xlu0 %2228
      %v2230 = vsel %vm567, %v2198, 0.0
      %2231 = vadd.xlane.f32.xlu0 %v2230
      %v2232 = vpop.xlane.xlu0 %2231
      %v2233 = vsel %vm567, %v2199, 0.0
      %2234 = vadd.xlane.f32.xlu0 %v2233
      %v2235 = vpop.xlane.xlu0 %2234
      %v2236 = vsel %vm567, %v2200, 0.0
      %2237 = vadd.xlane.f32.xlu0 %v2236
      %v2238 = vpop.xlane.xlu0 %2237
      %v2239 = vsel %vm567, %v2201, 0.0
      %2240 = vadd.xlane.f32.xlu0 %v2239
      %v2241 = vpop.xlane.xlu0 %2240
      %v2242 = vsel %vm567, %v2202, 0.0
      %2243 = vadd.xlane.f32.xlu0 %v2242
      %v2244 = vpop.xlane.xlu0 %2243
      %v2245 = vsel %vm567, %v2203, 0.0
      %2246 = vadd.xlane.f32.xlu0 %v2245
      %v2247 = vpop.xlane.xlu0 %2246
      %v2248 = vsel %vm567, %v2204, 0.0
      %2249 = vadd.xlane.f32.xlu0 %v2248
      %v2250 = vpop.xlane.xlu0 %2249
      %v2251 = vsel %vm567, %v2205, 0.0
      %2252 = vadd.xlane.f32.xlu0 %v2251
      %v2253 = vpop.xlane.xlu0 %2252
      %v2254 = vrcp.pop 4.0
      %v2255 = vmul.f32 %v2208, %v2254
      %v2256 = vmul.f32 %v2211, %v2254
      %v2257 = vmul.f32 %v2214, %v2254
      %v2258 = vmul.f32 %v2217, %v2254
      %v2259 = vmul.f32 %v2220, %v2254
      %v2260 = vmul.f32 %v2223, %v2254
      %v2261 = vmul.f32 %v2226, %v2254
      %v2262 = vmul.f32 %v2229, %v2254
      %v2263 = vmul.f32 %v2232, %v2254
      %v2264 = vmul.f32 %v2235, %v2254
      %v2265 = vmul.f32 %v2238, %v2254
      %v2266 = vmul.f32 %v2241, %v2254
      %v2267 = vmul.f32 %v2244, %v2254
      %v2268 = vmul.f32 %v2247, %v2254
      %v2269 = vmul.f32 %v2250, %v2254
      %v2270 = vmul.f32 %v2253, %v2254
      %v2271 = vadd.f32 %v2255, 1e-05
      %v2272 = vadd.f32 %v2256, 1e-05
      %v2273 = vadd.f32 %v2257, 1e-05
      %v2274 = vadd.f32 %v2258, 1e-05
      %v2275 = vadd.f32 %v2259, 1e-05
      %v2276 = vadd.f32 %v2260, 1e-05
      %v2277 = vadd.f32 %v2261, 1e-05
      %v2278 = vadd.f32 %v2262, 1e-05
      %v2279 = vadd.f32 %v2263, 1e-05
      %v2280 = vadd.f32 %v2264, 1e-05
      %v2281 = vadd.f32 %v2265, 1e-05
      %v2282 = vadd.f32 %v2266, 1e-05
      %v2283 = vadd.f32 %v2267, 1e-05
      %v2284 = vadd.f32 %v2268, 1e-05
      %v2285 = vadd.f32 %v2269, 1e-05
      %v2286 = vadd.f32 %v2270, 1e-05
      %v2287 = vrsqrt.pop %v2271
      %v2288 = vrsqrt.pop %v2272
      %v2289 = vrsqrt.pop %v2273
      %v2290 = vrsqrt.pop %v2274
      %v2291 = vrsqrt.pop %v2275
      %v2292 = vrsqrt.pop %v2276
      %v2293 = vrsqrt.pop %v2277
      %v2294 = vrsqrt.pop %v2278
      %v2295 = vrsqrt.pop %v2279
      %v2296 = vrsqrt.pop %v2280
      %v2297 = vrsqrt.pop %v2281
      %v2298 = vrsqrt.pop %v2282
      %v2299 = vrsqrt.pop %v2283
      %v2300 = vrsqrt.pop %v2284
      %v2301 = vrsqrt.pop %v2285
      %v2302 = vrsqrt.pop %v2286
      %v2303 = vmul.f32 %v2128, %v2287
      %v2304 = vmul.f32 %v2131, %v2288
      %v2305 = vmul.f32 %v2136, %v2289
      %v2306 = vmul.f32 %v2139, %v2290
      %v2307 = vmul.f32 %v2144, %v2291
      %v2308 = vmul.f32 %v2147, %v2292
      %v2309 = vmul.f32 %v2152, %v2293
      %v2310 = vmul.f32 %v2155, %v2294
      %v2311 = vmul.f32 %v2160, %v2295
      %v2312 = vmul.f32 %v2163, %v2296
      %v2313 = vmul.f32 %v2168, %v2297
      %v2314 = vmul.f32 %v2171, %v2298
      %v2315 = vmul.f32 %v2176, %v2299
      %v2316 = vmul.f32 %v2179, %v2300
      %v2317 = vmul.f32 %v2184, %v2301
      %v2318 = vmul.f32 %v2187, %v2302
      %v2319 = vld [vmem:[%s8] sm:$0x1]
      %v2321 = vlaneseq
      %v2322 = vshrl.u32 %v2321, 7
      %v2323 = vsub.s32 0, %v2322
      %v2324 = vrot.slane %v2319, %v2323
      %v2326 = vmul.f32 %v2303, %v2324
      %v2327 = vmul.f32 %v2304, %v2324
      %v2328 = vmul.f32 %v2305, %v2324
      %v2329 = vmul.f32 %v2306, %v2324
      %v2330 = vmul.f32 %v2307, %v2324
      %v2331 = vmul.f32 %v2308, %v2324
      %v2332 = vmul.f32 %v2309, %v2324
      %v2333 = vmul.f32 %v2310, %v2324
      %v2334 = vmul.f32 %v2311, %v2324
      %v2335 = vmul.f32 %v2312, %v2324
      %v2336 = vmul.f32 %v2313, %v2324
      %v2337 = vmul.f32 %v2314, %v2324
      %v2338 = vmul.f32 %v2315, %v2324
      %v2339 = vmul.f32 %v2316, %v2324
      %v2340 = vmul.f32 %v2317, %v2324
      %v2341 = vmul.f32 %v2318, %v2324
      %v2342 = vld [vmem:[%s9] sm:$0x1]
      %v2344 = vlaneseq
      %v2345 = vshrl.u32 %v2344, 7
      %v2346 = vsub.s32 0, %v2345
      %v2347 = vrot.slane %v2342, %v2346
      %v2349 = vadd.f32 %v2326, %v2347
      %v2350 = vadd.f32 %v2327, %v2347
      %v2351 = vadd.f32 %v2328, %v2347
      %v2352 = vadd.f32 %v2329, %v2347
      %v2353 = vadd.f32 %v2330, %v2347
      %v2354 = vadd.f32 %v2331, %v2347
      %v2355 = vadd.f32 %v2332, %v2347
      %v2356 = vadd.f32 %v2333, %v2347
      %v2357 = vadd.f32 %v2334, %v2347
      %v2358 = vadd.f32 %v2335, %v2347
      %v2359 = vadd.f32 %v2336, %v2347
      %v2360 = vadd.f32 %v2337, %v2347
      %v2361 = vadd.f32 %v2338, %v2347
      %v2362 = vadd.f32 %v2339, %v2347
      %v2363 = vadd.f32 %v2340, %v2347
      %v2364 = vadd.f32 %v2341, %v2347
      %v2365 = vadd.f32 %v2349, %v529
      %v2366 = vadd.f32 %v2350, %v530
      %v2367 = vadd.f32 %v2351, %v531
      %v2368 = vadd.f32 %v2352, %v532
      %v2369 = vadd.f32 %v2353, %v533
      %v2370 = vadd.f32 %v2354, %v534
      %v2371 = vadd.f32 %v2355, %v535
      %v2372 = vadd.f32 %v2356, %v536
      %v2373 = vadd.f32 %v2357, %v537
      %v2374 = vadd.f32 %v2358, %v538
      %v2375 = vadd.f32 %v2359, %v539
      %v2376 = vadd.f32 %v2360, %v540
      %v2377 = vadd.f32 %v2361, %v541
      %v2378 = vadd.f32 %v2362, %v542
      %v2379 = vadd.f32 %v2363, %v543
      %v2380 = vadd.f32 %v2364, %v544
      %2381 = vst.msk [vmem:[%s526] sm:$0xff] %vm567, %v2365
      %2382 = vst.msk [vmem:[%s526 + $0x8] sm:$0xff] %vm567, %v2366
      %2383 = vst.msk [vmem:[%s526 + $0x10] sm:$0xff] %vm567, %v2367
      %2384 = vst.msk [vmem:[%s526 + $0x18] sm:$0xff] %vm567, %v2368
      %2385 = vst.msk [vmem:[%s526 + $0x20] sm:$0xff] %vm567, %v2369
      %2386 = vst.msk [vmem:[%s526 + $0x28] sm:$0xff] %vm567, %v2370
      %2387 = vst.msk [vmem:[%s526 + $0x30] sm:$0xff] %vm567, %v2371
      %2388 = vst.msk [vmem:[%s526 + $0x38] sm:$0xff] %vm567, %v2372
      %2389 = vst.msk [vmem:[%s526 + $0x40] sm:$0xff] %vm567, %v2373
      %2390 = vst.msk [vmem:[%s526 + $0x48] sm:$0xff] %vm567, %v2374
      %2391 = vst.msk [vmem:[%s526 + $0x50] sm:$0xff] %vm567, %v2375
      %2392 = vst.msk [vmem:[%s526 + $0x58] sm:$0xff] %vm567, %v2376
      %2393 = vst.msk [vmem:[%s526 + $0x60] sm:$0xff] %vm567, %v2377
      %2394 = vst.msk [vmem:[%s526 + $0x68] sm:$0xff] %vm567, %v2378
      %2395 = vst.msk [vmem:[%s526 + $0x70] sm:$0xff] %vm567, %v2379
      %2396 = vst.msk [vmem:[%s526 + $0x78] sm:$0xff] %vm567, %v2380
      %s2397 = smul.u32 8, %s26
      %p2398 = scmp.lt.s32.totalorder %s25, 1
      %s2399 = scalar_select %p2398, %s25, 1
      %p2400 = scmp.lt.s32.totalorder %s2397, 15
      %s2401 = scalar_select %p2400, %s2397, 15
      %s2402 = smul.addr %s2401, 2
      %s2403 = smul.addr %s2399, 32
      %s2404 = sadd.s32 %s2402, %s2403
      %s2405 = smul.addr %s2404, 8
      %s2406 = scalar_lea.vmem %s10, %s2405
      // Predicated region
      $region69: #{tpu_custom_call.1} parent=59 // pred_check
        %p2407 = pneg %p300
      $region70: #{tpu_custom_call.1} parent=59 // pred_check_branch
        %2409 = sbr.rel (%p2407) target = $region72
      $region71: #{tpu_custom_call.1} parent=59 // pred_region
        %s2410 = smul.u32 8, %s26
      $region72: #{tpu_custom_call.1} parent=59 // pred_fallthru
        _
    $region60: #{tpu_custom_call.1} parent=5 // pred_fallthru
      _
    %p2411 = scmp.le.s32.totalorder 2, %s16
    // Predicated region
    $region73: #{tpu_custom_call.1} parent=5 // pred_check
      %p2412 = pneg %p2411
    $region74: #{tpu_custom_call.1} parent=5 // pred_check_branch
      %2414 = sbr.rel (%p2412) target = $region76
    $region75: #{tpu_custom_call.1} parent=5 // pred_region
      %s2415 = ssub.s32 %s16, 2
      // Predicated region
      $region77: #{tpu_custom_call.1} parent=75 // pred_check
        %p2416 = pneg %p306
      $region78: #{tpu_custom_call.1} parent=75 // pred_check_branch
        %2418 = sbr.rel (%p2416) target = $region80
      $region79: #{tpu_custom_call.1} parent=75 // pred_region
        %s2419 = smul.u32 8, %s28
        %p2420 = scmp.lt.s32.totalorder %s27, 1
        %s2421 = scalar_select %p2420, %s27, 1
        %p2422 = scmp.lt.s32.totalorder %s2419, 15
        %s2423 = scalar_select %p2422, %s2419, 15
        %s2424 = smul.addr %s2423, 2
        %s2425 = smul.addr %s2421, 32
        %s2426 = sadd.s32 %s2424, %s2425
        %s2427 = smul.addr %s2426, 8
        %s2428 = scalar_lea.vmem %s10, %s2427
      $region80: #{tpu_custom_call.1} parent=75 // pred_fallthru
        _
    $region76: #{tpu_custom_call.1} parent=5 // pred_fallthru
      _
  $region6: #{tpu_custom_call.1} parent=0 // loop_footer
    %s20 = sadd.s32 1, %s16
  $region7: #{tpu_custom_call.1} parent=0 // loop_footer_branch
    %15 = sbr.rel target = $region3
  $region8: #{tpu_custom_call.1} parent=0 // loop_exit
    _

// kernel: tpu_custom_call.1
$region0: #{tpu_custom_call.1}
  #allocation0 [shape = 'u32[]', space=smem, size = 0x4, offset = 0x4, fixed_abs, tag = 'smem constant byte address 0x4 - core index']
  #allocation1 [shape = 'u32[144,128]{1,0:T(1,128)}', space=vmem, size = 0x12000, scoped, tag = 'internal scratch']
  #allocation2 [shape = 'bf16[160,32]{1,0:T(8,128)(2,1)}', space=vmem, size = 0xa000, scoped, tag = 'scratch operand']
  %s0 = inlined_call_operand.vmem [shape: f32[2,16,16,4], index: 0, kind: input, shape index: {}]
  %s1 = inlined_call_operand.vmem [shape: f32[2,16,16,4], index: 1, kind: input, shape index: {}]
  %s2 = inlined_call_operand.vmem [shape: f32[2,16,16,4], index: 2, kind: input, shape index: {}]
  %s3 = inlined_call_operand.vmem [shape: bf16[4,32], index: 3, kind: input, shape index: {}]
  %s4 = inlined_call_operand.vmem [shape: f32[1,32], index: 4, kind: input, shape index: {}]
  %s5 = inlined_call_operand.vmem [shape: f32[9,32], index: 5, kind: input, shape index: {}]
  %s6 = inlined_call_operand.vmem [shape: f32[1,32], index: 6, kind: input, shape index: {}]
  %s7 = inlined_call_operand.vmem [shape: bf16[16,4], index: 7, kind: input, shape index: {}]
  %s8 = inlined_call_operand.vmem [shape: f32[1,4], index: 8, kind: input, shape index: {}]
  %s9 = inlined_call_operand.vmem [shape: f32[1,4], index: 9, kind: input, shape index: {}]
  %s10 = inlined_call_operand.vmem [shape: f32[2,16,16,4], index: 10, kind: output, shape index: {}]
  %s11 = sld [smem:[#allocation0]]
  $region81: #{tpu_custom_call.1} parent=0
    _
  %s13 = ssub.s32 1, %s11
  %s14 = scalar_select 0, %s13, %s11
  loop: start=0, step=1, limit=6
  $region2: #{tpu_custom_call.1} parent=0 // loop_pre_header
    _
  $region3: #{tpu_custom_call.1} parent=0 // loop_header
    %s16 = sphi 0, %s20
    %p17 = scmp.ge.s32.totalorder %s16, 6
    %s23 = sphi 0, %s35
    %s24 = sphi 0, %s31
    %s25 = sphi 0, %s23
    %s26 = sphi 0, %s24
    %s27 = sphi 0, %s25
    %s28 = sphi 0, %s26
    %s40 = sphi 0, %s42
    %s43 = sphi 0, %s40
    %s44 = sphi 0, %s43
    %s60 = sphi 0, %s44
    %s76 = sphi 0, %s78
    %s79 = sphi 0, %s76
    %s80 = sphi 0, %s79
    %s96 = sphi 0, %s80
    %s112 = sphi 0, %s114
    %s115 = sphi 0, %s112
    %s116 = sphi 0, %s115
    %s132 = sphi 0, %s116
    %s136 = sphi 0, %s136
    %s138 = sphi 0, %s136
    %s139 = sphi 0, %s138
    %s153 = sphi 0, %s139
    %s157 = sphi 0, %s157
    %s159 = sphi 0, %s157
    %s160 = sphi 0, %s159
    %s174 = sphi 0, %s160
    %s178 = sphi 0, %s178
    %s180 = sphi 0, %s178
    %s181 = sphi 0, %s180
    %s195 = sphi 0, %s181
    %s199 = sphi 0, %s199
    %s201 = sphi 0, %s199
    %s202 = sphi 0, %s201
    %s216 = sphi 0, %s202
    %s220 = sphi 0, %s220
    %s222 = sphi 0, %s220
    %s223 = sphi 0, %s222
    %s237 = sphi 0, %s223
    %s241 = sphi 0, %s241
    %s243 = sphi 0, %s241
    %s244 = sphi 0, %s243
    %s258 = sphi 0, %s244
    %s262 = sphi 0, %s262
    %s264 = sphi 0, %s262
    %s265 = sphi 0, %s264
    %s279 = sphi 0, %s265
    %s287 = sphi 0, %s289
    %s290 = sphi 0, %s287
    %s291 = sphi 0, %s290
    %s307 = sphi 0, %s291
  $region4: #{tpu_custom_call.1} parent=0 // loop_header_branch
    %19 = sbr.rel (%p17) target = $region8
  $region5: #{tpu_custom_call.1} parent=0 // loop_body
    %s21 = ssub.s32 %s16, 1
    %s22 = ssub.s32 %s16, 2
    %s29 = sadd.s32 1, %s24
    %p30 = scmp.ge.s32.totalorder %s29, 2
    %s31 = scalar_select %p30, 0, %s29
    %s32 = sadd.s32 1, %s23
    %s33 = scalar_select %p30, %s32, %s23
    %p34 = scmp.ge.s32.totalorder %s33, 2
    %s35 = scalar_select %p34, 0, %s33
    %s36 = ssub.s32 %s23, %s35
    %s37 = ssub.s32 %s24, %s31
    %s38 = sor.u32 %s36, %s37
    %p39 = scmp.eq.s32.totalorder %s38, 0
    %s41 = sadd.s32 %s40, 1
    %s42 = scalar_select %p39, %s40, %s41
    %p45 = pneg %p39
    %p46 = scmp.eq.s32.totalorder %s16, 3
    %p47 = por %p45, %p46
    %p48 = scmp.ne.s32.totalorder %s40, %s43
    %p49 = scmp.eq.s32.totalorder %s16, 0
    %p50 = por %p48, %p49
    %p51 = scmp.ne.s32.totalorder %s40, %s43
    %p52 = scmp.eq.s32.totalorder %s21, 3
    %p53 = por %p51, %p52
    %p54 = scmp.ne.s32.totalorder %s43, %s44
    %p55 = scmp.eq.s32.totalorder %s21, 0
    %p56 = por %p54, %p55
    %p57 = scmp.ne.s32.totalorder %s43, %s44
    %p58 = scmp.eq.s32.totalorder %s22, 3
    %p59 = por %p57, %p58
    %p61 = scmp.ne.s32.totalorder %s44, %s60
    %p62 = scmp.eq.s32.totalorder %s22, 0
    %p63 = por %p61, %p62
    %s64 = smul.u32 %s24, 8
    %s65 = ssub.s32 %s64, 1
    %p66 = scmp.gt.s32.totalorder %s65, 0
    %s67 = scalar_select %p66, %s65, 0
    %s68 = smul.u32 %s31, 8
    %s69 = ssub.s32 %s68, 1
    %p70 = scmp.gt.s32.totalorder %s69, 0
    %s71 = scalar_select %p70, %s69, 0
    %s72 = ssub.s32 %s23, %s35
    %s73 = ssub.s32 %s67, %s71
    %s74 = sor.u32 %s72, %s73
    %p75 = scmp.eq.s32.totalorder %s74, 0
    %s77 = sadd.s32 %s76, 1
    %s78 = scalar_select %p75, %s76, %s77
    %p81 = pneg %p75
    %p82 = scmp.eq.s32.totalorder %s16, 3
    %p83 = por %p81, %p82
    %p84 = scmp.ne.s32.totalorder %s76, %s79
    %p85 = scmp.eq.s32.totalorder %s16, 0
    %p86 = por %p84, %p85
    %p87 = scmp.ne.s32.totalorder %s76, %s79
    %p88 = scmp.eq.s32.totalorder %s21, 3
    %p89 = por %p87, %p88
    %p90 = scmp.ne.s32.totalorder %s79, %s80
    %p91 = scmp.eq.s32.totalorder %s21, 0
    %p92 = por %p90, %p91
    %p93 = scmp.ne.s32.totalorder %s79, %s80
    %p94 = scmp.eq.s32.totalorder %s22, 3
    %p95 = por %p93, %p94
    %p97 = scmp.ne.s32.totalorder %s80, %s96
    %p98 = scmp.eq.s32.totalorder %s22, 0
    %p99 = por %p97, %p98
    %s100 = smul.u32 %s24, 8
    %s101 = sadd.s32 %s100, 8
    %p102 = scmp.lt.s32.totalorder %s101, 15
    %s103 = scalar_select %p102, %s101, 15
    %s104 = smul.u32 %s31, 8
    %s105 = sadd.s32 %s104, 8
    %p106 = scmp.lt.s32.totalorder %s105, 15
    %s107 = scalar_select %p106, %s105, 15
    %s108 = ssub.s32 %s23, %s35
    %s109 = ssub.s32 %s103, %s107
    %s110 = sor.u32 %s108, %s109
    %p111 = scmp.eq.s32.totalorder %s110, 0
    %s113 = sadd.s32 %s112, 1
    %s114 = scalar_select %p111, %s112, %s113
    %p117 = pneg %p111
    %p118 = scmp.eq.s32.totalorder %s16, 3
    %p119 = por %p117, %p118
    %p120 = scmp.ne.s32.totalorder %s112, %s115
    %p121 = scmp.eq.s32.totalorder %s16, 0
    %p122 = por %p120, %p121
    %p123 = scmp.ne.s32.totalorder %s112, %s115
    %p124 = scmp.eq.s32.totalorder %s21, 3
    %p125 = por %p123, %p124
    %p126 = scmp.ne.s32.totalorder %s115, %s116
    %p127 = scmp.eq.s32.totalorder %s21, 0
    %p128 = por %p126, %p127
    %p129 = scmp.ne.s32.totalorder %s115, %s116
    %p130 = scmp.eq.s32.totalorder %s22, 3
    %p131 = por %p129, %p130
    %p133 = scmp.ne.s32.totalorder %s116, %s132
    %p134 = scmp.eq.s32.totalorder %s22, 0
    %p135 = por %p133, %p134
    %s137 = sadd.s32 %s136, 1
    %p140 = scmp.eq.s32.totalorder %s16, 3
    %p141 = scmp.ne.s32.totalorder %s136, %s138
    %p142 = scmp.eq.s32.totalorder %s16, 0
    %p143 = por %p141, %p142
    %p144 = scmp.ne.s32.totalorder %s136, %s138
    %p145 = scmp.eq.s32.totalorder %s21, 3
    %p146 = por %p144, %p145
    %p147 = scmp.ne.s32.totalorder %s138, %s139
    %p148 = scmp.eq.s32.totalorder %s21, 0
    %p149 = por %p147, %p148
    %p150 = scmp.ne.s32.totalorder %s138, %s139
    %p151 = scmp.eq.s32.totalorder %s22, 3
    %p152 = por %p150, %p151
    %p154 = scmp.ne.s32.totalorder %s139, %s153
    %p155 = scmp.eq.s32.totalorder %s22, 0
    %p156 = por %p154, %p155
    %s158 = sadd.s32 %s157, 1
    %p161 = scmp.eq.s32.totalorder %s16, 3
    %p162 = scmp.ne.s32.totalorder %s157, %s159
    %p163 = scmp.eq.s32.totalorder %s16, 0
    %p164 = por %p162, %p163
    %p165 = scmp.ne.s32.totalorder %s157, %s159
    %p166 = scmp.eq.s32.totalorder %s21, 3
    %p167 = por %p165, %p166
    %p168 = scmp.ne.s32.totalorder %s159, %s160
    %p169 = scmp.eq.s32.totalorder %s21, 0
    %p170 = por %p168, %p169
    %p171 = scmp.ne.s32.totalorder %s159, %s160
    %p172 = scmp.eq.s32.totalorder %s22, 3
    %p173 = por %p171, %p172
    %p175 = scmp.ne.s32.totalorder %s160, %s174
    %p176 = scmp.eq.s32.totalorder %s22, 0
    %p177 = por %p175, %p176
    %s179 = sadd.s32 %s178, 1
    %p182 = scmp.eq.s32.totalorder %s16, 3
    %p183 = scmp.ne.s32.totalorder %s178, %s180
    %p184 = scmp.eq.s32.totalorder %s16, 0
    %p185 = por %p183, %p184
    %p186 = scmp.ne.s32.totalorder %s178, %s180
    %p187 = scmp.eq.s32.totalorder %s21, 3
    %p188 = por %p186, %p187
    %p189 = scmp.ne.s32.totalorder %s180, %s181
    %p190 = scmp.eq.s32.totalorder %s21, 0
    %p191 = por %p189, %p190
    %p192 = scmp.ne.s32.totalorder %s180, %s181
    %p193 = scmp.eq.s32.totalorder %s22, 3
    %p194 = por %p192, %p193
    %p196 = scmp.ne.s32.totalorder %s181, %s195
    %p197 = scmp.eq.s32.totalorder %s22, 0
    %p198 = por %p196, %p197
    %s200 = sadd.s32 %s199, 1
    %p203 = scmp.eq.s32.totalorder %s16, 3
    %p204 = scmp.ne.s32.totalorder %s199, %s201
    %p205 = scmp.eq.s32.totalorder %s16, 0
    %p206 = por %p204, %p205
    %p207 = scmp.ne.s32.totalorder %s199, %s201
    %p208 = scmp.eq.s32.totalorder %s21, 3
    %p209 = por %p207, %p208
    %p210 = scmp.ne.s32.totalorder %s201, %s202
    %p211 = scmp.eq.s32.totalorder %s21, 0
    %p212 = por %p210, %p211
    %p213 = scmp.ne.s32.totalorder %s201, %s202
    %p214 = scmp.eq.s32.totalorder %s22, 3
    %p215 = por %p213, %p214
    %p217 = scmp.ne.s32.totalorder %s202, %s216
    %p218 = scmp.eq.s32.totalorder %s22, 0
    %p219 = por %p217, %p218
    %s221 = sadd.s32 %s220, 1
    %p224 = scmp.eq.s32.totalorder %s16, 3
    %p225 = scmp.ne.s32.totalorder %s220, %s222
    %p226 = scmp.eq.s32.totalorder %s16, 0
    %p227 = por %p225, %p226
    %p228 = scmp.ne.s32.totalorder %s220, %s222
    %p229 = scmp.eq.s32.totalorder %s21, 3
    %p230 = por %p228, %p229
    %p231 = scmp.ne.s32.totalorder %s222, %s223
    %p232 = scmp.eq.s32.totalorder %s21, 0
    %p233 = por %p231, %p232
    %p234 = scmp.ne.s32.totalorder %s222, %s223
    %p235 = scmp.eq.s32.totalorder %s22, 3
    %p236 = por %p234, %p235
    %p238 = scmp.ne.s32.totalorder %s223, %s237
    %p239 = scmp.eq.s32.totalorder %s22, 0
    %p240 = por %p238, %p239
    %s242 = sadd.s32 %s241, 1
    %p245 = scmp.eq.s32.totalorder %s16, 3
    %p246 = scmp.ne.s32.totalorder %s241, %s243
    %p247 = scmp.eq.s32.totalorder %s16, 0
    %p248 = por %p246, %p247
    %p249 = scmp.ne.s32.totalorder %s241, %s243
    %p250 = scmp.eq.s32.totalorder %s21, 3
    %p251 = por %p249, %p250
    %p252 = scmp.ne.s32.totalorder %s243, %s244
    %p253 = scmp.eq.s32.totalorder %s21, 0
    %p254 = por %p252, %p253
    %p255 = scmp.ne.s32.totalorder %s243, %s244
    %p256 = scmp.eq.s32.totalorder %s22, 3
    %p257 = por %p255, %p256
    %p259 = scmp.ne.s32.totalorder %s244, %s258
    %p260 = scmp.eq.s32.totalorder %s22, 0
    %p261 = por %p259, %p260
    %s263 = sadd.s32 %s262, 1
    %p266 = scmp.eq.s32.totalorder %s16, 3
    %p267 = scmp.ne.s32.totalorder %s262, %s264
    %p268 = scmp.eq.s32.totalorder %s16, 0
    %p269 = por %p267, %p268
    %p270 = scmp.ne.s32.totalorder %s262, %s264
    %p271 = scmp.eq.s32.totalorder %s21, 3
    %p272 = por %p270, %p271
    %p273 = scmp.ne.s32.totalorder %s264, %s265
    %p274 = scmp.eq.s32.totalorder %s21, 0
    %p275 = por %p273, %p274
    %p276 = scmp.ne.s32.totalorder %s264, %s265
    %p277 = scmp.eq.s32.totalorder %s22, 3
    %p278 = por %p276, %p277
    %p280 = scmp.ne.s32.totalorder %s265, %s279
    %p281 = scmp.eq.s32.totalorder %s22, 0
    %p282 = por %p280, %p281
    %s283 = ssub.s32 %s23, %s35
    %s284 = ssub.s32 %s24, %s31
    %s285 = sor.u32 %s283, %s284
    %p286 = scmp.eq.s32.totalorder %s285, 0
    %s288 = sadd.s32 %s287, 1
    %s289 = scalar_select %p286, %s287, %s288
    %p292 = pneg %p286
    %p293 = scmp.eq.s32.totalorder %s16, 3
    %p294 = por %p292, %p293
    %p295 = scmp.ne.s32.totalorder %s287, %s290
    %p296 = scmp.eq.s32.totalorder %s16, 0
    %p297 = por %p295, %p296
    %p298 = scmp.ne.s32.totalorder %s287, %s290
    %p299 = scmp.eq.s32.totalorder %s21, 3
    %p300 = por %p298, %p299
    %p301 = scmp.ne.s32.totalorder %s290, %s291
    %p302 = scmp.eq.s32.totalorder %s21, 0
    %p303 = por %p301, %p302
    %p304 = scmp.ne.s32.totalorder %s290, %s291
    %p305 = scmp.eq.s32.totalorder %s22, 3
    %p306 = por %p304, %p305
    %p308 = scmp.ne.s32.totalorder %s291, %s307
    %p309 = scmp.eq.s32.totalorder %s22, 0
    %p310 = por %p308, %p309
    %p311 = scmp.le.s32.totalorder 1, %s16
    %p312 = scmp.lt.s32.totalorder %s16, 5
    %p313 = pnand %p311, %p312
    %p314 = pneg %p313
    // Predicated region
    $region9: #{tpu_custom_call.1} parent=5 // pred_check
      _
    $region10: #{tpu_custom_call.1} parent=5 // pred_check_branch
      %316 = sbr.rel (%p313) target = $region12
    $region11: #{tpu_custom_call.1} parent=5 // pred_region
      %s317 = ssub.s32 %s16, 1
      // Predicated region
      $region13: #{tpu_custom_call.1} parent=11 // pred_check
        %p318 = pneg %p149
      $region14: #{tpu_custom_call.1} parent=11 // pred_check_branch
        %320 = sbr.rel (%p318) target = $region16
      $region15: #{tpu_custom_call.1} parent=11 // pred_region
        _
      $region16: #{tpu_custom_call.1} parent=11 // pred_fallthru
        _
      // Predicated region
      $region17: #{tpu_custom_call.1} parent=11 // pred_check
        %p321 = pneg %p170
      $region18: #{tpu_custom_call.1} parent=11 // pred_check_branch
        %323 = sbr.rel (%p321) target = $region20
      $region19: #{tpu_custom_call.1} parent=11 // pred_region
        _
      $region20: #{tpu_custom_call.1} parent=11 // pred_fallthru
        _
      // Predicated region
      $region21: #{tpu_custom_call.1} parent=11 // pred_check
        %p324 = pneg %p191
      $region22: #{tpu_custom_call.1} parent=11 // pred_check_branch
        %326 = sbr.rel (%p324) target = $region24
      $region23: #{tpu_custom_call.1} parent=11 // pred_region
        _
      $region24: #{tpu_custom_call.1} parent=11 // pred_fallthru
        _
      // Predicated region
      $region25: #{tpu_custom_call.1} parent=11 // pred_check
        %p327 = pneg %p212
      $region26: #{tpu_custom_call.1} parent=11 // pred_check_branch
        %329 = sbr.rel (%p327) target = $region28
      $region27: #{tpu_custom_call.1} parent=11 // pred_region
        _
      $region28: #{tpu_custom_call.1} parent=11 // pred_fallthru
        _
      // Predicated region
      $region29: #{tpu_custom_call.1} parent=11 // pred_check
        %p330 = pneg %p233
      $region30: #{tpu_custom_call.1} parent=11 // pred_check_branch
        %332 = sbr.rel (%p330) target = $region32
      $region31: #{tpu_custom_call.1} parent=11 // pred_region
        _
      $region32: #{tpu_custom_call.1} parent=11 // pred_fallthru
        _
      // Predicated region
      $region33: #{tpu_custom_call.1} parent=11 // pred_check
        %p333 = pneg %p254
      $region34: #{tpu_custom_call.1} parent=11 // pred_check_branch
        %335 = sbr.rel (%p333) target = $region36
      $region35: #{tpu_custom_call.1} parent=11 // pred_region
        _
      $region36: #{tpu_custom_call.1} parent=11 // pred_fallthru
        _
      // Predicated region
      $region37: #{tpu_custom_call.1} parent=11 // pred_check
        %p336 = pneg %p275
      $region38: #{tpu_custom_call.1} parent=11 // pred_check_branch
        %338 = sbr.rel (%p336) target = $region40
      $region39: #{tpu_custom_call.1} parent=11 // pred_region
        _
      $region40: #{tpu_custom_call.1} parent=11 // pred_fallthru
        _
    $region12: #{tpu_custom_call.1} parent=5 // pred_fallthru
      _
    %p339 = scmp.lt.s32.totalorder %s16, 4
    // Predicated region
    $region41: #{tpu_custom_call.1} parent=5 // pred_check
      %p340 = pneg %p339
    $region42: #{tpu_custom_call.1} parent=5 // pred_check_branch
      %342 = sbr.rel (%p340) target = $region44
    $region43: #{tpu_custom_call.1} parent=5 // pred_region
      // Predicated region
      $region45: #{tpu_custom_call.1} parent=43 // pred_check
        %p343 = pneg %p50
      $region46: #{tpu_custom_call.1} parent=43 // pred_check_branch
        %345 = sbr.rel (%p343) target = $region48
      $region47: #{tpu_custom_call.1} parent=43 // pred_region
        %s346 = smul.u32 8, %s24
        %p347 = scmp.lt.s32.totalorder %s23, 1
        %s348 = scalar_select %p347, %s23, 1
        %p349 = scmp.lt.s32.totalorder %s346, 15
        %s350 = scalar_select %p349, %s346, 15
        %s351 = smul.addr %s350, 2
        %s352 = smul.addr %s348, 32
        %s353 = sadd.s32 %s351, %s352
        %s354 = smul.addr %s353, 8
        %s355 = scalar_lea.vmem %s0, %s354
        %s356 = smul.u32 8, %s24
      $region48: #{tpu_custom_call.1} parent=43 // pred_fallthru
        _
      // Predicated region
      $region49: #{tpu_custom_call.1} parent=43 // pred_check
        %p357 = pneg %p86
      $region50: #{tpu_custom_call.1} parent=43 // pred_check_branch
        %359 = sbr.rel (%p357) target = $region52
      $region51: #{tpu_custom_call.1} parent=43 // pred_region
        %s360 = smul.u32 %s24, 8
        %s361 = ssub.s32 %s360, 1
        %p362 = scmp.gt.s32.totalorder %s361, 0
        %s363 = scalar_select %p362, %s361, 0
        %p364 = scmp.lt.s32.totalorder %s23, 1
        %s365 = scalar_select %p364, %s23, 1
        %p366 = scmp.lt.s32.totalorder %s363, 15
        %s367 = scalar_select %p366, %s363, 15
        %s368 = smul.addr %s367, 2
        %s369 = smul.addr %s365, 32
        %s370 = sadd.s32 %s368, %s369
        %s371 = smul.addr %s370, 8
        %s372 = scalar_lea.vmem %s1, %s371
        %s373 = smul.u32 %s24, 8
        %s374 = ssub.s32 %s373, 1
        %p375 = scmp.gt.s32.totalorder %s374, 0
        %s376 = scalar_select %p375, %s374, 0
      $region52: #{tpu_custom_call.1} parent=43 // pred_fallthru
        _
      // Predicated region
      $region53: #{tpu_custom_call.1} parent=43 // pred_check
        %p377 = pneg %p122
      $region54: #{tpu_custom_call.1} parent=43 // pred_check_branch
        %379 = sbr.rel (%p377) target = $region56
      $region55: #{tpu_custom_call.1} parent=43 // pred_region
        %s380 = smul.u32 %s24, 8
        %s381 = sadd.s32 %s380, 8
        %p382 = scmp.lt.s32.totalorder %s381, 15
        %s383 = scalar_select %p382, %s381, 15
        %p384 = scmp.lt.s32.totalorder %s23, 1
        %s385 = scalar_select %p384, %s23, 1
        %p386 = scmp.lt.s32.totalorder %s383, 15
        %s387 = scalar_select %p386, %s383, 15
        %s388 = smul.addr %s387, 2
        %s389 = smul.addr %s385, 32
        %s390 = sadd.s32 %s388, %s389
        %s391 = smul.addr %s390, 8
        %s392 = scalar_lea.vmem %s2, %s391
        %s393 = smul.u32 %s24, 8
        %s394 = sadd.s32 %s393, 8
        %p395 = scmp.lt.s32.totalorder %s394, 15
        %s396 = scalar_select %p395, %s394, 15
      $region56: #{tpu_custom_call.1} parent=43 // pred_fallthru
        _
    $region44: #{tpu_custom_call.1} parent=5 // pred_fallthru
      _
    %p397 = scmp.le.s32.totalorder 1, %s16
    %p398 = scmp.lt.s32.totalorder %s16, 5
    %p399 = pnand %p397, %p398
    %p400 = pneg %p399
    // Predicated region
    $region57: #{tpu_custom_call.1} parent=5 // pred_check
      _
    $region58: #{tpu_custom_call.1} parent=5 // pred_check_branch
      %402 = sbr.rel (%p399) target = $region60
    $region59: #{tpu_custom_call.1} parent=5 // pred_region
      %s403 = ssub.s32 %s16, 1
      %s404 = smul.u32 8, %s26
      %p405 = scmp.lt.s32.totalorder %s25, 1
      %s406 = scalar_select %p405, %s25, 1
      %p407 = scmp.lt.s32.totalorder %s404, 15
      %s408 = scalar_select %p407, %s404, 15
      %s409 = smul.addr %s408, 2
      %s410 = smul.addr %s406, 32
      %s411 = sadd.s32 %s409, %s410
      %s412 = smul.addr %s411, 8
      %s413 = scalar_lea.vmem %s0, %s412
      %p414 = pneg %p56
      %p415 = pneg %p53
      %s416 = smul.u32 %s26, 8
      %s417 = ssub.s32 %s416, 1
      %p418 = scmp.gt.s32.totalorder %s417, 0
      %s419 = scalar_select %p418, %s417, 0
      %p420 = scmp.lt.s32.totalorder %s25, 1
      %s421 = scalar_select %p420, %s25, 1
      %p422 = scmp.lt.s32.totalorder %s419, 15
      %s423 = scalar_select %p422, %s419, 15
      %s424 = smul.addr %s423, 2
      %s425 = smul.addr %s421, 32
      %s426 = sadd.s32 %s424, %s425
      %s427 = smul.addr %s426, 8
      %s428 = scalar_lea.vmem %s1, %s427
      %p429 = pneg %p92
      %p430 = pneg %p89
      %s431 = smul.u32 %s26, 8
      %s432 = sadd.s32 %s431, 8
      %p433 = scmp.lt.s32.totalorder %s432, 15
      %s434 = scalar_select %p433, %s432, 15
      %p435 = scmp.lt.s32.totalorder %s25, 1
      %s436 = scalar_select %p435, %s25, 1
      %p437 = scmp.lt.s32.totalorder %s434, 15
      %s438 = scalar_select %p437, %s434, 15
      %s439 = smul.addr %s438, 2
      %s440 = smul.addr %s436, 32
      %s441 = sadd.s32 %s439, %s440
      %s442 = smul.addr %s441, 8
      %s443 = scalar_lea.vmem %s2, %s442
      %p444 = pneg %p128
      %p445 = pneg %p125
      %p446 = pneg %p149
      %p447 = pneg %p146
      %p448 = pneg %p170
      %p449 = pneg %p167
      %p450 = pneg %p191
      %p451 = pneg %p188
      %p452 = pneg %p212
      %p453 = pneg %p209
      %p454 = pneg %p233
      %p455 = pneg %p230
      %p456 = pneg %p254
      %p457 = pneg %p251
      %p458 = pneg %p275
      %p459 = pneg %p272
      %p460 = pneg %p303
      %p461 = pneg %p300
      %s462 = smul.u32 8, %s26
      %p463 = scmp.lt.s32.totalorder %s25, 1
      %s464 = scalar_select %p463, %s25, 1
      %p465 = scmp.lt.s32.totalorder %s462, 15
      %s466 = scalar_select %p465, %s462, 15
      %s467 = smul.addr %s466, 2
      %s468 = smul.addr %s464, 32
      %s469 = sadd.s32 %s467, %s468
      %s470 = smul.addr %s469, 8
      %s471 = scalar_lea.vmem %s10, %s470
      %s472 = smul.u32 8, %s26
      %p473 = scmp.lt.s32.totalorder %s25, 1
      %s474 = scalar_select %p473, %s25, 1
      %p475 = scmp.lt.s32.totalorder %s472, 15
      %s476 = scalar_select %p475, %s472, 15
      %s477 = smul.addr %s476, 2
      %s478 = smul.addr %s474, 32
      %s479 = sadd.s32 %s477, %s478
      %s480 = smul.addr %s479, 8
      %s481 = scalar_lea.vmem %s0, %s480
      %s482 = smul.u32 8, %s26
      %s483 = smul.u32 %s26, 8
      %s484 = ssub.s32 %s483, 1
      %p485 = scmp.gt.s32.totalorder %s484, 0
      %s486 = scalar_select %p485, %s484, 0
      %p487 = scmp.lt.s32.totalorder %s25, 1
      %s488 = scalar_select %p487, %s25, 1
      %p489 = scmp.lt.s32.totalorder %s486, 15
      %s490 = scalar_select %p489, %s486, 15
      %s491 = smul.addr %s490, 2
      %s492 = smul.addr %s488, 32
      %s493 = sadd.s32 %s491, %s492
      %s494 = smul.addr %s493, 8
      %s495 = scalar_lea.vmem %s1, %s494
      %s496 = smul.u32 %s26, 8
      %s497 = ssub.s32 %s496, 1
      %p498 = scmp.gt.s32.totalorder %s497, 0
      %s499 = scalar_select %p498, %s497, 0
      %s500 = smul.u32 %s26, 8
      %s501 = sadd.s32 %s500, 8
      %p502 = scmp.lt.s32.totalorder %s501, 15
      %s503 = scalar_select %p502, %s501, 15
      %p504 = scmp.lt.s32.totalorder %s25, 1
      %s505 = scalar_select %p504, %s25, 1
      %p506 = scmp.lt.s32.totalorder %s503, 15
      %s507 = scalar_select %p506, %s503, 15
      %s508 = smul.addr %s507, 2
      %s509 = smul.addr %s505, 32
      %s510 = sadd.s32 %s508, %s509
      %s511 = smul.addr %s510, 8
      %s512 = scalar_lea.vmem %s2, %s511
      %s513 = smul.u32 %s26, 8
      %s514 = sadd.s32 %s513, 8
      %p515 = scmp.lt.s32.totalorder %s514, 15
      %s516 = scalar_select %p515, %s514, 15
      %s517 = smul.u32 8, %s26
      %p518 = scmp.lt.s32.totalorder %s25, 1
      %s519 = scalar_select %p518, %s25, 1
      %p520 = scmp.lt.s32.totalorder %s517, 15
      %s521 = scalar_select %p520, %s517, 15
      %s522 = smul.addr %s521, 2
      %s523 = smul.addr %s519, 32
      %s524 = sadd.s32 %s522, %s523
      %s525 = smul.addr %s524, 8
      %s526 = scalar_lea.vmem %s10, %s525
      %s527 = smul.u32 8, %s26
      %v529 = vld [vmem:[%s481] sm:$0xff]
      %v530 = vld [vmem:[%s481 + $0x8] sm:$0xff]
      %v531 = vld [vmem:[%s481 + $0x10] sm:$0xff]
      %v532 = vld [vmem:[%s481 + $0x18] sm:$0xff]
      %v533 = vld [vmem:[%s481 + $0x20] sm:$0xff]
      %v534 = vld [vmem:[%s481 + $0x28] sm:$0xff]
      %v535 = vld [vmem:[%s481 + $0x30] sm:$0xff]
      %v536 = vld [vmem:[%s481 + $0x38] sm:$0xff]
      %v537 = vld [vmem:[%s481 + $0x40] sm:$0xff]
      %v538 = vld [vmem:[%s481 + $0x48] sm:$0xff]
      %v539 = vld [vmem:[%s481 + $0x50] sm:$0xff]
      %v540 = vld [vmem:[%s481 + $0x58] sm:$0xff]
      %v541 = vld [vmem:[%s481 + $0x60] sm:$0xff]
      %v542 = vld [vmem:[%s481 + $0x68] sm:$0xff]
      %v543 = vld [vmem:[%s481 + $0x70] sm:$0xff]
      %v544 = vld [vmem:[%s481 + $0x78] sm:$0xff]
      %v545 = vld [vmem:[%s495] sm:$0xff]
      %v546 = vld [vmem:[%s495 + $0x8] sm:$0xff]
      %v547 = vpack.c.bf16 %v546, %v545
      %v548 = vpack.c.bf16 %v530, %v529
      %v549 = vpack.c.bf16 %v532, %v531
      %v550 = vpack.c.bf16 %v534, %v533
      %v551 = vpack.c.bf16 %v536, %v535
      %v552 = vpack.c.bf16 %v538, %v537
      %v553 = vpack.c.bf16 %v540, %v539
      %v554 = vpack.c.bf16 %v542, %v541
      %v555 = vpack.c.bf16 %v544, %v543
      %v556 = vld [vmem:[%s512] sm:$0xff]
      %v557 = vld [vmem:[%s512 + $0x8] sm:$0xff]
      %v558 = vpack.c.bf16 %v557, %v556
      %v559 = vld [vmem:[%s3] sm:$0x3]
      %v560 = vld [vmem:[%s4] sm:$0x1]
      %v562 = vlaneseq
      %v563 = vshrl.u32 %v562, 7
      %v564 = vsub.s32 0, %v563
      %v565 = vrot.slane %v560, %v564
      %vm567 = vcmask 31744
      %v569 = vsel %vm567, %v547, 0
      %v572 = vsel %vm567, %v548, 0
      %v575 = vsel %vm567, %v549, 0
      %v578 = vsel %vm567, %v550, 0
      %v581 = vsel %vm567, %v551, 0
      %v584 = vsel %vm567, %v552, 0
      %v587 = vsel %vm567, %v553, 0
      %v590 = vsel %vm567, %v554, 0
      %v593 = vsel %vm567, %v555, 0
      %v596 = vsel %vm567, %v558, 0
      %vm598 = vcmask 1041408
      %v600 = vsel %vm598, %v559, 0
      %602 = vmatprep.subr.bf16.mxu0 0
      %603 = vmatpush1.bf16.msra.mxu0 0
      %604 = vmatprep.subr.bf16.mxu0 0
      %605 = vmatpush1.bf16.msra.mxu0 0
      %606 = vmatprep.subr.bf16.mxu0 0
      %607 = vmatpush1.bf16.msra.mxu0 0
      %608 = vmatprep.subr.bf16.mxu0 0
      %609 = vmatpush1.bf16.msra.mxu0 0
      %610 = vmatprep.subr.bf16.mxu0 0
      %611 = vmatpush1.bf16.msra.mxu0 0
      %612 = vmatprep.subr.bf16.mxu0 0
      %613 = vmatpush1.bf16.msra.mxu0 0
      %614 = vmatprep.subr.bf16.mxu0 0
      %615 = vmatpush1.bf16.msra.mxu0 0
      %616 = vmatprep.subr.bf16.mxu0 0
      %617 = vmatpush1.bf16.msra.mxu0 %v600
      %618 = vmatprep.subr.bf16.mxu0 0
      %619 = vmatpush2.bf16.msra.mxu0 0
      %620 = vmatprep.subr.bf16.mxu0 0
      %621 = vmatpush2.bf16.msra.mxu0 0
      %622 = vmatprep.subr.bf16.mxu0 0
      %623 = vmatpush2.bf16.msra.mxu0 0
      %624 = vmatprep.subr.bf16.mxu0 0
      %625 = vmatpush2.bf16.msra.mxu0 0
      %626 = vmatprep.subr.bf16.mxu0 0
      %627 = vmatpush2.bf16.msra.mxu0 0
      %628 = vmatprep.subr.bf16.mxu0 0
      %629 = vmatpush2.bf16.msra.mxu0 0
      %630 = vmatprep.subr.bf16.mxu0 0
      %631 = vmatpush2.bf16.msra.mxu0 0
      %632 = vmatprep.subr.bf16.mxu0 0
      %633 = vmatpush2.bf16.msra.mxu0 0
      %634 = vmatprep.mubr.bf16.mxu0 0
      %635 = vmatmul.mubr.bf16.gmra.mxu0 %v569
      %v636 = vpop.f32.mrf.mxu0
      %v637 = vadd.f32 %v565, %v636
      %v638 = vpop.f32.mrf.mxu0
      %v639 = vpop.f32.mrf.mxu0
      %v640 = vadd.f32 %v565, %v639
      %v641 = vpop.f32.mrf.mxu0
      %642 = vmatprep.mubr.bf16.mxu0 0
      %643 = vmatmul.mubr.bf16.gmra.mxu0 %v572
      %v644 = vpop.f32.mrf.mxu0
      %v645 = vadd.f32 %v565, %v644
      %v646 = vpop.f32.mrf.mxu0
      %v647 = vpop.f32.mrf.mxu0
      %v648 = vadd.f32 %v565, %v647
      %v649 = vpop.f32.mrf.mxu0
      %650 = vmatprep.mubr.bf16.mxu0 0
      %651 = vmatmul.mubr.bf16.gmra.mxu0 %v575
      %v652 = vpop.f32.mrf.mxu0
      %v653 = vadd.f32 %v565, %v652
      %v654 = vpop.f32.mrf.mxu0
      %v655 = vpop.f32.mrf.mxu0
      %v656 = vadd.f32 %v565, %v655
      %v657 = vpop.f32.mrf.mxu0
      %658 = vmatprep.mubr.bf16.mxu0 0
      %659 = vmatmul.mubr.bf16.gmra.mxu0 %v578
      %v660 = vpop.f32.mrf.mxu0
      %v661 = vadd.f32 %v565, %v660
      %v662 = vpop.f32.mrf.mxu0
      %v663 = vpop.f32.mrf.mxu0
      %v664 = vadd.f32 %v565, %v663
      %v665 = vpop.f32.mrf.mxu0
      %666 = vmatprep.mubr.bf16.mxu0 0
      %667 = vmatmul.mubr.bf16.gmra.mxu0 %v581
      %v668 = vpop.f32.mrf.mxu0
      %v669 = vadd.f32 %v565, %v668
      %v670 = vpop.f32.mrf.mxu0
      %v671 = vpop.f32.mrf.mxu0
      %v672 = vadd.f32 %v565, %v671
      %v673 = vpop.f32.mrf.mxu0
      %674 = vmatprep.mubr.bf16.mxu0 0
      %675 = vmatmul.mubr.bf16.gmra.mxu0 %v584
      %v676 = vpop.f32.mrf.mxu0
      %v677 = vadd.f32 %v565, %v676
      %v678 = vpop.f32.mrf.mxu0
      %v679 = vpop.f32.mrf.mxu0
      %v680 = vadd.f32 %v565, %v679
      %v681 = vpop.f32.mrf.mxu0
      %682 = vmatprep.mubr.bf16.mxu0 0
      %683 = vmatmul.mubr.bf16.gmra.mxu0 %v587
      %v684 = vpop.f32.mrf.mxu0
      %v685 = vadd.f32 %v565, %v684
      %v686 = vpop.f32.mrf.mxu0
      %v687 = vpop.f32.mrf.mxu0
      %v688 = vadd.f32 %v565, %v687
      %v689 = vpop.f32.mrf.mxu0
      %690 = vmatprep.mubr.bf16.mxu0 0
      %691 = vmatmul.mubr.bf16.gmra.mxu0 %v590
      %v692 = vpop.f32.mrf.mxu0
      %v693 = vadd.f32 %v565, %v692
      %v694 = vpop.f32.mrf.mxu0
      %v695 = vpop.f32.mrf.mxu0
      %v696 = vadd.f32 %v565, %v695
      %v697 = vpop.f32.mrf.mxu0
      %698 = vmatprep.mubr.bf16.mxu0 0
      %699 = vmatmul.mubr.bf16.gmra.mxu0 %v593
      %v700 = vpop.f32.mrf.mxu0
      %v701 = vadd.f32 %v565, %v700
      %v702 = vpop.f32.mrf.mxu0
      %v703 = vpop.f32.mrf.mxu0
      %v704 = vadd.f32 %v565, %v703
      %v705 = vpop.f32.mrf.mxu0
      %706 = vmatprep.mubr.bf16.mxu0 0
      %707 = vmatmul.mubr.bf16.gmra.mxu0 %v596
      %v708 = vpop.f32.mrf.mxu0
      %v709 = vadd.f32 %v565, %v708
      %v710 = vpop.f32.mrf.mxu0
      %v711 = vpop.f32.mrf.mxu0
      %v712 = vadd.f32 %v565, %v711
      %v713 = vpop.f32.mrf.mxu0
      %714 = vdwg.mxu0
      %v715 = vxor.u32 %v637, 2147483648
      %v716 = vxor.u32 %v640, 2147483648
      %v717 = vxor.u32 %v645, 2147483648
      %v718 = vxor.u32 %v648, 2147483648
      %v719 = vxor.u32 %v653, 2147483648
      %v720 = vxor.u32 %v656, 2147483648
      %v721 = vxor.u32 %v661, 2147483648
      %v722 = vxor.u32 %v664, 2147483648
      %v723 = vxor.u32 %v669, 2147483648
      %v724 = vxor.u32 %v672, 2147483648
      %v725 = vxor.u32 %v677, 2147483648
      %v726 = vxor.u32 %v680, 2147483648
      %v727 = vxor.u32 %v685, 2147483648
      %v728 = vxor.u32 %v688, 2147483648
      %v729 = vxor.u32 %v693, 2147483648
      %v730 = vxor.u32 %v696, 2147483648
      %v731 = vxor.u32 %v701, 2147483648
      %v732 = vxor.u32 %v704, 2147483648
      %v733 = vxor.u32 %v709, 2147483648
      %v734 = vxor.u32 %v712, 2147483648
      %v735 = vmul.f32 %v715, 1.442695
      %v736 = vpow.pop %v735
      %v737 = vmul.f32 %v716, 1.442695
      %v738 = vpow.pop %v737
      %v739 = vmul.f32 %v717, 1.442695
      %v740 = vpow.pop %v739
      %v741 = vmul.f32 %v718, 1.442695
      %v742 = vpow.pop %v741
      %v743 = vmul.f32 %v719, 1.442695
      %v744 = vpow.pop %v743
      %v745 = vmul.f32 %v720, 1.442695
      %v746 = vpow.pop %v745
      %v747 = vmul.f32 %v721, 1.442695
      %v748 = vpow.pop %v747
      %v749 = vmul.f32 %v722, 1.442695
      %v750 = vpow.pop %v749
      %v751 = vmul.f32 %v723, 1.442695
      %v752 = vpow.pop %v751
      %v753 = vmul.f32 %v724, 1.442695
      %v754 = vpow.pop %v753
      %v755 = vmul.f32 %v725, 1.442695
      %v756 = vpow.pop %v755
      %v757 = vmul.f32 %v726, 1.442695
      %v758 = vpow.pop %v757
      %v759 = vmul.f32 %v727, 1.442695
      %v760 = vpow.pop %v759
      %v761 = vmul.f32 %v728, 1.442695
      %v762 = vpow.pop %v761
      %v763 = vmul.f32 %v729, 1.442695
      %v764 = vpow.pop %v763
      %v765 = vmul.f32 %v730, 1.442695
      %v766 = vpow.pop %v765
      %v767 = vmul.f32 %v731, 1.442695
      %v768 = vpow.pop %v767
      %v769 = vmul.f32 %v732, 1.442695
      %v770 = vpow.pop %v769
      %v771 = vmul.f32 %v733, 1.442695
      %v772 = vpow.pop %v771
      %v773 = vmul.f32 %v734, 1.442695
      %v774 = vpow.pop %v773
      %v775 = vadd.f32 %v736, 1.0
      %v776 = vadd.f32 %v738, 1.0
      %v777 = vadd.f32 %v740, 1.0
      %v778 = vadd.f32 %v742, 1.0
      %v779 = vadd.f32 %v744, 1.0
      %v780 = vadd.f32 %v746, 1.0
      %v781 = vadd.f32 %v748, 1.0
      %v782 = vadd.f32 %v750, 1.0
      %v783 = vadd.f32 %v752, 1.0
      %v784 = vadd.f32 %v754, 1.0
      %v785 = vadd.f32 %v756, 1.0
      %v786 = vadd.f32 %v758, 1.0
      %v787 = vadd.f32 %v760, 1.0
      %v788 = vadd.f32 %v762, 1.0
      %v789 = vadd.f32 %v764, 1.0
      %v790 = vadd.f32 %v766, 1.0
      %v791 = vadd.f32 %v768, 1.0
      %v792 = vadd.f32 %v770, 1.0
      %v793 = vadd.f32 %v772, 1.0
      %v794 = vadd.f32 %v774, 1.0
      %v795 = vrcp.pop %v775
      %v796 = vmul.f32 1.0, %v795
      %v797 = vrcp.pop %v776
      %v798 = vmul.f32 1.0, %v797
      %v799 = vrcp.pop %v777
      %v800 = vmul.f32 1.0, %v799
      %v801 = vrcp.pop %v778
      %v802 = vmul.f32 1.0, %v801
      %v803 = vrcp.pop %v779
      %v804 = vmul.f32 1.0, %v803
      %v805 = vrcp.pop %v780
      %v806 = vmul.f32 1.0, %v805
      %v807 = vrcp.pop %v781
      %v808 = vmul.f32 1.0, %v807
      %v809 = vrcp.pop %v782
      %v810 = vmul.f32 1.0, %v809
      %v811 = vrcp.pop %v783
      %v812 = vmul.f32 1.0, %v811
      %v813 = vrcp.pop %v784
      %v814 = vmul.f32 1.0, %v813
      %v815 = vrcp.pop %v785
      %v816 = vmul.f32 1.0, %v815
      %v817 = vrcp.pop %v786
      %v818 = vmul.f32 1.0, %v817
      %v819 = vrcp.pop %v787
      %v820 = vmul.f32 1.0, %v819
      %v821 = vrcp.pop %v788
      %v822 = vmul.f32 1.0, %v821
      %v823 = vrcp.pop %v789
      %v824 = vmul.f32 1.0, %v823
      %v825 = vrcp.pop %v790
      %v826 = vmul.f32 1.0, %v825
      %v827 = vrcp.pop %v791
      %v828 = vmul.f32 1.0, %v827
      %v829 = vrcp.pop %v792
      %v830 = vmul.f32 1.0, %v829
      %v831 = vrcp.pop %v793
      %v832 = vmul.f32 1.0, %v831
      %v833 = vrcp.pop %v794
      %v834 = vmul.f32 1.0, %v833
      %v835 = vmul.f32 %v637, %v796
      %v836 = vmul.f32 %v640, %v798
      %v837 = vmul.f32 %v645, %v800
      %v838 = vmul.f32 %v648, %v802
      %v839 = vmul.f32 %v653, %v804
      %v840 = vmul.f32 %v656, %v806
      %v841 = vmul.f32 %v661, %v808
      %v842 = vmul.f32 %v664, %v810
      %v843 = vmul.f32 %v669, %v812
      %v844 = vmul.f32 %v672, %v814
      %v845 = vmul.f32 %v677, %v816
      %v846 = vmul.f32 %v680, %v818
      %v847 = vmul.f32 %v685, %v820
      %v848 = vmul.f32 %v688, %v822
      %v849 = vmul.f32 %v693, %v824
      %v850 = vmul.f32 %v696, %v826
      %v851 = vmul.f32 %v701, %v828
      %v852 = vmul.f32 %v704, %v830
      %v853 = vmul.f32 %v709, %v832
      %v854 = vmul.f32 %v712, %v834
      %v855 = vpack.c.bf16 %v836, %v835
      %v856 = vpack.c.bf16 %v838, %v837
      %v857 = vpack.c.bf16 %v840, %v839
      %v858 = vpack.c.bf16 %v842, %v841
      %v859 = vpack.c.bf16 %v844, %v843
      %v860 = vpack.c.bf16 %v846, %v845
      %v861 = vpack.c.bf16 %v848, %v847
      %v862 = vpack.c.bf16 %v850, %v849
      %v863 = vpack.c.bf16 %v852, %v851
      %v864 = vpack.c.bf16 %v854, %v853
      %v875 = vunpack.c.l.b16 %v855
      %v876 = vunpack.c.h.b16 %v855
      %v877 = vunpack.c.l.b16 %v856
      %v878 = vunpack.c.h.b16 %v856
      %v879 = vunpack.c.l.b16 %v857
      %v880 = vunpack.c.h.b16 %v857
      %v881 = vunpack.c.l.b16 %v858
      %v882 = vunpack.c.h.b16 %v858
      %v883 = vunpack.c.l.b16 %v859
      %v884 = vunpack.c.h.b16 %v859
      %v885 = vunpack.c.l.b16 %v860
      %v886 = vunpack.c.h.b16 %v860
      %v887 = vunpack.c.l.b16 %v861
      %v888 = vunpack.c.h.b16 %v861
      %v889 = vunpack.c.l.b16 %v862
      %v890 = vunpack.c.h.b16 %v862
      %v891 = vunpack.c.l.b16 %v863
      %v892 = vunpack.c.h.b16 %v863
      %v893 = vunpack.c.l.b16 %v864
      %v894 = vunpack.c.h.b16 %v864
      %v895 = vpack.c.b16 %v875, %v875
      %v896 = vpack.c.b16 %v876, %v876
      %v897 = vpack.c.b16 %v877, %v877
      %v898 = vpack.c.b16 %v878, %v878
      %v899 = vpack.c.b16 %v879, %v879
      %v900 = vpack.c.b16 %v880, %v880
      %v901 = vpack.c.b16 %v881, %v881
      %v902 = vpack.c.b16 %v882, %v882
      %v903 = vpack.c.b16 %v883, %v883
      %v904 = vpack.c.b16 %v884, %v884
      %v905 = vpack.c.b16 %v885, %v885
      %v906 = vpack.c.b16 %v886, %v886
      %v907 = vpack.c.b16 %v887, %v887
      %v908 = vpack.c.b16 %v888, %v888
      %v909 = vpack.c.b16 %v889, %v889
      %v910 = vpack.c.b16 %v890, %v890
      %v911 = vpack.c.b16 %v891, %v891
      %v912 = vpack.c.b16 %v892, %v892
      %v913 = vpack.c.b16 %v893, %v893
      %v914 = vpack.c.b16 %v894, %v894
      %vm935 = vcmask 257024
      %936 = vst.msk [vmem:[#allocation2] sm:$0xf] %vm935, %v895
      %937 = vst.msk [vmem:[#allocation2 + $0x4] sm:$0xf] %vm935, %v896
      %938 = vst.msk [vmem:[#allocation2 + $0x8] sm:$0xf] %vm935, %v897
      %939 = vst.msk [vmem:[#allocation2 + $0xc] sm:$0xf] %vm935, %v898
      %940 = vst.msk [vmem:[#allocation2 + $0x10] sm:$0xf] %vm935, %v899
      %941 = vst.msk [vmem:[#allocation2 + $0x14] sm:$0xf] %vm935, %v900
      %942 = vst.msk [vmem:[#allocation2 + $0x18] sm:$0xf] %vm935, %v901
      %943 = vst.msk [vmem:[#allocation2 + $0x1c] sm:$0xf] %vm935, %v902
      %944 = vst.msk [vmem:[#allocation2 + $0x20] sm:$0xf] %vm935, %v903
      %945 = vst.msk [vmem:[#allocation2 + $0x24] sm:$0xf] %vm935, %v904
      %946 = vst.msk [vmem:[#allocation2 + $0x28] sm:$0xf] %vm935, %v905
      %947 = vst.msk [vmem:[#allocation2 + $0x2c] sm:$0xf] %vm935, %v906
      %948 = vst.msk [vmem:[#allocation2 + $0x30] sm:$0xf] %vm935, %v907
      %949 = vst.msk [vmem:[#allocation2 + $0x34] sm:$0xf] %vm935, %v908
      %950 = vst.msk [vmem:[#allocation2 + $0x38] sm:$0xf] %vm935, %v909
      %951 = vst.msk [vmem:[#allocation2 + $0x3c] sm:$0xf] %vm935, %v910
      %952 = vst.msk [vmem:[#allocation2 + $0x40] sm:$0xf] %vm935, %v911
      %953 = vst.msk [vmem:[#allocation2 + $0x44] sm:$0xf] %vm935, %v912
      %954 = vst.msk [vmem:[#allocation2 + $0x48] sm:$0xf] %vm935, %v913
      %955 = vst.msk [vmem:[#allocation2 + $0x4c] sm:$0xf] %vm935, %v914
      %p956 = scmp.eq.s32.totalorder %s26, 0
      // Predicated region
      $region61: #{tpu_custom_call.1} parent=59 // pred_check
        %p957 = pneg %p956
      $region62: #{tpu_custom_call.1} parent=59 // pred_check_branch
        %959 = sbr.rel (%p957) target = $region64
      $region63: #{tpu_custom_call.1} parent=59 // pred_region
        %960 = vst.msk [vmem:[#allocation2] sm:$0xf] %vm935, 0
        %961 = vst.msk [vmem:[#allocation2 + $0x4] sm:$0xf] %vm935, 0
      $region64: #{tpu_custom_call.1} parent=59 // pred_fallthru
        _
      %p962 = scmp.eq.s32.totalorder %s26, 1
      // Predicated region
      $region65: #{tpu_custom_call.1} parent=59 // pred_check
        %p963 = pneg %p962
      $region66: #{tpu_custom_call.1} parent=59 // pred_check_branch
        %965 = sbr.rel (%p963) target = $region68
      $region67: #{tpu_custom_call.1} parent=59 // pred_region
        %966 = vst.msk [vmem:[#allocation2 + $0x48] sm:$0xf] %vm935, 0
        %967 = vst.msk [vmem:[#allocation2 + $0x4c] sm:$0xf] %vm935, 0
      $region68: #{tpu_custom_call.1} parent=59 // pred_fallthru
        _
      %v968 = vld [vmem:[#allocation2] sm:$0xf]
      %v969 = vld [vmem:[#allocation2 + $0x4] sm:$0xf]
      %v970 = vld [vmem:[#allocation2 + $0x8] sm:$0xf]
      %v971 = vld [vmem:[#allocation2 + $0xc] sm:$0xf]
      %v972 = vld [vmem:[#allocation2 + $0x10] sm:$0xf]
      %v973 = vld [vmem:[#allocation2 + $0x14] sm:$0xf]
      %v974 = vld [vmem:[#allocation2 + $0x18] sm:$0xf]
      %v975 = vld [vmem:[#allocation2 + $0x1c] sm:$0xf]
      %v976 = vld [vmem:[#allocation2 + $0x20] sm:$0xf]
      %v977 = vld [vmem:[#allocation2 + $0x24] sm:$0xf]
      %v978 = vld [vmem:[#allocation2 + $0x28] sm:$0xf]
      %v979 = vld [vmem:[#allocation2 + $0x2c] sm:$0xf]
      %v980 = vld [vmem:[#allocation2 + $0x30] sm:$0xf]
      %v981 = vld [vmem:[#allocation2 + $0x34] sm:$0xf]
      %v982 = vld [vmem:[#allocation2 + $0x38] sm:$0xf]
      %v983 = vld [vmem:[#allocation2 + $0x3c] sm:$0xf]
      %v984 = vld [vmem:[#allocation2 + $0x40] sm:$0xf]
      %v985 = vld [vmem:[#allocation2 + $0x44] sm:$0xf]
      %v986 = vld [vmem:[#allocation2 + $0x48] sm:$0xf]
      %v987 = vld [vmem:[#allocation2 + $0x4c] sm:$0xf]
      %v988 = vunpack.c.l.bf16 %v968
      %v989 = vunpack.c.l.bf16 %v969
      %v990 = vunpack.c.l.bf16 %v970
      %v991 = vunpack.c.l.bf16 %v971
      %v992 = vunpack.c.l.bf16 %v972
      %v993 = vunpack.c.l.bf16 %v973
      %v994 = vunpack.c.l.bf16 %v974
      %v995 = vunpack.c.l.bf16 %v975
      %v996 = vunpack.c.l.bf16 %v976
      %v997 = vunpack.c.l.bf16 %v977
      %v998 = vunpack.c.l.bf16 %v978
      %v999 = vunpack.c.l.bf16 %v979
      %v1000 = vunpack.c.l.bf16 %v980
      %v1001 = vunpack.c.l.bf16 %v981
      %v1002 = vunpack.c.l.bf16 %v982
      %v1003 = vunpack.c.l.bf16 %v983
      %v1004 = vunpack.c.l.bf16 %v984
      %v1005 = vunpack.c.l.bf16 %v985
      %v1006 = vunpack.c.l.bf16 %v986
      %v1007 = vunpack.c.l.bf16 %v987
      %v1008 = vlaneseq
      %v1009 = vshrl.u32 %v1008, 7
      %v1010 = vadd.s32 %v1009, 8
      %v1011 = vadd.s32 %v1009, 16
      %v1012 = vadd.s32 %v1009, 24
      %v1013 = vadd.s32 %v1009, 32
      %v1014 = vadd.s32 %v1009, 40
      %v1015 = vadd.s32 %v1009, 48
      %v1016 = vadd.s32 %v1009, 56
      %v1017 = vadd.s32 %v1009, 64
      %v1018 = vadd.s32 %v1009, 72
      %v1019 = vadd.s32 %v1009, 80
      %v1020 = vadd.s32 %v1009, 88
      %v1021 = vadd.s32 %v1009, 96
      %v1022 = vadd.s32 %v1009, 104
      %v1023 = vadd.s32 %v1009, 112
      %v1024 = vadd.s32 %v1009, 120
      %v1025 = vadd.s32 %v1009, 128
      %v1026 = vadd.s32 %v1009, 136
      %v1027 = vadd.s32 %v1009, 144
      %v1028 = vadd.s32 %v1009, 152
      %vm1029 = vcmp.lt.s32.totalorder %v1009, 0
      %v1030 = vsub.s32 0, %v1009
      %v1031 = vsel %vm1029, %v1030, %v1009
      %v1032 = vshrl.u32 %v1031, 4
      %v1033 = vand.u32 %v1031, 15
      %v1034 = vsub.s32 0, %v1033
      %v1035 = vsel %vm1029, %v1034, %v1033
      %vm1036 = vcmp.lt.s32.totalorder %v1010, 0
      %v1037 = vsub.s32 0, %v1010
      %v1038 = vsel %vm1036, %v1037, %v1010
      %v1039 = vshrl.u32 %v1038, 4
      %v1040 = vand.u32 %v1038, 15
      %v1041 = vsub.s32 0, %v1040
      %v1042 = vsel %vm1036, %v1041, %v1040
      %vm1043 = vcmp.lt.s32.totalorder %v1011, 0
      %v1044 = vsub.s32 0, %v1011
      %v1045 = vsel %vm1043, %v1044, %v1011
      %v1046 = vshrl.u32 %v1045, 4
      %v1047 = vand.u32 %v1045, 15
      %v1048 = vsub.s32 0, %v1047
      %v1049 = vsel %vm1043, %v1048, %v1047
      %vm1050 = vcmp.lt.s32.totalorder %v1012, 0
      %v1051 = vsub.s32 0, %v1012
      %v1052 = vsel %vm1050, %v1051, %v1012
      %v1053 = vshrl.u32 %v1052, 4
      %v1054 = vand.u32 %v1052, 15
      %v1055 = vsub.s32 0, %v1054
      %v1056 = vsel %vm1050, %v1055, %v1054
      %vm1057 = vcmp.lt.s32.totalorder %v1013, 0
      %v1058 = vsub.s32 0, %v1013
      %v1059 = vsel %vm1057, %v1058, %v1013
      %v1060 = vshrl.u32 %v1059, 4
      %v1061 = vand.u32 %v1059, 15
      %v1062 = vsub.s32 0, %v1061
      %v1063 = vsel %vm1057, %v1062, %v1061
      %vm1064 = vcmp.lt.s32.totalorder %v1014, 0
      %v1065 = vsub.s32 0, %v1014
      %v1066 = vsel %vm1064, %v1065, %v1014
      %v1067 = vshrl.u32 %v1066, 4
      %v1068 = vand.u32 %v1066, 15
      %v1069 = vsub.s32 0, %v1068
      %v1070 = vsel %vm1064, %v1069, %v1068
      %vm1071 = vcmp.lt.s32.totalorder %v1015, 0
      %v1072 = vsub.s32 0, %v1015
      %v1073 = vsel %vm1071, %v1072, %v1015
      %v1074 = vshrl.u32 %v1073, 4
      %v1075 = vand.u32 %v1073, 15
      %v1076 = vsub.s32 0, %v1075
      %v1077 = vsel %vm1071, %v1076, %v1075
      %vm1078 = vcmp.lt.s32.totalorder %v1016, 0
      %v1079 = vsub.s32 0, %v1016
      %v1080 = vsel %vm1078, %v1079, %v1016
      %v1081 = vshrl.u32 %v1080, 4
      %v1082 = vand.u32 %v1080, 15
      %v1083 = vsub.s32 0, %v1082
      %v1084 = vsel %vm1078, %v1083, %v1082
      %vm1085 = vcmp.lt.s32.totalorder %v1017, 0
      %v1086 = vsub.s32 0, %v1017
      %v1087 = vsel %vm1085, %v1086, %v1017
      %v1088 = vshrl.u32 %v1087, 4
      %v1089 = vand.u32 %v1087, 15
      %v1090 = vsub.s32 0, %v1089
      %v1091 = vsel %vm1085, %v1090, %v1089
      %vm1092 = vcmp.lt.s32.totalorder %v1018, 0
      %v1093 = vsub.s32 0, %v1018
      %v1094 = vsel %vm1092, %v1093, %v1018
      %v1095 = vshrl.u32 %v1094, 4
      %v1096 = vand.u32 %v1094, 15
      %v1097 = vsub.s32 0, %v1096
      %v1098 = vsel %vm1092, %v1097, %v1096
      %vm1099 = vcmp.lt.s32.totalorder %v1019, 0
      %v1100 = vsub.s32 0, %v1019
      %v1101 = vsel %vm1099, %v1100, %v1019
      %v1102 = vshrl.u32 %v1101, 4
      %v1103 = vand.u32 %v1101, 15
      %v1104 = vsub.s32 0, %v1103
      %v1105 = vsel %vm1099, %v1104, %v1103
      %vm1106 = vcmp.lt.s32.totalorder %v1020, 0
      %v1107 = vsub.s32 0, %v1020
      %v1108 = vsel %vm1106, %v1107, %v1020
      %v1109 = vshrl.u32 %v1108, 4
      %v1110 = vand.u32 %v1108, 15
      %v1111 = vsub.s32 0, %v1110
      %v1112 = vsel %vm1106, %v1111, %v1110
      %vm1113 = vcmp.lt.s32.totalorder %v1021, 0
      %v1114 = vsub.s32 0, %v1021
      %v1115 = vsel %vm1113, %v1114, %v1021
      %v1116 = vshrl.u32 %v1115, 4
      %v1117 = vand.u32 %v1115, 15
      %v1118 = vsub.s32 0, %v1117
      %v1119 = vsel %vm1113, %v1118, %v1117
      %vm1120 = vcmp.lt.s32.totalorder %v1022, 0
      %v1121 = vsub.s32 0, %v1022
      %v1122 = vsel %vm1120, %v1121, %v1022
      %v1123 = vshrl.u32 %v1122, 4
      %v1124 = vand.u32 %v1122, 15
      %v1125 = vsub.s32 0, %v1124
      %v1126 = vsel %vm1120, %v1125, %v1124
      %vm1127 = vcmp.lt.s32.totalorder %v1023, 0
      %v1128 = vsub.s32 0, %v1023
      %v1129 = vsel %vm1127, %v1128, %v1023
      %v1130 = vshrl.u32 %v1129, 4
      %v1131 = vand.u32 %v1129, 15
      %v1132 = vsub.s32 0, %v1131
      %v1133 = vsel %vm1127, %v1132, %v1131
      %vm1134 = vcmp.lt.s32.totalorder %v1024, 0
      %v1135 = vsub.s32 0, %v1024
      %v1136 = vsel %vm1134, %v1135, %v1024
      %v1137 = vshrl.u32 %v1136, 4
      %v1138 = vand.u32 %v1136, 15
      %v1139 = vsub.s32 0, %v1138
      %v1140 = vsel %vm1134, %v1139, %v1138
      %vm1141 = vcmp.lt.s32.totalorder %v1025, 0
      %v1142 = vsub.s32 0, %v1025
      %v1143 = vsel %vm1141, %v1142, %v1025
      %v1144 = vshrl.u32 %v1143, 4
      %v1145 = vand.u32 %v1143, 15
      %v1146 = vsub.s32 0, %v1145
      %v1147 = vsel %vm1141, %v1146, %v1145
      %vm1148 = vcmp.lt.s32.totalorder %v1026, 0
      %v1149 = vsub.s32 0, %v1026
      %v1150 = vsel %vm1148, %v1149, %v1026
      %v1151 = vshrl.u32 %v1150, 4
      %v1152 = vand.u32 %v1150, 15
      %v1153 = vsub.s32 0, %v1152
      %v1154 = vsel %vm1148, %v1153, %v1152
      %vm1155 = vcmp.lt.s32.totalorder %v1027, 0
      %v1156 = vsub.s32 0, %v1027
      %v1157 = vsel %vm1155, %v1156, %v1027
      %v1158 = vshrl.u32 %v1157, 4
      %v1159 = vand.u32 %v1157, 15
      %v1160 = vsub.s32 0, %v1159
      %v1161 = vsel %vm1155, %v1160, %v1159
      %vm1162 = vcmp.lt.s32.totalorder %v1028, 0
      %v1163 = vsub.s32 0, %v1028
      %v1164 = vsel %vm1162, %v1163, %v1028
      %v1165 = vshrl.u32 %v1164, 4
      %v1166 = vand.u32 %v1164, 15
      %v1167 = vsub.s32 0, %v1166
      %v1168 = vsel %vm1162, %v1167, %v1166
      %vm1169 = vcmp.ne.s32.totalorder %v1035, 0
      %vm1170 = vcmp.ne.s32.totalorder %v1042, 0
      %vm1171 = vcmp.ne.s32.totalorder %v1049, 0
      %vm1172 = vcmp.ne.s32.totalorder %v1056, 0
      %vm1173 = vcmp.ne.s32.totalorder %v1063, 0
      %vm1174 = vcmp.ne.s32.totalorder %v1070, 0
      %vm1175 = vcmp.ne.s32.totalorder %v1077, 0
      %vm1176 = vcmp.ne.s32.totalorder %v1084, 0
      %vm1177 = vcmp.ne.s32.totalorder %v1091, 0
      %vm1178 = vcmp.ne.s32.totalorder %v1098, 0
      %vm1179 = vcmp.ne.s32.totalorder %v1105, 0
      %vm1180 = vcmp.ne.s32.totalorder %v1112, 0
      %vm1181 = vcmp.ne.s32.totalorder %v1119, 0
      %vm1182 = vcmp.ne.s32.totalorder %v1126, 0
      %vm1183 = vcmp.ne.s32.totalorder %v1133, 0
      %vm1184 = vcmp.ne.s32.totalorder %v1140, 0
      %vm1185 = vcmp.ne.s32.totalorder %v1147, 0
      %vm1186 = vcmp.ne.s32.totalorder %v1154, 0
      %vm1187 = vcmp.ne.s32.totalorder %v1161, 0
      %vm1188 = vcmp.ne.s32.totalorder %v1168, 0
      %vm1189 = vcmp.lt.s32.totalorder %v1035, 0
      %vm1190 = vcmp.lt.s32.totalorder %v1042, 0
      %vm1191 = vcmp.lt.s32.totalorder %v1049, 0
      %vm1192 = vcmp.lt.s32.totalorder %v1056, 0
      %vm1193 = vcmp.lt.s32.totalorder %v1063, 0
      %vm1194 = vcmp.lt.s32.totalorder %v1070, 0
      %vm1195 = vcmp.lt.s32.totalorder %v1077, 0
      %vm1196 = vcmp.lt.s32.totalorder %v1084, 0
      %vm1197 = vcmp.lt.s32.totalorder %v1091, 0
      %vm1198 = vcmp.lt.s32.totalorder %v1098, 0
      %vm1199 = vcmp.lt.s32.totalorder %v1105, 0
      %vm1200 = vcmp.lt.s32.totalorder %v1112, 0
      %vm1201 = vcmp.lt.s32.totalorder %v1119, 0
      %vm1202 = vcmp.lt.s32.totalorder %v1126, 0
      %vm1203 = vcmp.lt.s32.totalorder %v1133, 0
      %vm1204 = vcmp.lt.s32.totalorder %v1140, 0
      %vm1205 = vcmp.lt.s32.totalorder %v1147, 0
      %vm1206 = vcmp.lt.s32.totalorder %v1154, 0
      %vm1207 = vcmp.lt.s32.totalorder %v1161, 0
      %vm1208 = vcmp.lt.s32.totalorder %v1168, 0
      %vm1209 = vmand %vm1189, %vm1169
      %vm1210 = vmand %vm1190, %vm1170
      %vm1211 = vmand %vm1191, %vm1171
      %vm1212 = vmand %vm1192, %vm1172
      %vm1213 = vmand %vm1193, %vm1173
      %vm1214 = vmand %vm1194, %vm1174
      %vm1215 = vmand %vm1195, %vm1175
      %vm1216 = vmand %vm1196, %vm1176
      %vm1217 = vmand %vm1197, %vm1177
      %vm1218 = vmand %vm1198, %vm1178
      %vm1219 = vmand %vm1199, %vm1179
      %vm1220 = vmand %vm1200, %vm1180
      %vm1221 = vmand %vm1201, %vm1181
      %vm1222 = vmand %vm1202, %vm1182
      %vm1223 = vmand %vm1203, %vm1183
      %vm1224 = vmand %vm1204, %vm1184
      %vm1225 = vmand %vm1205, %vm1185
      %vm1226 = vmand %vm1206, %vm1186
      %vm1227 = vmand %vm1207, %vm1187
      %vm1228 = vmand %vm1208, %vm1188
      %v1229 = vadd.s32 %v1035, 16
      %v1230 = vadd.s32 %v1042, 16
      %v1231 = vadd.s32 %v1049, 16
      %v1232 = vadd.s32 %v1056, 16
      %v1233 = vadd.s32 %v1063, 16
      %v1234 = vadd.s32 %v1070, 16
      %v1235 = vadd.s32 %v1077, 16
      %v1236 = vadd.s32 %v1084, 16
      %v1237 = vadd.s32 %v1091, 16
      %v1238 = vadd.s32 %v1098, 16
      %v1239 = vadd.s32 %v1105, 16
      %v1240 = vadd.s32 %v1112, 16
      %v1241 = vadd.s32 %v1119, 16
      %v1242 = vadd.s32 %v1126, 16
      %v1243 = vadd.s32 %v1133, 16
      %v1244 = vadd.s32 %v1140, 16
      %v1245 = vadd.s32 %v1147, 16
      %v1246 = vadd.s32 %v1154, 16
      %v1247 = vadd.s32 %v1161, 16
      %v1248 = vadd.s32 %v1168, 16
      %v1249 = vsel %vm1209, %v1229, %v1035
      %v1250 = vsel %vm1210, %v1230, %v1042
      %v1251 = vsel %vm1211, %v1231, %v1049
      %v1252 = vsel %vm1212, %v1232, %v1056
      %v1253 = vsel %vm1213, %v1233, %v1063
      %v1254 = vsel %vm1214, %v1234, %v1070
      %v1255 = vsel %vm1215, %v1235, %v1077
      %v1256 = vsel %vm1216, %v1236, %v1084
      %v1257 = vsel %vm1217, %v1237, %v1091
      %v1258 = vsel %vm1218, %v1238, %v1098
      %v1259 = vsel %vm1219, %v1239, %v1105
      %v1260 = vsel %vm1220, %v1240, %v1112
      %v1261 = vsel %vm1221, %v1241, %v1119
      %v1262 = vsel %vm1222, %v1242, %v1126
      %v1263 = vsel %vm1223, %v1243, %v1133
      %v1264 = vsel %vm1224, %v1244, %v1140
      %v1265 = vsel %vm1225, %v1245, %v1147
      %v1266 = vsel %vm1226, %v1246, %v1154
      %v1267 = vsel %vm1227, %v1247, %v1161
      %v1268 = vsel %vm1228, %v1248, %v1168
      %vm1269 = vcmp.gt.s32.totalorder %v1249, 0
      %vm1270 = vcmp.gt.s32.totalorder %v1250, 0
      %vm1271 = vcmp.gt.s32.totalorder %v1251, 0
      %vm1272 = vcmp.gt.s32.totalorder %v1252, 0
      %vm1273 = vcmp.gt.s32.totalorder %v1253, 0
      %vm1274 = vcmp.gt.s32.totalorder %v1254, 0
      %vm1275 = vcmp.gt.s32.totalorder %v1255, 0
      %vm1276 = vcmp.gt.s32.totalorder %v1256, 0
      %vm1277 = vcmp.gt.s32.totalorder %v1257, 0
      %vm1278 = vcmp.gt.s32.totalorder %v1258, 0
      %vm1279 = vcmp.gt.s32.totalorder %v1259, 0
      %vm1280 = vcmp.gt.s32.totalorder %v1260, 0
      %vm1281 = vcmp.gt.s32.totalorder %v1261, 0
      %vm1282 = vcmp.gt.s32.totalorder %v1262, 0
      %vm1283 = vcmp.gt.s32.totalorder %v1263, 0
      %vm1284 = vcmp.gt.s32.totalorder %v1264, 0
      %vm1285 = vcmp.gt.s32.totalorder %v1265, 0
      %vm1286 = vcmp.gt.s32.totalorder %v1266, 0
      %vm1287 = vcmp.gt.s32.totalorder %v1267, 0
      %vm1288 = vcmp.gt.s32.totalorder %v1268, 0
      %v1289 = vsel %vm1269, 1, 0
      %v1290 = vsel %vm1270, 1, 0
      %v1291 = vsel %vm1271, 1, 0
      %v1292 = vsel %vm1272, 1, 0
      %v1293 = vsel %vm1273, 1, 0
      %v1294 = vsel %vm1274, 1, 0
      %v1295 = vsel %vm1275, 1, 0
      %v1296 = vsel %vm1276, 1, 0
      %v1297 = vsel %vm1277, 1, 0
      %v1298 = vsel %vm1278, 1, 0
      %v1299 = vsel %vm1279, 1, 0
      %v1300 = vsel %vm1280, 1, 0
      %v1301 = vsel %vm1281, 1, 0
      %v1302 = vsel %vm1282, 1, 0
      %v1303 = vsel %vm1283, 1, 0
      %v1304 = vsel %vm1284, 1, 0
      %v1305 = vsel %vm1285, 1, 0
      %v1306 = vsel %vm1286, 1, 0
      %v1307 = vsel %vm1287, 1, 0
      %v1308 = vsel %vm1288, 1, 0
      %v1309 = vcvt.s32.f32 %v1289
      %v1310 = vcvt.s32.f32 %v1290
      %v1311 = vcvt.s32.f32 %v1291
      %v1312 = vcvt.s32.f32 %v1292
      %v1313 = vcvt.s32.f32 %v1293
      %v1314 = vcvt.s32.f32 %v1294
      %v1315 = vcvt.s32.f32 %v1295
      %v1316 = vcvt.s32.f32 %v1296
      %v1317 = vcvt.s32.f32 %v1297
      %v1318 = vcvt.s32.f32 %v1298
      %v1319 = vcvt.s32.f32 %v1299
      %v1320 = vcvt.s32.f32 %v1300
      %v1321 = vcvt.s32.f32 %v1301
      %v1322 = vcvt.s32.f32 %v1302
      %v1323 = vcvt.s32.f32 %v1303
      %v1324 = vcvt.s32.f32 %v1304
      %v1325 = vcvt.s32.f32 %v1305
      %v1326 = vcvt.s32.f32 %v1306
      %v1327 = vcvt.s32.f32 %v1307
      %v1328 = vcvt.s32.f32 %v1308
      %vm1329 = vcmp.lt.s32.totalorder %v1249, 15
      %vm1330 = vcmp.lt.s32.totalorder %v1250, 15
      %vm1331 = vcmp.lt.s32.totalorder %v1251, 15
      %vm1332 = vcmp.lt.s32.totalorder %v1252, 15
      %vm1333 = vcmp.lt.s32.totalorder %v1253, 15
      %vm1334 = vcmp.lt.s32.totalorder %v1254, 15
      %vm1335 = vcmp.lt.s32.totalorder %v1255, 15
      %vm1336 = vcmp.lt.s32.totalorder %v1256, 15
      %vm1337 = vcmp.lt.s32.totalorder %v1257, 15
      %vm1338 = vcmp.lt.s32.totalorder %v1258, 15
      %vm1339 = vcmp.lt.s32.totalorder %v1259, 15
      %vm1340 = vcmp.lt.s32.totalorder %v1260, 15
      %vm1341 = vcmp.lt.s32.totalorder %v1261, 15
      %vm1342 = vcmp.lt.s32.totalorder %v1262, 15
      %vm1343 = vcmp.lt.s32.totalorder %v1263, 15
      %vm1344 = vcmp.lt.s32.totalorder %v1264, 15
      %vm1345 = vcmp.lt.s32.totalorder %v1265, 15
      %vm1346 = vcmp.lt.s32.totalorder %v1266, 15
      %vm1347 = vcmp.lt.s32.totalorder %v1267, 15
      %vm1348 = vcmp.lt.s32.totalorder %v1268, 15
      %v1349 = vsel %vm1329, 1, 0
      %v1350 = vsel %vm1330, 1, 0
      %v1351 = vsel %vm1331, 1, 0
      %v1352 = vsel %vm1332, 1, 0
      %v1353 = vsel %vm1333, 1, 0
      %v1354 = vsel %vm1334, 1, 0
      %v1355 = vsel %vm1335, 1, 0
      %v1356 = vsel %vm1336, 1, 0
      %v1357 = vsel %vm1337, 1, 0
      %v1358 = vsel %vm1338, 1, 0
      %v1359 = vsel %vm1339, 1, 0
      %v1360 = vsel %vm1340, 1, 0
      %v1361 = vsel %vm1341, 1, 0
      %v1362 = vsel %vm1342, 1, 0
      %v1363 = vsel %vm1343, 1, 0
      %v1364 = vsel %vm1344, 1, 0
      %v1365 = vsel %vm1345, 1, 0
      %v1366 = vsel %vm1346, 1, 0
      %v1367 = vsel %vm1347, 1, 0
      %v1368 = vsel %vm1348, 1, 0
      %v1369 = vcvt.s32.f32 %v1349
      %v1370 = vcvt.s32.f32 %v1350
      %v1371 = vcvt.s32.f32 %v1351
      %v1372 = vcvt.s32.f32 %v1352
      %v1373 = vcvt.s32.f32 %v1353
      %v1374 = vcvt.s32.f32 %v1354
      %v1375 = vcvt.s32.f32 %v1355
      %v1376 = vcvt.s32.f32 %v1356
      %v1377 = vcvt.s32.f32 %v1357
      %v1378 = vcvt.s32.f32 %v1358
      %v1379 = vcvt.s32.f32 %v1359
      %v1380 = vcvt.s32.f32 %v1360
      %v1381 = vcvt.s32.f32 %v1361
      %v1382 = vcvt.s32.f32 %v1362
      %v1383 = vcvt.s32.f32 %v1363
      %v1384 = vcvt.s32.f32 %v1364
      %v1385 = vcvt.s32.f32 %v1365
      %v1386 = vcvt.s32.f32 %v1366
      %v1387 = vcvt.s32.f32 %v1367
      %v1388 = vcvt.s32.f32 %v1368
      %v1389 = vld [vmem:[%s5] sm:$0xff]
      %v1390 = vld [vmem:[%s5 + $0x8] sm:$0x1]
      %v1391 = vrot.slane %v988, 7
      %v1392 = vrot.slane %v989, 7
      %v1393 = vrot.slane %v990, 7
      %v1394 = vrot.slane %v991, 7
      %v1395 = vrot.slane %v992, 7
      %v1396 = vrot.slane %v993, 7
      %v1397 = vrot.slane %v994, 7
      %v1398 = vrot.slane %v995, 7
      %v1399 = vrot.slane %v996, 7
      %v1400 = vrot.slane %v997, 7
      %v1401 = vrot.slane %v998, 7
      %v1402 = vrot.slane %v999, 7
      %v1403 = vrot.slane %v1000, 7
      %v1404 = vrot.slane %v1001, 7
      %v1405 = vrot.slane %v1002, 7
      %v1406 = vrot.slane %v1003, 7
      %v1407 = vrot.slane %v1004, 7
      %v1408 = vrot.slane %v1005, 7
      %v1409 = vrot.slane %v1006, 7
      %v1410 = vrot.slane %v1007, 7
      %vm1411 = vcmp.lt.s32.totalorder %v1009, 1
      %v1412 = vsel %vm1411, %v1409, %v1410
      %v1413 = vsel %vm1411, %v1408, %v1409
      %v1414 = vsel %vm1411, %v1407, %v1408
      %v1415 = vsel %vm1411, %v1406, %v1407
      %v1416 = vsel %vm1411, %v1405, %v1406
      %v1417 = vsel %vm1411, %v1404, %v1405
      %v1418 = vsel %vm1411, %v1403, %v1404
      %v1419 = vsel %vm1411, %v1402, %v1403
      %v1420 = vsel %vm1411, %v1401, %v1402
      %v1421 = vsel %vm1411, %v1400, %v1401
      %v1422 = vsel %vm1411, %v1399, %v1400
      %v1423 = vsel %vm1411, %v1398, %v1399
      %v1424 = vsel %vm1411, %v1397, %v1398
      %v1425 = vsel %vm1411, %v1396, %v1397
      %v1426 = vsel %vm1411, %v1395, %v1396
      %v1427 = vsel %vm1411, %v1394, %v1395
      %v1428 = vsel %vm1411, %v1393, %v1394
      %v1429 = vsel %vm1411, %v1392, %v1393
      %v1430 = vsel %vm1411, %v1391, %v1392
      %v1431 = vsel %vm1411, %v1410, %v1391
      %v1432 = vmul.f32 %v1431, %v1309
      %v1433 = vmul.f32 %v1430, %v1310
      %v1434 = vmul.f32 %v1429, %v1311
      %v1435 = vmul.f32 %v1428, %v1312
      %v1436 = vmul.f32 %v1427, %v1313
      %v1437 = vmul.f32 %v1426, %v1314
      %v1438 = vmul.f32 %v1425, %v1315
      %v1439 = vmul.f32 %v1424, %v1316
      %v1440 = vmul.f32 %v1423, %v1317
      %v1441 = vmul.f32 %v1422, %v1318
      %v1442 = vmul.f32 %v1421, %v1319
      %v1443 = vmul.f32 %v1420, %v1320
      %v1444 = vmul.f32 %v1419, %v1321
      %v1445 = vmul.f32 %v1418, %v1322
      %v1446 = vmul.f32 %v1417, %v1323
      %v1447 = vmul.f32 %v1416, %v1324
      %v1448 = vmul.f32 %v1415, %v1325
      %v1449 = vmul.f32 %v1414, %v1326
      %v1450 = vmul.f32 %v1413, %v1327
      %v1451 = vmul.f32 %v1412, %v1328
      %v1452 = vlaneseq
      %v1453 = vshrl.u32 %v1452, 7
      %v1454 = vsub.s32 0, %v1453
      %v1455 = vrot.slane %v1389, %v1454
      %v1456 = vmul.f32 %v1432, %v1455
      %v1457 = vmul.f32 %v1433, %v1455
      %v1458 = vmul.f32 %v1434, %v1455
      %v1459 = vmul.f32 %v1435, %v1455
      %v1460 = vmul.f32 %v1436, %v1455
      %v1461 = vmul.f32 %v1437, %v1455
      %v1462 = vmul.f32 %v1438, %v1455
      %v1463 = vmul.f32 %v1439, %v1455
      %v1464 = vmul.f32 %v1440, %v1455
      %v1465 = vmul.f32 %v1441, %v1455
      %v1466 = vmul.f32 %v1442, %v1455
      %v1467 = vmul.f32 %v1443, %v1455
      %v1468 = vmul.f32 %v1444, %v1455
      %v1469 = vmul.f32 %v1445, %v1455
      %v1470 = vmul.f32 %v1446, %v1455
      %v1471 = vmul.f32 %v1447, %v1455
      %v1472 = vadd.f32 %v1456, 0.0
      %v1473 = vadd.f32 %v1457, 0.0
      %v1474 = vadd.f32 %v1458, 0.0
      %v1475 = vadd.f32 %v1459, 0.0
      %v1476 = vadd.f32 %v1460, 0.0
      %v1477 = vadd.f32 %v1461, 0.0
      %v1478 = vadd.f32 %v1462, 0.0
      %v1479 = vadd.f32 %v1463, 0.0
      %v1480 = vadd.f32 %v1464, 0.0
      %v1481 = vadd.f32 %v1465, 0.0
      %v1482 = vadd.f32 %v1466, 0.0
      %v1483 = vadd.f32 %v1467, 0.0
      %v1484 = vadd.f32 %v1468, 0.0
      %v1485 = vadd.f32 %v1469, 0.0
      %v1486 = vadd.f32 %v1470, 0.0
      %v1487 = vadd.f32 %v1471, 0.0
      %v1488 = vlaneseq
      %v1489 = vshrl.u32 %v1488, 7
      %v1490 = vsub.s32 3, %v1489
      %v1491 = vrot.slane %v1389, %v1490
      %v1492 = vmul.f32 %v1434, %v1491
      %v1493 = vmul.f32 %v1435, %v1491
      %v1494 = vmul.f32 %v1436, %v1491
      %v1495 = vmul.f32 %v1437, %v1491
      %v1496 = vmul.f32 %v1438, %v1491
      %v1497 = vmul.f32 %v1439, %v1491
      %v1498 = vmul.f32 %v1440, %v1491
      %v1499 = vmul.f32 %v1441, %v1491
      %v1500 = vmul.f32 %v1442, %v1491
      %v1501 = vmul.f32 %v1443, %v1491
      %v1502 = vmul.f32 %v1444, %v1491
      %v1503 = vmul.f32 %v1445, %v1491
      %v1504 = vmul.f32 %v1446, %v1491
      %v1505 = vmul.f32 %v1447, %v1491
      %v1506 = vmul.f32 %v1448, %v1491
      %v1507 = vmul.f32 %v1449, %v1491
      %v1508 = vadd.f32 %v1472, %v1492
      %v1509 = vadd.f32 %v1473, %v1493
      %v1510 = vadd.f32 %v1474, %v1494
      %v1511 = vadd.f32 %v1475, %v1495
      %v1512 = vadd.f32 %v1476, %v1496
      %v1513 = vadd.f32 %v1477, %v1497
      %v1514 = vadd.f32 %v1478, %v1498
      %v1515 = vadd.f32 %v1479, %v1499
      %v1516 = vadd.f32 %v1480, %v1500
      %v1517 = vadd.f32 %v1481, %v1501
      %v1518 = vadd.f32 %v1482, %v1502
      %v1519 = vadd.f32 %v1483, %v1503
      %v1520 = vadd.f32 %v1484, %v1504
      %v1521 = vadd.f32 %v1485, %v1505
      %v1522 = vadd.f32 %v1486, %v1506
      %v1523 = vadd.f32 %v1487, %v1507
      %v1524 = vlaneseq
      %v1525 = vshrl.u32 %v1524, 7
      %v1526 = vsub.s32 6, %v1525
      %v1527 = vrot.slane %v1389, %v1526
      %v1528 = vmul.f32 %v1436, %v1527
      %v1529 = vmul.f32 %v1437, %v1527
      %v1530 = vmul.f32 %v1438, %v1527
      %v1531 = vmul.f32 %v1439, %v1527
      %v1532 = vmul.f32 %v1440, %v1527
      %v1533 = vmul.f32 %v1441, %v1527
      %v1534 = vmul.f32 %v1442, %v1527
      %v1535 = vmul.f32 %v1443, %v1527
      %v1536 = vmul.f32 %v1444, %v1527
      %v1537 = vmul.f32 %v1445, %v1527
      %v1538 = vmul.f32 %v1446, %v1527
      %v1539 = vmul.f32 %v1447, %v1527
      %v1540 = vmul.f32 %v1448, %v1527
      %v1541 = vmul.f32 %v1449, %v1527
      %v1542 = vmul.f32 %v1450, %v1527
      %v1543 = vmul.f32 %v1451, %v1527
      %v1544 = vadd.f32 %v1508, %v1528
      %v1545 = vadd.f32 %v1509, %v1529
      %v1546 = vadd.f32 %v1510, %v1530
      %v1547 = vadd.f32 %v1511, %v1531
      %v1548 = vadd.f32 %v1512, %v1532
      %v1549 = vadd.f32 %v1513, %v1533
      %v1550 = vadd.f32 %v1514, %v1534
      %v1551 = vadd.f32 %v1515, %v1535
      %v1552 = vadd.f32 %v1516, %v1536
      %v1553 = vadd.f32 %v1517, %v1537
      %v1554 = vadd.f32 %v1518, %v1538
      %v1555 = vadd.f32 %v1519, %v1539
      %v1556 = vadd.f32 %v1520, %v1540
      %v1557 = vadd.f32 %v1521, %v1541
      %v1558 = vadd.f32 %v1522, %v1542
      %v1559 = vadd.f32 %v1523, %v1543
      %v1560 = vlaneseq
      %v1561 = vshrl.u32 %v1560, 7
      %v1562 = vsub.s32 1, %v1561
      %v1563 = vrot.slane %v1389, %v1562
      %v1564 = vmul.f32 %v988, %v1563
      %v1565 = vmul.f32 %v989, %v1563
      %v1566 = vmul.f32 %v990, %v1563
      %v1567 = vmul.f32 %v991, %v1563
      %v1568 = vmul.f32 %v992, %v1563
      %v1569 = vmul.f32 %v993, %v1563
      %v1570 = vmul.f32 %v994, %v1563
      %v1571 = vmul.f32 %v995, %v1563
      %v1572 = vmul.f32 %v996, %v1563
      %v1573 = vmul.f32 %v997, %v1563
      %v1574 = vmul.f32 %v998, %v1563
      %v1575 = vmul.f32 %v999, %v1563
      %v1576 = vmul.f32 %v1000, %v1563
      %v1577 = vmul.f32 %v1001, %v1563
      %v1578 = vmul.f32 %v1002, %v1563
      %v1579 = vmul.f32 %v1003, %v1563
      %v1580 = vadd.f32 %v1544, %v1564
      %v1581 = vadd.f32 %v1545, %v1565
      %v1582 = vadd.f32 %v1546, %v1566
      %v1583 = vadd.f32 %v1547, %v1567
      %v1584 = vadd.f32 %v1548, %v1568
      %v1585 = vadd.f32 %v1549, %v1569
      %v1586 = vadd.f32 %v1550, %v1570
      %v1587 = vadd.f32 %v1551, %v1571
      %v1588 = vadd.f32 %v1552, %v1572
      %v1589 = vadd.f32 %v1553, %v1573
      %v1590 = vadd.f32 %v1554, %v1574
      %v1591 = vadd.f32 %v1555, %v1575
      %v1592 = vadd.f32 %v1556, %v1576
      %v1593 = vadd.f32 %v1557, %v1577
      %v1594 = vadd.f32 %v1558, %v1578
      %v1595 = vadd.f32 %v1559, %v1579
      %v1596 = vlaneseq
      %v1597 = vshrl.u32 %v1596, 7
      %v1598 = vsub.s32 4, %v1597
      %v1599 = vrot.slane %v1389, %v1598
      %v1600 = vmul.f32 %v990, %v1599
      %v1601 = vmul.f32 %v991, %v1599
      %v1602 = vmul.f32 %v992, %v1599
      %v1603 = vmul.f32 %v993, %v1599
      %v1604 = vmul.f32 %v994, %v1599
      %v1605 = vmul.f32 %v995, %v1599
      %v1606 = vmul.f32 %v996, %v1599
      %v1607 = vmul.f32 %v997, %v1599
      %v1608 = vmul.f32 %v998, %v1599
      %v1609 = vmul.f32 %v999, %v1599
      %v1610 = vmul.f32 %v1000, %v1599
      %v1611 = vmul.f32 %v1001, %v1599
      %v1612 = vmul.f32 %v1002, %v1599
      %v1613 = vmul.f32 %v1003, %v1599
      %v1614 = vmul.f32 %v1004, %v1599
      %v1615 = vmul.f32 %v1005, %v1599
      %v1616 = vadd.f32 %v1580, %v1600
      %v1617 = vadd.f32 %v1581, %v1601
      %v1618 = vadd.f32 %v1582, %v1602
      %v1619 = vadd.f32 %v1583, %v1603
      %v1620 = vadd.f32 %v1584, %v1604
      %v1621 = vadd.f32 %v1585, %v1605
      %v1622 = vadd.f32 %v1586, %v1606
      %v1623 = vadd.f32 %v1587, %v1607
      %v1624 = vadd.f32 %v1588, %v1608
      %v1625 = vadd.f32 %v1589, %v1609
      %v1626 = vadd.f32 %v1590, %v1610
      %v1627 = vadd.f32 %v1591, %v1611
      %v1628 = vadd.f32 %v1592, %v1612
      %v1629 = vadd.f32 %v1593, %v1613
      %v1630 = vadd.f32 %v1594, %v1614
      %v1631 = vadd.f32 %v1595, %v1615
      %v1632 = vlaneseq
      %v1633 = vshrl.u32 %v1632, 7
      %v1634 = vsub.s32 7, %v1633
      %v1635 = vrot.slane %v1389, %v1634
      %v1636 = vmul.f32 %v992, %v1635
      %v1637 = vmul.f32 %v993, %v1635
      %v1638 = vmul.f32 %v994, %v1635
      %v1639 = vmul.f32 %v995, %v1635
      %v1640 = vmul.f32 %v996, %v1635
      %v1641 = vmul.f32 %v997, %v1635
      %v1642 = vmul.f32 %v998, %v1635
      %v1643 = vmul.f32 %v999, %v1635
      %v1644 = vmul.f32 %v1000, %v1635
      %v1645 = vmul.f32 %v1001, %v1635
      %v1646 = vmul.f32 %v1002, %v1635
      %v1647 = vmul.f32 %v1003, %v1635
      %v1648 = vmul.f32 %v1004, %v1635
      %v1649 = vmul.f32 %v1005, %v1635
      %v1650 = vmul.f32 %v1006, %v1635
      %v1651 = vmul.f32 %v1007, %v1635
      %v1652 = vadd.f32 %v1616, %v1636
      %v1653 = vadd.f32 %v1617, %v1637
      %v1654 = vadd.f32 %v1618, %v1638
      %v1655 = vadd.f32 %v1619, %v1639
      %v1656 = vadd.f32 %v1620, %v1640
      %v1657 = vadd.f32 %v1621, %v1641
      %v1658 = vadd.f32 %v1622, %v1642
      %v1659 = vadd.f32 %v1623, %v1643
      %v1660 = vadd.f32 %v1624, %v1644
      %v1661 = vadd.f32 %v1625, %v1645
      %v1662 = vadd.f32 %v1626, %v1646
      %v1663 = vadd.f32 %v1627, %v1647
      %v1664 = vadd.f32 %v1628, %v1648
      %v1665 = vadd.f32 %v1629, %v1649
      %v1666 = vadd.f32 %v1630, %v1650
      %v1667 = vadd.f32 %v1631, %v1651
      %v1668 = vrot.slane %v988, 1
      %v1669 = vrot.slane %v989, 1
      %v1670 = vrot.slane %v990, 1
      %v1671 = vrot.slane %v991, 1
      %v1672 = vrot.slane %v992, 1
      %v1673 = vrot.slane %v993, 1
      %v1674 = vrot.slane %v994, 1
      %v1675 = vrot.slane %v995, 1
      %v1676 = vrot.slane %v996, 1
      %v1677 = vrot.slane %v997, 1
      %v1678 = vrot.slane %v998, 1
      %v1679 = vrot.slane %v999, 1
      %v1680 = vrot.slane %v1000, 1
      %v1681 = vrot.slane %v1001, 1
      %v1682 = vrot.slane %v1002, 1
      %v1683 = vrot.slane %v1003, 1
      %v1684 = vrot.slane %v1004, 1
      %v1685 = vrot.slane %v1005, 1
      %v1686 = vrot.slane %v1006, 1
      %v1687 = vrot.slane %v1007, 1
      %vm1688 = vcmp.lt.s32.totalorder %v1009, 7
      %v1689 = vsel %vm1688, %v1686, %v1687
      %v1690 = vsel %vm1688, %v1685, %v1686
      %v1691 = vsel %vm1688, %v1684, %v1685
      %v1692 = vsel %vm1688, %v1683, %v1684
      %v1693 = vsel %vm1688, %v1682, %v1683
      %v1694 = vsel %vm1688, %v1681, %v1682
      %v1695 = vsel %vm1688, %v1680, %v1681
      %v1696 = vsel %vm1688, %v1679, %v1680
      %v1697 = vsel %vm1688, %v1678, %v1679
      %v1698 = vsel %vm1688, %v1677, %v1678
      %v1699 = vsel %vm1688, %v1676, %v1677
      %v1700 = vsel %vm1688, %v1675, %v1676
      %v1701 = vsel %vm1688, %v1674, %v1675
      %v1702 = vsel %vm1688, %v1673, %v1674
      %v1703 = vsel %vm1688, %v1672, %v1673
      %v1704 = vsel %vm1688, %v1671, %v1672
      %v1705 = vsel %vm1688, %v1670, %v1671
      %v1706 = vsel %vm1688, %v1669, %v1670
      %v1707 = vsel %vm1688, %v1668, %v1669
      %v1708 = vsel %vm1688, %v1687, %v1668
      %v1709 = vmul.f32 %v1707, %v1369
      %v1710 = vmul.f32 %v1706, %v1370
      %v1711 = vmul.f32 %v1705, %v1371
      %v1712 = vmul.f32 %v1704, %v1372
      %v1713 = vmul.f32 %v1703, %v1373
      %v1714 = vmul.f32 %v1702, %v1374
      %v1715 = vmul.f32 %v1701, %v1375
      %v1716 = vmul.f32 %v1700, %v1376
      %v1717 = vmul.f32 %v1699, %v1377
      %v1718 = vmul.f32 %v1698, %v1378
      %v1719 = vmul.f32 %v1697, %v1379
      %v1720 = vmul.f32 %v1696, %v1380
      %v1721 = vmul.f32 %v1695, %v1381
      %v1722 = vmul.f32 %v1694, %v1382
      %v1723 = vmul.f32 %v1693, %v1383
      %v1724 = vmul.f32 %v1692, %v1384
      %v1725 = vmul.f32 %v1691, %v1385
      %v1726 = vmul.f32 %v1690, %v1386
      %v1727 = vmul.f32 %v1689, %v1387
      %v1728 = vmul.f32 %v1708, %v1388
      %v1729 = vlaneseq
      %v1730 = vshrl.u32 %v1729, 7
      %v1731 = vsub.s32 2, %v1730
      %v1732 = vrot.slane %v1389, %v1731
      %v1733 = vmul.f32 %v1709, %v1732
      %v1734 = vmul.f32 %v1710, %v1732
      %v1735 = vmul.f32 %v1711, %v1732
      %v1736 = vmul.f32 %v1712, %v1732
      %v1737 = vmul.f32 %v1713, %v1732
      %v1738 = vmul.f32 %v1714, %v1732
      %v1739 = vmul.f32 %v1715, %v1732
      %v1740 = vmul.f32 %v1716, %v1732
      %v1741 = vmul.f32 %v1717, %v1732
      %v1742 = vmul.f32 %v1718, %v1732
      %v1743 = vmul.f32 %v1719, %v1732
      %v1744 = vmul.f32 %v1720, %v1732
      %v1745 = vmul.f32 %v1721, %v1732
      %v1746 = vmul.f32 %v1722, %v1732
      %v1747 = vmul.f32 %v1723, %v1732
      %v1748 = vmul.f32 %v1724, %v1732
      %v1749 = vadd.f32 %v1652, %v1733
      %v1750 = vadd.f32 %v1653, %v1734
      %v1751 = vadd.f32 %v1654, %v1735
      %v1752 = vadd.f32 %v1655, %v1736
      %v1753 = vadd.f32 %v1656, %v1737
      %v1754 = vadd.f32 %v1657, %v1738
      %v1755 = vadd.f32 %v1658, %v1739
      %v1756 = vadd.f32 %v1659, %v1740
      %v1757 = vadd.f32 %v1660, %v1741
      %v1758 = vadd.f32 %v1661, %v1742
      %v1759 = vadd.f32 %v1662, %v1743
      %v1760 = vadd.f32 %v1663, %v1744
      %v1761 = vadd.f32 %v1664, %v1745
      %v1762 = vadd.f32 %v1665, %v1746
      %v1763 = vadd.f32 %v1666, %v1747
      %v1764 = vadd.f32 %v1667, %v1748
      %v1765 = vlaneseq
      %v1766 = vshrl.u32 %v1765, 7
      %v1767 = vsub.s32 5, %v1766
      %v1768 = vrot.slane %v1389, %v1767
      %v1769 = vmul.f32 %v1711, %v1768
      %v1770 = vmul.f32 %v1712, %v1768
      %v1771 = vmul.f32 %v1713, %v1768
      %v1772 = vmul.f32 %v1714, %v1768
      %v1773 = vmul.f32 %v1715, %v1768
      %v1774 = vmul.f32 %v1716, %v1768
      %v1775 = vmul.f32 %v1717, %v1768
      %v1776 = vmul.f32 %v1718, %v1768
      %v1777 = vmul.f32 %v1719, %v1768
      %v1778 = vmul.f32 %v1720, %v1768
      %v1779 = vmul.f32 %v1721, %v1768
      %v1780 = vmul.f32 %v1722, %v1768
      %v1781 = vmul.f32 %v1723, %v1768
      %v1782 = vmul.f32 %v1724, %v1768
      %v1783 = vmul.f32 %v1725, %v1768
      %v1784 = vmul.f32 %v1726, %v1768
      %v1785 = vadd.f32 %v1749, %v1769
      %v1786 = vadd.f32 %v1750, %v1770
      %v1787 = vadd.f32 %v1751, %v1771
      %v1788 = vadd.f32 %v1752, %v1772
      %v1789 = vadd.f32 %v1753, %v1773
      %v1790 = vadd.f32 %v1754, %v1774
      %v1791 = vadd.f32 %v1755, %v1775
      %v1792 = vadd.f32 %v1756, %v1776
      %v1793 = vadd.f32 %v1757, %v1777
      %v1794 = vadd.f32 %v1758, %v1778
      %v1795 = vadd.f32 %v1759, %v1779
      %v1796 = vadd.f32 %v1760, %v1780
      %v1797 = vadd.f32 %v1761, %v1781
      %v1798 = vadd.f32 %v1762, %v1782
      %v1799 = vadd.f32 %v1763, %v1783
      %v1800 = vadd.f32 %v1764, %v1784
      %v1801 = vlaneseq
      %v1802 = vshrl.u32 %v1801, 7
      %v1803 = vsub.s32 0, %v1802
      %v1804 = vrot.slane %v1390, %v1803
      %v1805 = vmul.f32 %v1713, %v1804
      %v1806 = vmul.f32 %v1714, %v1804
      %v1807 = vmul.f32 %v1715, %v1804
      %v1808 = vmul.f32 %v1716, %v1804
      %v1809 = vmul.f32 %v1717, %v1804
      %v1810 = vmul.f32 %v1718, %v1804
      %v1811 = vmul.f32 %v1719, %v1804
      %v1812 = vmul.f32 %v1720, %v1804
      %v1813 = vmul.f32 %v1721, %v1804
      %v1814 = vmul.f32 %v1722, %v1804
      %v1815 = vmul.f32 %v1723, %v1804
      %v1816 = vmul.f32 %v1724, %v1804
      %v1817 = vmul.f32 %v1725, %v1804
      %v1818 = vmul.f32 %v1726, %v1804
      %v1819 = vmul.f32 %v1727, %v1804
      %v1820 = vmul.f32 %v1728, %v1804
      %v1821 = vadd.f32 %v1785, %v1805
      %v1822 = vadd.f32 %v1786, %v1806
      %v1823 = vadd.f32 %v1787, %v1807
      %v1824 = vadd.f32 %v1788, %v1808
      %v1825 = vadd.f32 %v1789, %v1809
      %v1826 = vadd.f32 %v1790, %v1810
      %v1827 = vadd.f32 %v1791, %v1811
      %v1828 = vadd.f32 %v1792, %v1812
      %v1829 = vadd.f32 %v1793, %v1813
      %v1830 = vadd.f32 %v1794, %v1814
      %v1831 = vadd.f32 %v1795, %v1815
      %v1832 = vadd.f32 %v1796, %v1816
      %v1833 = vadd.f32 %v1797, %v1817
      %v1834 = vadd.f32 %v1798, %v1818
      %v1835 = vadd.f32 %v1799, %v1819
      %v1836 = vadd.f32 %v1800, %v1820
      %v1837 = vld [vmem:[%s6] sm:$0x1]
      %v1839 = vlaneseq
      %v1840 = vshrl.u32 %v1839, 7
      %v1841 = vsub.s32 0, %v1840
      %v1842 = vrot.slane %v1837, %v1841
      %v1844 = vadd.f32 %v1821, %v1842
      %v1845 = vadd.f32 %v1822, %v1842
      %v1846 = vadd.f32 %v1823, %v1842
      %v1847 = vadd.f32 %v1824, %v1842
      %v1848 = vadd.f32 %v1825, %v1842
      %v1849 = vadd.f32 %v1826, %v1842
      %v1850 = vadd.f32 %v1827, %v1842
      %v1851 = vadd.f32 %v1828, %v1842
      %v1852 = vadd.f32 %v1829, %v1842
      %v1853 = vadd.f32 %v1830, %v1842
      %v1854 = vadd.f32 %v1831, %v1842
      %v1855 = vadd.f32 %v1832, %v1842
      %v1856 = vadd.f32 %v1833, %v1842
      %v1857 = vadd.f32 %v1834, %v1842
      %v1858 = vadd.f32 %v1835, %v1842
      %v1859 = vadd.f32 %v1836, %v1842
      %v1860 = vxor.u32 %v1844, 2147483648
      %v1861 = vxor.u32 %v1845, 2147483648
      %v1862 = vxor.u32 %v1846, 2147483648
      %v1863 = vxor.u32 %v1847, 2147483648
      %v1864 = vxor.u32 %v1848, 2147483648
      %v1865 = vxor.u32 %v1849, 2147483648
      %v1866 = vxor.u32 %v1850, 2147483648
      %v1867 = vxor.u32 %v1851, 2147483648
      %v1868 = vxor.u32 %v1852, 2147483648
      %v1869 = vxor.u32 %v1853, 2147483648
      %v1870 = vxor.u32 %v1854, 2147483648
      %v1871 = vxor.u32 %v1855, 2147483648
      %v1872 = vxor.u32 %v1856, 2147483648
      %v1873 = vxor.u32 %v1857, 2147483648
      %v1874 = vxor.u32 %v1858, 2147483648
      %v1875 = vxor.u32 %v1859, 2147483648
      %v1876 = vmul.f32 %v1860, 1.442695
      %v1877 = vpow.pop %v1876
      %v1878 = vmul.f32 %v1861, 1.442695
      %v1879 = vpow.pop %v1878
      %v1880 = vmul.f32 %v1862, 1.442695
      %v1881 = vpow.pop %v1880
      %v1882 = vmul.f32 %v1863, 1.442695
      %v1883 = vpow.pop %v1882
      %v1884 = vmul.f32 %v1864, 1.442695
      %v1885 = vpow.pop %v1884
      %v1886 = vmul.f32 %v1865, 1.442695
      %v1887 = vpow.pop %v1886
      %v1888 = vmul.f32 %v1866, 1.442695
      %v1889 = vpow.pop %v1888
      %v1890 = vmul.f32 %v1867, 1.442695
      %v1891 = vpow.pop %v1890
      %v1892 = vmul.f32 %v1868, 1.442695
      %v1893 = vpow.pop %v1892
      %v1894 = vmul.f32 %v1869, 1.442695
      %v1895 = vpow.pop %v1894
      %v1896 = vmul.f32 %v1870, 1.442695
      %v1897 = vpow.pop %v1896
      %v1898 = vmul.f32 %v1871, 1.442695
      %v1899 = vpow.pop %v1898
      %v1900 = vmul.f32 %v1872, 1.442695
      %v1901 = vpow.pop %v1900
      %v1902 = vmul.f32 %v1873, 1.442695
      %v1903 = vpow.pop %v1902
      %v1904 = vmul.f32 %v1874, 1.442695
      %v1905 = vpow.pop %v1904
      %v1906 = vmul.f32 %v1875, 1.442695
      %v1907 = vpow.pop %v1906
      %v1908 = vadd.f32 %v1877, 1.0
      %v1909 = vadd.f32 %v1879, 1.0
      %v1910 = vadd.f32 %v1881, 1.0
      %v1911 = vadd.f32 %v1883, 1.0
      %v1912 = vadd.f32 %v1885, 1.0
      %v1913 = vadd.f32 %v1887, 1.0
      %v1914 = vadd.f32 %v1889, 1.0
      %v1915 = vadd.f32 %v1891, 1.0
      %v1916 = vadd.f32 %v1893, 1.0
      %v1917 = vadd.f32 %v1895, 1.0
      %v1918 = vadd.f32 %v1897, 1.0
      %v1919 = vadd.f32 %v1899, 1.0
      %v1920 = vadd.f32 %v1901, 1.0
      %v1921 = vadd.f32 %v1903, 1.0
      %v1922 = vadd.f32 %v1905, 1.0
      %v1923 = vadd.f32 %v1907, 1.0
      %v1924 = vrcp.pop %v1908
      %v1925 = vmul.f32 1.0, %v1924
      %v1926 = vrcp.pop %v1909
      %v1927 = vmul.f32 1.0, %v1926
      %v1928 = vrcp.pop %v1910
      %v1929 = vmul.f32 1.0, %v1928
      %v1930 = vrcp.pop %v1911
      %v1931 = vmul.f32 1.0, %v1930
      %v1932 = vrcp.pop %v1912
      %v1933 = vmul.f32 1.0, %v1932
      %v1934 = vrcp.pop %v1913
      %v1935 = vmul.f32 1.0, %v1934
      %v1936 = vrcp.pop %v1914
      %v1937 = vmul.f32 1.0, %v1936
      %v1938 = vrcp.pop %v1915
      %v1939 = vmul.f32 1.0, %v1938
      %v1940 = vrcp.pop %v1916
      %v1941 = vmul.f32 1.0, %v1940
      %v1942 = vrcp.pop %v1917
      %v1943 = vmul.f32 1.0, %v1942
      %v1944 = vrcp.pop %v1918
      %v1945 = vmul.f32 1.0, %v1944
      %v1946 = vrcp.pop %v1919
      %v1947 = vmul.f32 1.0, %v1946
      %v1948 = vrcp.pop %v1920
      %v1949 = vmul.f32 1.0, %v1948
      %v1950 = vrcp.pop %v1921
      %v1951 = vmul.f32 1.0, %v1950
      %v1952 = vrcp.pop %v1922
      %v1953 = vmul.f32 1.0, %v1952
      %v1954 = vrcp.pop %v1923
      %v1955 = vmul.f32 1.0, %v1954
      %v1956 = vmul.f32 %v1844, %v1925
      %v1957 = vmul.f32 %v1845, %v1927
      %v1958 = vmul.f32 %v1846, %v1929
      %v1959 = vmul.f32 %v1847, %v1931
      %v1960 = vmul.f32 %v1848, %v1933
      %v1961 = vmul.f32 %v1849, %v1935
      %v1962 = vmul.f32 %v1850, %v1937
      %v1963 = vmul.f32 %v1851, %v1939
      %v1964 = vmul.f32 %v1852, %v1941
      %v1965 = vmul.f32 %v1853, %v1943
      %v1966 = vmul.f32 %v1854, %v1945
      %v1967 = vmul.f32 %v1855, %v1947
      %v1968 = vmul.f32 %v1856, %v1949
      %v1969 = vmul.f32 %v1857, %v1951
      %v1970 = vmul.f32 %v1858, %v1953
      %v1971 = vmul.f32 %v1859, %v1955
      %1988 = vrot.lane.b32.xlu0 %v1956, 112
      %v1989 = vpop.permute.xlu0 %1988
      %1990 = vrot.lane.b32.xlu0 %v1957, 112
      %v1991 = vpop.permute.xlu0 %1990
      %1992 = vrot.lane.b32.xlu0 %v1958, 112
      %v1993 = vpop.permute.xlu0 %1992
      %1994 = vrot.lane.b32.xlu0 %v1959, 112
      %v1995 = vpop.permute.xlu0 %1994
      %1996 = vrot.lane.b32.xlu0 %v1960, 112
      %v1997 = vpop.permute.xlu0 %1996
      %1998 = vrot.lane.b32.xlu0 %v1961, 112
      %v1999 = vpop.permute.xlu0 %1998
      %2000 = vrot.lane.b32.xlu0 %v1962, 112
      %v2001 = vpop.permute.xlu0 %2000
      %2002 = vrot.lane.b32.xlu0 %v1963, 112
      %v2003 = vpop.permute.xlu0 %2002
      %2004 = vrot.lane.b32.xlu0 %v1964, 112
      %v2005 = vpop.permute.xlu0 %2004
      %2006 = vrot.lane.b32.xlu0 %v1965, 112
      %v2007 = vpop.permute.xlu0 %2006
      %2008 = vrot.lane.b32.xlu0 %v1966, 112
      %v2009 = vpop.permute.xlu0 %2008
      %2010 = vrot.lane.b32.xlu0 %v1967, 112
      %v2011 = vpop.permute.xlu0 %2010
      %2012 = vrot.lane.b32.xlu0 %v1968, 112
      %v2013 = vpop.permute.xlu0 %2012
      %2014 = vrot.lane.b32.xlu0 %v1969, 112
      %v2015 = vpop.permute.xlu0 %2014
      %2016 = vrot.lane.b32.xlu0 %v1970, 112
      %v2017 = vpop.permute.xlu0 %2016
      %2018 = vrot.lane.b32.xlu0 %v1971, 112
      %v2019 = vpop.permute.xlu0 %2018
      %v2036 = vmul.f32 %v1844, %v1989
      %v2037 = vmul.f32 %v1845, %v1991
      %v2038 = vmul.f32 %v1846, %v1993
      %v2039 = vmul.f32 %v1847, %v1995
      %v2040 = vmul.f32 %v1848, %v1997
      %v2041 = vmul.f32 %v1849, %v1999
      %v2042 = vmul.f32 %v1850, %v2001
      %v2043 = vmul.f32 %v1851, %v2003
      %v2044 = vmul.f32 %v1852, %v2005
      %v2045 = vmul.f32 %v1853, %v2007
      %v2046 = vmul.f32 %v1854, %v2009
      %v2047 = vmul.f32 %v1855, %v2011
      %v2048 = vmul.f32 %v1856, %v2013
      %v2049 = vmul.f32 %v1857, %v2015
      %v2050 = vmul.f32 %v1858, %v2017
      %v2051 = vmul.f32 %v1859, %v2019
      %v2052 = vpack.c.bf16 %v2037, %v2036
      %v2053 = vpack.c.bf16 %v2039, %v2038
      %v2054 = vpack.c.bf16 %v2041, %v2040
      %v2055 = vpack.c.bf16 %v2043, %v2042
      %v2056 = vpack.c.bf16 %v2045, %v2044
      %v2057 = vpack.c.bf16 %v2047, %v2046
      %v2058 = vpack.c.bf16 %v2049, %v2048
      %v2059 = vpack.c.bf16 %v2051, %v2050
      %v2060 = vld [vmem:[%s7] sm:$0xf]
      %v2061 = vld [vmem:[%s7 + $0x4] sm:$0xf]
      %v2064 = vunpack.c.l.b16 %v2060
      %v2065 = vunpack.c.l.b16 %v2061
      %v2066 = vpack.c.b16 %v2065, %v2064
      %vm2068 = vcmask 130048
      %v2070 = vsel %vm2068, %v2052, 0
      %v2073 = vsel %vm2068, %v2053, 0
      %v2076 = vsel %vm2068, %v2054, 0
      %v2079 = vsel %vm2068, %v2055, 0
      %v2082 = vsel %vm2068, %v2056, 0
      %v2085 = vsel %vm2068, %v2057, 0
      %v2088 = vsel %vm2068, %v2058, 0
      %v2091 = vsel %vm2068, %v2059, 0
      %2093 = vmatprep.subr.bf16.mxu0 0
      %2094 = vmatpush1.bf16.msra.mxu0 0
      %2095 = vmatprep.subr.bf16.mxu0 0
      %2096 = vmatpush1.bf16.msra.mxu0 0
      %2097 = vmatprep.subr.bf16.mxu0 0
      %2098 = vmatpush1.bf16.msra.mxu0 0
      %2099 = vmatprep.subr.bf16.mxu0 0
      %2100 = vmatpush1.bf16.msra.mxu0 0
      %2101 = vmatprep.subr.bf16.mxu0 0
      %2102 = vmatpush1.bf16.msra.mxu0 0
      %2103 = vmatprep.subr.bf16.mxu0 0
      %2104 = vmatpush1.bf16.msra.mxu0 0
      %2105 = vmatprep.subr.bf16.mxu0 0
      %2106 = vmatpush1.bf16.msra.mxu0 0
      %2107 = vmatprep.subr.bf16.mxu0 0
      %2108 = vmatpush1.bf16.msra.mxu0 %v2066
      %2109 = vmatprep.subr.bf16.mxu0 0
      %2110 = vmatpush2.bf16.msra.mxu0 0
      %2111 = vmatprep.subr.bf16.mxu0 0
      %2112 = vmatpush2.bf16.msra.mxu0 0
      %2113 = vmatprep.subr.bf16.mxu0 0
      %2114 = vmatpush2.bf16.msra.mxu0 0
      %2115 = vmatprep.subr.bf16.mxu0 0
      %2116 = vmatpush2.bf16.msra.mxu0 0
      %2117 = vmatprep.subr.bf16.mxu0 0
      %2118 = vmatpush2.bf16.msra.mxu0 0
      %2119 = vmatprep.subr.bf16.mxu0 0
      %2120 = vmatpush2.bf16.msra.mxu0 0
      %2121 = vmatprep.subr.bf16.mxu0 0
      %2122 = vmatpush2.bf16.msra.mxu0 0
      %2123 = vmatprep.subr.bf16.mxu0 0
      %2124 = vmatpush2.bf16.msra.mxu0 0
      %2125 = vmatprep.mubr.bf16.mxu0 0
      %2126 = vmatmul.mubr.bf16.gmra.mxu0 %v2070
      %v2127 = vpop.f32.mrf.mxu0
      %v2128 = vadd.f32 0.0, %v2127
      %v2129 = vpop.f32.mrf.mxu0
      %v2130 = vpop.f32.mrf.mxu0
      %v2131 = vadd.f32 0.0, %v2130
      %v2132 = vpop.f32.mrf.mxu0
      %2133 = vmatprep.mubr.bf16.mxu0 0
      %2134 = vmatmul.mubr.bf16.gmra.mxu0 %v2073
      %v2135 = vpop.f32.mrf.mxu0
      %v2136 = vadd.f32 0.0, %v2135
      %v2137 = vpop.f32.mrf.mxu0
      %v2138 = vpop.f32.mrf.mxu0
      %v2139 = vadd.f32 0.0, %v2138
      %v2140 = vpop.f32.mrf.mxu0
      %2141 = vmatprep.mubr.bf16.mxu0 0
      %2142 = vmatmul.mubr.bf16.gmra.mxu0 %v2076
      %v2143 = vpop.f32.mrf.mxu0
      %v2144 = vadd.f32 0.0, %v2143
      %v2145 = vpop.f32.mrf.mxu0
      %v2146 = vpop.f32.mrf.mxu0
      %v2147 = vadd.f32 0.0, %v2146
      %v2148 = vpop.f32.mrf.mxu0
      %2149 = vmatprep.mubr.bf16.mxu0 0
      %2150 = vmatmul.mubr.bf16.gmra.mxu0 %v2079
      %v2151 = vpop.f32.mrf.mxu0
      %v2152 = vadd.f32 0.0, %v2151
      %v2153 = vpop.f32.mrf.mxu0
      %v2154 = vpop.f32.mrf.mxu0
      %v2155 = vadd.f32 0.0, %v2154
      %v2156 = vpop.f32.mrf.mxu0
      %2157 = vmatprep.mubr.bf16.mxu0 0
      %2158 = vmatmul.mubr.bf16.gmra.mxu0 %v2082
      %v2159 = vpop.f32.mrf.mxu0
      %v2160 = vadd.f32 0.0, %v2159
      %v2161 = vpop.f32.mrf.mxu0
      %v2162 = vpop.f32.mrf.mxu0
      %v2163 = vadd.f32 0.0, %v2162
      %v2164 = vpop.f32.mrf.mxu0
      %2165 = vmatprep.mubr.bf16.mxu0 0
      %2166 = vmatmul.mubr.bf16.gmra.mxu0 %v2085
      %v2167 = vpop.f32.mrf.mxu0
      %v2168 = vadd.f32 0.0, %v2167
      %v2169 = vpop.f32.mrf.mxu0
      %v2170 = vpop.f32.mrf.mxu0
      %v2171 = vadd.f32 0.0, %v2170
      %v2172 = vpop.f32.mrf.mxu0
      %2173 = vmatprep.mubr.bf16.mxu0 0
      %2174 = vmatmul.mubr.bf16.gmra.mxu0 %v2088
      %v2175 = vpop.f32.mrf.mxu0
      %v2176 = vadd.f32 0.0, %v2175
      %v2177 = vpop.f32.mrf.mxu0
      %v2178 = vpop.f32.mrf.mxu0
      %v2179 = vadd.f32 0.0, %v2178
      %v2180 = vpop.f32.mrf.mxu0
      %2181 = vmatprep.mubr.bf16.mxu0 0
      %2182 = vmatmul.mubr.bf16.gmra.mxu0 %v2091
      %v2183 = vpop.f32.mrf.mxu0
      %v2184 = vadd.f32 0.0, %v2183
      %v2185 = vpop.f32.mrf.mxu0
      %v2186 = vpop.f32.mrf.mxu0
      %v2187 = vadd.f32 0.0, %v2186
      %v2188 = vpop.f32.mrf.mxu0
      %2189 = vdwg.mxu0
      %v2190 = vmul.f32 %v2128, %v2128
      %v2191 = vmul.f32 %v2131, %v2131
      %v2192 = vmul.f32 %v2136, %v2136
      %v2193 = vmul.f32 %v2139, %v2139
      %v2194 = vmul.f32 %v2144, %v2144
      %v2195 = vmul.f32 %v2147, %v2147
      %v2196 = vmul.f32 %v2152, %v2152
      %v2197 = vmul.f32 %v2155, %v2155
      %v2198 = vmul.f32 %v2160, %v2160
      %v2199 = vmul.f32 %v2163, %v2163
      %v2200 = vmul.f32 %v2168, %v2168
      %v2201 = vmul.f32 %v2171, %v2171
      %v2202 = vmul.f32 %v2176, %v2176
      %v2203 = vmul.f32 %v2179, %v2179
      %v2204 = vmul.f32 %v2184, %v2184
      %v2205 = vmul.f32 %v2187, %v2187
      %v2206 = vsel %vm567, %v2190, 0.0
      %2207 = vadd.xlane.f32.xlu0 %v2206
      %v2208 = vpop.xlane.xlu0 %2207
      %v2209 = vsel %vm567, %v2191, 0.0
      %2210 = vadd.xlane.f32.xlu0 %v2209
      %v2211 = vpop.xlane.xlu0 %2210
      %v2212 = vsel %vm567, %v2192, 0.0
      %2213 = vadd.xlane.f32.xlu0 %v2212
      %v2214 = vpop.xlane.xlu0 %2213
      %v2215 = vsel %vm567, %v2193, 0.0
      %2216 = vadd.xlane.f32.xlu0 %v2215
      %v2217 = vpop.xlane.xlu0 %2216
      %v2218 = vsel %vm567, %v2194, 0.0
      %2219 = vadd.xlane.f32.xlu0 %v2218
      %v2220 = vpop.xlane.xlu0 %2219
      %v2221 = vsel %vm567, %v2195, 0.0
      %2222 = vadd.xlane.f32.xlu0 %v2221
      %v2223 = vpop.xlane.xlu0 %2222
      %v2224 = vsel %vm567, %v2196, 0.0
      %2225 = vadd.xlane.f32.xlu0 %v2224
      %v2226 = vpop.xlane.xlu0 %2225
      %v2227 = vsel %vm567, %v2197, 0.0
      %2228 = vadd.xlane.f32.xlu0 %v2227
      %v2229 = vpop.xlane.xlu0 %2228
      %v2230 = vsel %vm567, %v2198, 0.0
      %2231 = vadd.xlane.f32.xlu0 %v2230
      %v2232 = vpop.xlane.xlu0 %2231
      %v2233 = vsel %vm567, %v2199, 0.0
      %2234 = vadd.xlane.f32.xlu0 %v2233
      %v2235 = vpop.xlane.xlu0 %2234
      %v2236 = vsel %vm567, %v2200, 0.0
      %2237 = vadd.xlane.f32.xlu0 %v2236
      %v2238 = vpop.xlane.xlu0 %2237
      %v2239 = vsel %vm567, %v2201, 0.0
      %2240 = vadd.xlane.f32.xlu0 %v2239
      %v2241 = vpop.xlane.xlu0 %2240
      %v2242 = vsel %vm567, %v2202, 0.0
      %2243 = vadd.xlane.f32.xlu0 %v2242
      %v2244 = vpop.xlane.xlu0 %2243
      %v2245 = vsel %vm567, %v2203, 0.0
      %2246 = vadd.xlane.f32.xlu0 %v2245
      %v2247 = vpop.xlane.xlu0 %2246
      %v2248 = vsel %vm567, %v2204, 0.0
      %2249 = vadd.xlane.f32.xlu0 %v2248
      %v2250 = vpop.xlane.xlu0 %2249
      %v2251 = vsel %vm567, %v2205, 0.0
      %2252 = vadd.xlane.f32.xlu0 %v2251
      %v2253 = vpop.xlane.xlu0 %2252
      %v2254 = vrcp.pop 4.0
      %v2255 = vmul.f32 %v2208, %v2254
      %v2256 = vmul.f32 %v2211, %v2254
      %v2257 = vmul.f32 %v2214, %v2254
      %v2258 = vmul.f32 %v2217, %v2254
      %v2259 = vmul.f32 %v2220, %v2254
      %v2260 = vmul.f32 %v2223, %v2254
      %v2261 = vmul.f32 %v2226, %v2254
      %v2262 = vmul.f32 %v2229, %v2254
      %v2263 = vmul.f32 %v2232, %v2254
      %v2264 = vmul.f32 %v2235, %v2254
      %v2265 = vmul.f32 %v2238, %v2254
      %v2266 = vmul.f32 %v2241, %v2254
      %v2267 = vmul.f32 %v2244, %v2254
      %v2268 = vmul.f32 %v2247, %v2254
      %v2269 = vmul.f32 %v2250, %v2254
      %v2270 = vmul.f32 %v2253, %v2254
      %v2271 = vadd.f32 %v2255, 1e-05
      %v2272 = vadd.f32 %v2256, 1e-05
      %v2273 = vadd.f32 %v2257, 1e-05
      %v2274 = vadd.f32 %v2258, 1e-05
      %v2275 = vadd.f32 %v2259, 1e-05
      %v2276 = vadd.f32 %v2260, 1e-05
      %v2277 = vadd.f32 %v2261, 1e-05
      %v2278 = vadd.f32 %v2262, 1e-05
      %v2279 = vadd.f32 %v2263, 1e-05
      %v2280 = vadd.f32 %v2264, 1e-05
      %v2281 = vadd.f32 %v2265, 1e-05
      %v2282 = vadd.f32 %v2266, 1e-05
      %v2283 = vadd.f32 %v2267, 1e-05
      %v2284 = vadd.f32 %v2268, 1e-05
      %v2285 = vadd.f32 %v2269, 1e-05
      %v2286 = vadd.f32 %v2270, 1e-05
      %v2287 = vrsqrt.pop %v2271
      %v2288 = vrsqrt.pop %v2272
      %v2289 = vrsqrt.pop %v2273
      %v2290 = vrsqrt.pop %v2274
      %v2291 = vrsqrt.pop %v2275
      %v2292 = vrsqrt.pop %v2276
      %v2293 = vrsqrt.pop %v2277
      %v2294 = vrsqrt.pop %v2278
      %v2295 = vrsqrt.pop %v2279
      %v2296 = vrsqrt.pop %v2280
      %v2297 = vrsqrt.pop %v2281
      %v2298 = vrsqrt.pop %v2282
      %v2299 = vrsqrt.pop %v2283
      %v2300 = vrsqrt.pop %v2284
      %v2301 = vrsqrt.pop %v2285
      %v2302 = vrsqrt.pop %v2286
      %v2303 = vmul.f32 %v2128, %v2287
      %v2304 = vmul.f32 %v2131, %v2288
      %v2305 = vmul.f32 %v2136, %v2289
      %v2306 = vmul.f32 %v2139, %v2290
      %v2307 = vmul.f32 %v2144, %v2291
      %v2308 = vmul.f32 %v2147, %v2292
      %v2309 = vmul.f32 %v2152, %v2293
      %v2310 = vmul.f32 %v2155, %v2294
      %v2311 = vmul.f32 %v2160, %v2295
      %v2312 = vmul.f32 %v2163, %v2296
      %v2313 = vmul.f32 %v2168, %v2297
      %v2314 = vmul.f32 %v2171, %v2298
      %v2315 = vmul.f32 %v2176, %v2299
      %v2316 = vmul.f32 %v2179, %v2300
      %v2317 = vmul.f32 %v2184, %v2301
      %v2318 = vmul.f32 %v2187, %v2302
      %v2319 = vld [vmem:[%s8] sm:$0x1]
      %v2321 = vlaneseq
      %v2322 = vshrl.u32 %v2321, 7
      %v2323 = vsub.s32 0, %v2322
      %v2324 = vrot.slane %v2319, %v2323
      %v2326 = vmul.f32 %v2303, %v2324
      %v2327 = vmul.f32 %v2304, %v2324
      %v2328 = vmul.f32 %v2305, %v2324
      %v2329 = vmul.f32 %v2306, %v2324
      %v2330 = vmul.f32 %v2307, %v2324
      %v2331 = vmul.f32 %v2308, %v2324
      %v2332 = vmul.f32 %v2309, %v2324
      %v2333 = vmul.f32 %v2310, %v2324
      %v2334 = vmul.f32 %v2311, %v2324
      %v2335 = vmul.f32 %v2312, %v2324
      %v2336 = vmul.f32 %v2313, %v2324
      %v2337 = vmul.f32 %v2314, %v2324
      %v2338 = vmul.f32 %v2315, %v2324
      %v2339 = vmul.f32 %v2316, %v2324
      %v2340 = vmul.f32 %v2317, %v2324
      %v2341 = vmul.f32 %v2318, %v2324
      %v2342 = vld [vmem:[%s9] sm:$0x1]
      %v2344 = vlaneseq
      %v2345 = vshrl.u32 %v2344, 7
      %v2346 = vsub.s32 0, %v2345
      %v2347 = vrot.slane %v2342, %v2346
      %v2349 = vadd.f32 %v2326, %v2347
      %v2350 = vadd.f32 %v2327, %v2347
      %v2351 = vadd.f32 %v2328, %v2347
      %v2352 = vadd.f32 %v2329, %v2347
      %v2353 = vadd.f32 %v2330, %v2347
      %v2354 = vadd.f32 %v2331, %v2347
      %v2355 = vadd.f32 %v2332, %v2347
      %v2356 = vadd.f32 %v2333, %v2347
      %v2357 = vadd.f32 %v2334, %v2347
      %v2358 = vadd.f32 %v2335, %v2347
      %v2359 = vadd.f32 %v2336, %v2347
      %v2360 = vadd.f32 %v2337, %v2347
      %v2361 = vadd.f32 %v2338, %v2347
      %v2362 = vadd.f32 %v2339, %v2347
      %v2363 = vadd.f32 %v2340, %v2347
      %v2364 = vadd.f32 %v2341, %v2347
      %v2365 = vadd.f32 %v2349, %v529
      %v2366 = vadd.f32 %v2350, %v530
      %v2367 = vadd.f32 %v2351, %v531
      %v2368 = vadd.f32 %v2352, %v532
      %v2369 = vadd.f32 %v2353, %v533
      %v2370 = vadd.f32 %v2354, %v534
      %v2371 = vadd.f32 %v2355, %v535
      %v2372 = vadd.f32 %v2356, %v536
      %v2373 = vadd.f32 %v2357, %v537
      %v2374 = vadd.f32 %v2358, %v538
      %v2375 = vadd.f32 %v2359, %v539
      %v2376 = vadd.f32 %v2360, %v540
      %v2377 = vadd.f32 %v2361, %v541
      %v2378 = vadd.f32 %v2362, %v542
      %v2379 = vadd.f32 %v2363, %v543
      %v2380 = vadd.f32 %v2364, %v544
      %2381 = vst.msk [vmem:[%s526] sm:$0xff] %vm567, %v2365
      %2382 = vst.msk [vmem:[%s526 + $0x8] sm:$0xff] %vm567, %v2366
      %2383 = vst.msk [vmem:[%s526 + $0x10] sm:$0xff] %vm567, %v2367
      %2384 = vst.msk [vmem:[%s526 + $0x18] sm:$0xff] %vm567, %v2368
      %2385 = vst.msk [vmem:[%s526 + $0x20] sm:$0xff] %vm567, %v2369
      %2386 = vst.msk [vmem:[%s526 + $0x28] sm:$0xff] %vm567, %v2370
      %2387 = vst.msk [vmem:[%s526 + $0x30] sm:$0xff] %vm567, %v2371
      %2388 = vst.msk [vmem:[%s526 + $0x38] sm:$0xff] %vm567, %v2372
      %2389 = vst.msk [vmem:[%s526 + $0x40] sm:$0xff] %vm567, %v2373
      %2390 = vst.msk [vmem:[%s526 + $0x48] sm:$0xff] %vm567, %v2374
      %2391 = vst.msk [vmem:[%s526 + $0x50] sm:$0xff] %vm567, %v2375
      %2392 = vst.msk [vmem:[%s526 + $0x58] sm:$0xff] %vm567, %v2376
      %2393 = vst.msk [vmem:[%s526 + $0x60] sm:$0xff] %vm567, %v2377
      %2394 = vst.msk [vmem:[%s526 + $0x68] sm:$0xff] %vm567, %v2378
      %2395 = vst.msk [vmem:[%s526 + $0x70] sm:$0xff] %vm567, %v2379
      %2396 = vst.msk [vmem:[%s526 + $0x78] sm:$0xff] %vm567, %v2380
      %s2397 = smul.u32 8, %s26
      %p2398 = scmp.lt.s32.totalorder %s25, 1
      %s2399 = scalar_select %p2398, %s25, 1
      %p2400 = scmp.lt.s32.totalorder %s2397, 15
      %s2401 = scalar_select %p2400, %s2397, 15
      %s2402 = smul.addr %s2401, 2
      %s2403 = smul.addr %s2399, 32
      %s2404 = sadd.s32 %s2402, %s2403
      %s2405 = smul.addr %s2404, 8
      %s2406 = scalar_lea.vmem %s10, %s2405
      // Predicated region
      $region69: #{tpu_custom_call.1} parent=59 // pred_check
        %p2407 = pneg %p300
      $region70: #{tpu_custom_call.1} parent=59 // pred_check_branch
        %2409 = sbr.rel (%p2407) target = $region72
      $region71: #{tpu_custom_call.1} parent=59 // pred_region
        %s2410 = smul.u32 8, %s26
      $region72: #{tpu_custom_call.1} parent=59 // pred_fallthru
        _
    $region60: #{tpu_custom_call.1} parent=5 // pred_fallthru
      _
    %p2411 = scmp.le.s32.totalorder 2, %s16
    // Predicated region
    $region73: #{tpu_custom_call.1} parent=5 // pred_check
      %p2412 = pneg %p2411
    $region74: #{tpu_custom_call.1} parent=5 // pred_check_branch
      %2414 = sbr.rel (%p2412) target = $region76
    $region75: #{tpu_custom_call.1} parent=5 // pred_region
      %s2415 = ssub.s32 %s16, 2
      // Predicated region
      $region77: #{tpu_custom_call.1} parent=75 // pred_check
        %p2416 = pneg %p306
      $region78: #{tpu_custom_call.1} parent=75 // pred_check_branch
        %2418 = sbr.rel (%p2416) target = $region80
      $region79: #{tpu_custom_call.1} parent=75 // pred_region
        %s2419 = smul.u32 8, %s28
        %p2420 = scmp.lt.s32.totalorder %s27, 1
        %s2421 = scalar_select %p2420, %s27, 1
        %p2422 = scmp.lt.s32.totalorder %s2419, 15
        %s2423 = scalar_select %p2422, %s2419, 15
        %s2424 = smul.addr %s2423, 2
        %s2425 = smul.addr %s2421, 32
        %s2426 = sadd.s32 %s2424, %s2425
        %s2427 = smul.addr %s2426, 8
        %s2428 = scalar_lea.vmem %s10, %s2427
      $region80: #{tpu_custom_call.1} parent=75 // pred_fallthru
        _
    $region76: #{tpu_custom_call.1} parent=5 // pred_fallthru
      _
  $region6: #{tpu_custom_call.1} parent=0 // loop_footer
    %s20 = sadd.s32 1, %s16
  $region7: #{tpu_custom_call.1} parent=0 // loop_footer_branch
    %15 = sbr.rel target = $region3
  $region8: #{tpu_custom_call.1} parent=0 // loop_exit
    _

</llo_original>
